<compile_context>
chip_gen: v7x
topology: tpu7x:2x2x1
jax: 0.10.0
libtpu: 0.0.40
codegen_flags: <defaults>
</compile_context>

<pallas_src>
import functools

import jax
import jax.numpy as jnp
from jax.experimental import pallas as pl
from jax.experimental.pallas import tpu as pltpu

NEG_SLOPE = 0.01  # F.leaky_relu default negative_slope


def _leaky_relu(x):
    return jnp.where(x > 0, x, NEG_SLOPE * x)


def _round_up(n, m):
    return ((n + m - 1) // m) * m


def mlp_kernel(x_ref, w1_ref, w2_ref, w3_ref, o_ref):
    # x_ref:  (bm, 2048) bf16     w1_ref: (2048, 512) bf16
    # w2_ref: (512, 64)  bf16     w3_ref: (1, 64)     bf16   (row form of (64, 1))
    # o_ref:  (bm, 1)    output dtype
    # Layers 1 & 2 on the MXU with f32 accumulation; activations kept in f32.
    h = jnp.dot(x_ref[...], w1_ref[...], preferred_element_type=jnp.float32)
    h = _leaky_relu(h)
    h = jnp.dot(h.astype(jnp.bfloat16), w2_ref[...],
                preferred_element_type=jnp.float32)
    h = _leaky_relu(h)
    # Layer 3 (64 -> 1): N=1 would waste the MXU pipe; do it on the VPU/XLU as
    # a broadcast-multiply + lane reduction. Output stays lane-sparse (bm, 1).
    y = jnp.sum(h * w3_ref[...].astype(jnp.float32), axis=-1, keepdims=True)
    o_ref[...] = _leaky_relu(y).astype(o_ref.dtype)


@functools.partial(jax.jit, static_argnames=("block_m",))
def mlp_forward(x, w1_t, w2_t, w3_t, *, block_m=512):
    """Fused forward of MLP dims=(2048, 512, 64, 1), bias=False.

    Weights are passed pre-transposed: w*_t has shape (in, out).
    """
    B, D_in = x.shape
    H1 = w1_t.shape[1]
    H2 = w2_t.shape[1]
    D_out = w3_t.shape[1]
    assert w1_t.shape[0] == D_in and w2_t.shape[0] == H1 and w3_t.shape[0] == H2
    assert D_out == 1, "final layer is specialized to out_features == 1"

    # --- batch tile selection -------------------------------------------------
    B8 = _round_up(B, 8)
    bm = _round_up(min(block_m, B8), 8)
    # Prefer >= 2 grid steps so the "parallel" batch axis can shard across the
    # two TensorCores on v7x (and overlap x DMA with compute everywhere).
    if B8 // bm < 2 and B8 >= 16:
        bm = max(8, _round_up(B8 // 2, 8))
    B_pad = _round_up(B, bm)
    if B_pad != B:
        x = jnp.pad(x, ((0, B_pad - B), (0, 0)))  # zero rows -> zero outputs

    # --- bf16 inputs / weights (f32 accumulation inside the kernel) -----------
    x_bf = x.astype(jnp.bfloat16)
    w1_bf = w1_t.astype(jnp.bfloat16)
    w2_bf = w2_t.astype(jnp.bfloat16)
    w3_row = w3_t.reshape(1, H2).astype(jnp.bfloat16)  # (64, 1) -> (1, 64)

    grid = (B_pad // bm,)
    out = pl.pallas_call(
        mlp_kernel,
        out_shape=jax.ShapeDtypeStruct((B_pad, D_out), x.dtype),
        grid_spec=pl.GridSpec(
            grid=grid,
            in_specs=[
                # Streamed batch tile (double-buffered by default).
                pl.BlockSpec((bm, D_in), lambda i: (i, 0)),
                # Grid-invariant weights: constant index_map, VMEM resident.
                pl.BlockSpec((D_in, H1), lambda i: (0, 0)),
                pl.BlockSpec((H1, H2), lambda i: (0, 0)),
                pl.BlockSpec((1, H2), lambda i: (0, 0)),
            ],
            out_specs=pl.BlockSpec((bm, D_out), lambda i: (i, 0)),
        ),
        compiler_params=pltpu.CompilerParams(
            dimension_semantics=("parallel",),      # megacore sharding on v7x
            vmem_limit_bytes=32 * 1024 * 1024,      # safe on v5e / v6e / v7x
        ),
    )(x_bf, w1_bf, w2_bf, w3_row)

    return out[:B]


def init_params(key, dims=(2048, 512, 64, 1), dtype=jnp.float32):
    """Deterministic synthetic weights, stored transposed (in, out)."""
    params = []
    for i in range(1, len(dims)):
        key, sub = jax.random.split(key)
        fan_in = dims[i - 1]
        bound = 1.0 / (fan_in ** 0.5)  # mimic nn.Linear init scale
        w_t = jax.random.uniform(
            sub, (dims[i - 1], dims[i]), dtype=dtype, minval=-bound, maxval=bound
        )
        params.append(w_t)
    return params


def reference_forward_bf16(x, w1_t, w2_t, w3_t):
    """Pure-JAX reference mirroring the kernel's bf16/f32 mixed precision."""
    h = jnp.dot(x.astype(jnp.bfloat16), w1_t.astype(jnp.bfloat16),
                preferred_element_type=jnp.float32)
    h = _leaky_relu(h)
    h = jnp.dot(h.astype(jnp.bfloat16), w2_t.astype(jnp.bfloat16),
                preferred_element_type=jnp.float32)
    h = _leaky_relu(h)
    w3_row = w3_t.reshape(1, -1).astype(jnp.bfloat16).astype(jnp.float32)
    y = jnp.sum(h * w3_row, axis=-1, keepdims=True)
    return _leaky_relu(y).astype(x.dtype)


if __name__ == "__main__":
    key = jax.random.PRNGKey(0)
    k_x, k_w = jax.random.split(key)

    dims = (2048, 512, 64, 1)
    w1_t, w2_t, w3_t = init_params(k_w, dims)

    # Main check: small batch, exercises the >=2-grid-step path.
    B = 64
    x = jax.random.normal(k_x, (B, dims[0]), dtype=jnp.float32)
    out = jax.block_until_ready(mlp_forward(x, w1_t, w2_t, w3_t))
    assert out.shape == (B, 1)
    ref = reference_forward_bf16(x, w1_t, w2_t, w3_t)
    assert jnp.allclose(out, ref, atol=1e-3, rtol=1e-3), "mismatch vs reference"

    # Secondary check: non-multiple batch exercises the zero-pad + slice path.
    B2 = 20
    x2 = jax.random.normal(k_x, (B2, dims[0]), dtype=jnp.float32)
    out2 = jax.block_until_ready(mlp_forward(x2, w1_t, w2_t, w3_t))
    ref2 = reference_forward_bf16(x2, w1_t, w2_t, w3_t)
    assert out2.shape == (B2, 1)
    assert jnp.allclose(out2, ref2, atol=1e-3, rtol=1e-3), "mismatch (padded)"

    print("KERNEL_OK")
</pallas_src>

<mosaic_0001>
module attributes {stable_mosaic.version = 11 : i64} {
  func.func @mlp_kernel(%arg0: i32, %arg1: memref<32x2048xbf16, #tpu.memory_space<vmem>>, %arg2: memref<2048x512xbf16, #tpu.memory_space<vmem>>, %arg3: memref<512x64xbf16, #tpu.memory_space<vmem>>, %arg4: memref<1x64xbf16, #tpu.memory_space<vmem>>, %arg5: memref<32x1xf32, #tpu.memory_space<vmem>>) attributes {dimension_semantics = [#tpu.dimension_semantics<parallel>], iteration_bounds = array<i64: 2>, scalar_prefetch = 0 : i64, scratch_operands = 0 : i64, tpu.core_type = #tpu.core_type<tc>, window_params = [{transform_indices = @transform_0, window_bounds = array<i64: 32, 2048>}, {pipeline_mode = #tpu.pipeline_mode<synchronous>, transform_indices = @transform_1, window_bounds = array<i64: 2048, 512>}, {pipeline_mode = #tpu.pipeline_mode<synchronous>, transform_indices = @transform_2, window_bounds = array<i64: 512, 64>}, {pipeline_mode = #tpu.pipeline_mode<synchronous>, transform_indices = @transform_3, window_bounds = array<i64: 1, 64>}, {transform_indices = @transform_4, window_bounds = array<i64: 32, 1>}]} {
    %c0 = arith.constant 0 : index
    %c0_0 = arith.constant 0 : index
    %0 = vector.load %arg1[%c0, %c0_0] : memref<32x2048xbf16, #tpu.memory_space<vmem>>, vector<32x2048xbf16>
    %c0_1 = arith.constant 0 : index
    %c0_2 = arith.constant 0 : index
    %1 = vector.load %arg2[%c0_1, %c0_2] : memref<2048x512xbf16, #tpu.memory_space<vmem>>, vector<2048x512xbf16>
    %cst = arith.constant dense<0.000000e+00> : vector<32x512xf32>
    %2 = tpu.matmul %0, %1, %cst {dimension_numbers = #tpu.dot_dimension_numbers<[1], [0], [0], [1], [0, 0, 1, 1], [], []>} : vector<32x2048xbf16>, vector<2048x512xbf16>, vector<32x512xf32> -> vector<32x512xf32>
    %cst_3 = arith.constant 0.000000e+00 : f32
    %3 = vector.broadcast %cst_3 : f32 to vector<32x512xf32>
    %4 = arith.cmpf ogt, %2, %3 : vector<32x512xf32>
    %cst_4 = arith.constant 0.00999999977 : f32
    %5 = vector.broadcast %cst_4 : f32 to vector<32x512xf32>
    %6 = arith.mulf %5, %2 : vector<32x512xf32>
    %7 = arith.select %4, %2, %6 : vector<32x512xi1>, vector<32x512xf32>
    %8 = arith.truncf %7 : vector<32x512xf32> to vector<32x512xbf16>
    %c0_5 = arith.constant 0 : index
    %c0_6 = arith.constant 0 : index
    %9 = vector.load %arg3[%c0_5, %c0_6] : memref<512x64xbf16, #tpu.memory_space<vmem>>, vector<512x64xbf16>
    %cst_7 = arith.constant dense<0.000000e+00> : vector<32x64xf32>
    %10 = tpu.matmul %8, %9, %cst_7 {dimension_numbers = #tpu.dot_dimension_numbers<[1], [0], [0], [1], [0, 0, 1, 1], [], []>} : vector<32x512xbf16>, vector<512x64xbf16>, vector<32x64xf32> -> vector<32x64xf32>
    %cst_8 = arith.constant 0.000000e+00 : f32
    %11 = vector.broadcast %cst_8 : f32 to vector<32x64xf32>
    %12 = arith.cmpf ogt, %10, %11 : vector<32x64xf32>
    %cst_9 = arith.constant 0.00999999977 : f32
    %13 = vector.broadcast %cst_9 : f32 to vector<32x64xf32>
    %14 = arith.mulf %13, %10 : vector<32x64xf32>
    %15 = arith.select %12, %10, %14 : vector<32x64xi1>, vector<32x64xf32>
    %c0_10 = arith.constant 0 : index
    %c0_11 = arith.constant 0 : index
    %16 = vector.load %arg4[%c0_10, %c0_11] : memref<1x64xbf16, #tpu.memory_space<vmem>>, vector<1x64xbf16>
    %17 = arith.extf %16 : vector<1x64xbf16> to vector<1x64xf32>
    %18 = vector.broadcast %17 : vector<1x64xf32> to vector<32x64xf32>
    %19 = arith.mulf %15, %18 : vector<32x64xf32>
    %cst_12 = arith.constant dense<0.000000e+00> : vector<32xf32>
    %20 = vector.multi_reduction <add>, %19, %cst_12 [1] : vector<32x64xf32> to vector<32xf32>
    %21 = vector.shape_cast %20 : vector<32xf32> to vector<32x1xf32>
    %cst_13 = arith.constant 0.000000e+00 : f32
    %22 = vector.broadcast %cst_13 : f32 to vector<32x1xf32>
    %23 = arith.cmpf ogt, %21, %22 : vector<32x1xf32>
    %cst_14 = arith.constant 0.00999999977 : f32
    %24 = vector.broadcast %cst_14 : f32 to vector<32x1xf32>
    %25 = arith.mulf %24, %21 : vector<32x1xf32>
    %26 = arith.select %23, %21, %25 : vector<32x1xi1>, vector<32x1xf32>
    %c0_15 = arith.constant 0 : index
    %c0_16 = arith.constant 0 : index
    %27 = vector.load %arg5[%c0_15, %c0_16] : memref<32x1xf32, #tpu.memory_space<vmem>>, vector<32x1xf32>
    tpu.vector_store %arg5[%c0_15, %c0_16], %26 {strides = array<i32>} : memref<32x1xf32, #tpu.memory_space<vmem>>, vector<32x1xf32>,
    return
  }
  func.func @transform_0(%arg0: i32) -> (i32, i32) {
    %c0_i32 = arith.constant 0 : i32
    %c0_i32_0 = arith.constant 0 : i32
    return %arg0, %c0_i32 : i32, i32
  }
  func.func @transform_1(%arg0: i32) -> (i32, i32) {
    %c0_i32 = arith.constant 0 : i32
    %c0_i32_0 = arith.constant 0 : i32
    %c0_i32_1 = arith.constant 0 : i32
    return %c0_i32, %c0_i32_0 : i32, i32
  }
  func.func @transform_2(%arg0: i32) -> (i32, i32) {
    %c0_i32 = arith.constant 0 : i32
    %c0_i32_0 = arith.constant 0 : i32
    %c0_i32_1 = arith.constant 0 : i32
    return %c0_i32, %c0_i32_0 : i32, i32
  }
  func.func @transform_3(%arg0: i32) -> (i32, i32) {
    %c0_i32 = arith.constant 0 : i32
    %c0_i32_0 = arith.constant 0 : i32
    %c0_i32_1 = arith.constant 0 : i32
    return %c0_i32, %c0_i32_0 : i32, i32
  }
  func.func @transform_4(%arg0: i32) -> (i32, i32) {
    %c0_i32 = arith.constant 0 : i32
    %c0_i32_0 = arith.constant 0 : i32
    return %arg0, %c0_i32 : i32, i32
  }
}

</mosaic_0001>

<llo_original>
// kernel: mlp_forward.1
$region0: #{mlp_forward.1}
  #allocation0 [shape = 'u32[]', space=smem, size = 0x4, offset = 0x4, fixed_abs, tag = 'smem constant byte address 0x4 - core index']
  #allocation1 [shape = 'u32[144,128]{1,0:T(1,128)}', space=vmem, size = 0x12000, scoped, tag = 'internal scratch']
  %s0 = inlined_call_operand.vmem [shape: bf16[64,2048], index: 0, kind: input, shape index: {}]
  %s1 = inlined_call_operand.vmem [shape: bf16[2048,512], index: 1, kind: input, shape index: {}]
  %s2 = inlined_call_operand.vmem [shape: bf16[512,64], index: 2, kind: input, shape index: {}]
  %s3 = inlined_call_operand.vmem [shape: bf16[1,64], index: 3, kind: input, shape index: {}]
  %s4 = inlined_call_operand.vmem [shape: f32[64,1], index: 4, kind: output, shape index: {}]
  %s5 = sld [smem:[#allocation0]]
  $region49: #{mlp_forward.1} parent=0
    _
  %s7 = ssub.s32 1, %s5
  %s8 = scalar_select 0, %s7, %s5
  loop: start=0, step=1, limit=4
  $region2: #{mlp_forward.1} parent=0 // loop_pre_header
    _
  $region3: #{mlp_forward.1} parent=0 // loop_header
    %s10 = sphi 0, %s14
    %p11 = scmp.ge.s32.totalorder %s10, 4
    %s20 = sphi 0, %s22
    %s23 = sphi 0, %s20
    %s24 = sphi 0, %s23
    %s40 = sphi 0, %s24
    %s44 = sphi 0, %s44
    %s46 = sphi 0, %s44
    %s47 = sphi 0, %s46
    %s61 = sphi 0, %s47
    %s65 = sphi 0, %s65
    %s67 = sphi 0, %s65
    %s68 = sphi 0, %s67
    %s82 = sphi 0, %s68
    %s86 = sphi 0, %s86
    %s88 = sphi 0, %s86
    %s89 = sphi 0, %s88
    %s103 = sphi 0, %s89
    %s109 = sphi 0, %s111
    %s112 = sphi 0, %s109
    %s113 = sphi 0, %s112
    %s129 = sphi 0, %s113
  $region4: #{mlp_forward.1} parent=0 // loop_header_branch
    %13 = sbr.rel (%p11) target = $region8
  $region5: #{mlp_forward.1} parent=0 // loop_body
    %s15 = ssub.s32 %s10, 1
    %s16 = ssub.s32 %s10, 2
    %s17 = sadd.s32 %s10, 1
    %s18 = ssub.s32 %s10, %s17
    %p19 = scmp.eq.s32.totalorder %s18, 0
    %s21 = sadd.s32 %s20, 1
    %s22 = scalar_select %p19, %s20, %s21
    %p25 = pneg %p19
    %p26 = scmp.eq.s32.totalorder %s10, 1
    %p27 = por %p25, %p26
    %p28 = scmp.ne.s32.totalorder %s20, %s23
    %p29 = scmp.eq.s32.totalorder %s10, 0
    %p30 = por %p28, %p29
    %p31 = scmp.ne.s32.totalorder %s20, %s23
    %p32 = scmp.eq.s32.totalorder %s15, 1
    %p33 = por %p31, %p32
    %p34 = scmp.ne.s32.totalorder %s23, %s24
    %p35 = scmp.eq.s32.totalorder %s15, 0
    %p36 = por %p34, %p35
    %p37 = scmp.ne.s32.totalorder %s23, %s24
    %p38 = scmp.eq.s32.totalorder %s16, 1
    %p39 = por %p37, %p38
    %p41 = scmp.ne.s32.totalorder %s24, %s40
    %p42 = scmp.eq.s32.totalorder %s16, 0
    %p43 = por %p41, %p42
    %s45 = sadd.s32 %s44, 1
    %p48 = scmp.eq.s32.totalorder %s10, 1
    %p49 = scmp.ne.s32.totalorder %s44, %s46
    %p50 = scmp.eq.s32.totalorder %s10, 0
    %p51 = por %p49, %p50
    %p52 = scmp.ne.s32.totalorder %s44, %s46
    %p53 = scmp.eq.s32.totalorder %s15, 1
    %p54 = por %p52, %p53
    %p55 = scmp.ne.s32.totalorder %s46, %s47
    %p56 = scmp.eq.s32.totalorder %s15, 0
    %p57 = por %p55, %p56
    %p58 = scmp.ne.s32.totalorder %s46, %s47
    %p59 = scmp.eq.s32.totalorder %s16, 1
    %p60 = por %p58, %p59
    %p62 = scmp.ne.s32.totalorder %s47, %s61
    %p63 = scmp.eq.s32.totalorder %s16, 0
    %p64 = por %p62, %p63
    %s66 = sadd.s32 %s65, 1
    %p69 = scmp.eq.s32.totalorder %s10, 1
    %p70 = scmp.ne.s32.totalorder %s65, %s67
    %p71 = scmp.eq.s32.totalorder %s10, 0
    %p72 = por %p70, %p71
    %p73 = scmp.ne.s32.totalorder %s65, %s67
    %p74 = scmp.eq.s32.totalorder %s15, 1
    %p75 = por %p73, %p74
    %p76 = scmp.ne.s32.totalorder %s67, %s68
    %p77 = scmp.eq.s32.totalorder %s15, 0
    %p78 = por %p76, %p77
    %p79 = scmp.ne.s32.totalorder %s67, %s68
    %p80 = scmp.eq.s32.totalorder %s16, 1
    %p81 = por %p79, %p80
    %p83 = scmp.ne.s32.totalorder %s68, %s82
    %p84 = scmp.eq.s32.totalorder %s16, 0
    %p85 = por %p83, %p84
    %s87 = sadd.s32 %s86, 1
    %p90 = scmp.eq.s32.totalorder %s10, 1
    %p91 = scmp.ne.s32.totalorder %s86, %s88
    %p92 = scmp.eq.s32.totalorder %s10, 0
    %p93 = por %p91, %p92
    %p94 = scmp.ne.s32.totalorder %s86, %s88
    %p95 = scmp.eq.s32.totalorder %s15, 1
    %p96 = por %p94, %p95
    %p97 = scmp.ne.s32.totalorder %s88, %s89
    %p98 = scmp.eq.s32.totalorder %s15, 0
    %p99 = por %p97, %p98
    %p100 = scmp.ne.s32.totalorder %s88, %s89
    %p101 = scmp.eq.s32.totalorder %s16, 1
    %p102 = por %p100, %p101
    %p104 = scmp.ne.s32.totalorder %s89, %s103
    %p105 = scmp.eq.s32.totalorder %s16, 0
    %p106 = por %p104, %p105
    %s107 = ssub.s32 %s10, %s17
    %p108 = scmp.eq.s32.totalorder %s107, 0
    %s110 = sadd.s32 %s109, 1
    %s111 = scalar_select %p108, %s109, %s110
    %p114 = pneg %p108
    %p115 = scmp.eq.s32.totalorder %s10, 1
    %p116 = por %p114, %p115
    %p117 = scmp.ne.s32.totalorder %s109, %s112
    %p118 = scmp.eq.s32.totalorder %s10, 0
    %p119 = por %p117, %p118
    %p120 = scmp.ne.s32.totalorder %s109, %s112
    %p121 = scmp.eq.s32.totalorder %s15, 1
    %p122 = por %p120, %p121
    %p123 = scmp.ne.s32.totalorder %s112, %s113
    %p124 = scmp.eq.s32.totalorder %s15, 0
    %p125 = por %p123, %p124
    %p126 = scmp.ne.s32.totalorder %s112, %s113
    %p127 = scmp.eq.s32.totalorder %s16, 1
    %p128 = por %p126, %p127
    %p130 = scmp.ne.s32.totalorder %s113, %s129
    %p131 = scmp.eq.s32.totalorder %s16, 0
    %p132 = por %p130, %p131
    %p133 = scmp.le.s32.totalorder 1, %s10
    %p134 = scmp.lt.s32.totalorder %s10, 3
    %p135 = pnand %p133, %p134
    %p136 = pneg %p135
    // Predicated region
    $region9: #{mlp_forward.1} parent=5 // pred_check
      _
    $region10: #{mlp_forward.1} parent=5 // pred_check_branch
      %138 = sbr.rel (%p135) target = $region12
    $region11: #{mlp_forward.1} parent=5 // pred_region
      %s139 = ssub.s32 %s10, 1
      // Predicated region
      $region13: #{mlp_forward.1} parent=11 // pred_check
        %p140 = pneg %p57
      $region14: #{mlp_forward.1} parent=11 // pred_check_branch
        %142 = sbr.rel (%p140) target = $region16
      $region15: #{mlp_forward.1} parent=11 // pred_region
        _
      $region16: #{mlp_forward.1} parent=11 // pred_fallthru
        _
      // Predicated region
      $region17: #{mlp_forward.1} parent=11 // pred_check
        %p143 = pneg %p78
      $region18: #{mlp_forward.1} parent=11 // pred_check_branch
        %145 = sbr.rel (%p143) target = $region20
      $region19: #{mlp_forward.1} parent=11 // pred_region
        _
      $region20: #{mlp_forward.1} parent=11 // pred_fallthru
        _
      // Predicated region
      $region21: #{mlp_forward.1} parent=11 // pred_check
        %p146 = pneg %p99
      $region22: #{mlp_forward.1} parent=11 // pred_check_branch
        %148 = sbr.rel (%p146) target = $region24
      $region23: #{mlp_forward.1} parent=11 // pred_region
        _
      $region24: #{mlp_forward.1} parent=11 // pred_fallthru
        _
    $region12: #{mlp_forward.1} parent=5 // pred_fallthru
      _
    %p149 = scmp.lt.s32.totalorder %s10, 2
    // Predicated region
    $region25: #{mlp_forward.1} parent=5 // pred_check
      %p150 = pneg %p149
    $region26: #{mlp_forward.1} parent=5 // pred_check_branch
      %152 = sbr.rel (%p150) target = $region28
    $region27: #{mlp_forward.1} parent=5 // pred_region
      // Predicated region
      $region29: #{mlp_forward.1} parent=27 // pred_check
        %p153 = pneg %p30
      $region30: #{mlp_forward.1} parent=27 // pred_check_branch
        %155 = sbr.rel (%p153) target = $region32
      $region31: #{mlp_forward.1} parent=27 // pred_region
        %s156 = smul.u32 4, %s10
        %p157 = scmp.lt.s32.totalorder %s156, 7
        %s158 = scalar_select %p157, %s156, 7
        %s159 = smul.addr %s158, 16
        %s160 = smul.addr %s159, 4
        %s161 = scalar_lea.vmem %s0, %s160
        %s162 = smul.u32 4, %s10
      $region32: #{mlp_forward.1} parent=27 // pred_fallthru
        _
    $region28: #{mlp_forward.1} parent=5 // pred_fallthru
      _
    %p163 = scmp.le.s32.totalorder 1, %s10
    %p164 = scmp.lt.s32.totalorder %s10, 3
    %p165 = pnand %p163, %p164
    %p166 = pneg %p165
    // Predicated region
    $region33: #{mlp_forward.1} parent=5 // pred_check
      _
    $region34: #{mlp_forward.1} parent=5 // pred_check_branch
      %168 = sbr.rel (%p165) target = $region36
    $region35: #{mlp_forward.1} parent=5 // pred_region
      %s169 = ssub.s32 %s10, 1
      %s170 = smul.u32 4, %s15
      %p171 = scmp.lt.s32.totalorder %s170, 7
      %s172 = scalar_select %p171, %s170, 7
      %s173 = smul.addr %s172, 16
      %s174 = smul.addr %s173, 4
      %s175 = scalar_lea.vmem %s0, %s174
      %p176 = pneg %p36
      %p177 = pneg %p33
      %p178 = pneg %p57
      %p179 = pneg %p54
      %p180 = pneg %p78
      %p181 = pneg %p75
      %p182 = pneg %p99
      %p183 = pneg %p96
      %p184 = pneg %p125
      %p185 = pneg %p122
      %s186 = smul.u32 4, %s15
      %p187 = scmp.lt.s32.totalorder %s186, 7
      %s188 = scalar_select %p187, %s186, 7
      %s189 = smul.addr %s188, 8
      %s190 = scalar_lea.vmem %s4, %s189
      %s191 = smul.u32 4, %s15
      %p192 = scmp.lt.s32.totalorder %s191, 7
      %s193 = scalar_select %p192, %s191, 7
      %s194 = smul.addr %s193, 16
      %s195 = smul.addr %s194, 4
      %s196 = scalar_lea.vmem %s0, %s195
      %s197 = smul.u32 4, %s15
      %s198 = smul.u32 4, %s15
      %p199 = scmp.lt.s32.totalorder %s198, 7
      %s200 = scalar_select %p199, %s198, 7
      %s201 = smul.addr %s200, 8
      %s202 = scalar_lea.vmem %s4, %s201
      %s203 = smul.u32 4, %s15
      %v205 = vld [vmem:[%s196] sm:$0xff]
      %v206 = vld [vmem:[%s196 + $0x8] sm:$0xff]
      %v207 = vld [vmem:[%s196 + $0x10] sm:$0xff]
      %v208 = vld [vmem:[%s196 + $0x18] sm:$0xff]
      %v209 = vld [vmem:[%s196 + $0x20] sm:$0xff]
      %v210 = vld [vmem:[%s196 + $0x28] sm:$0xff]
      %v211 = vld [vmem:[%s196 + $0x30] sm:$0xff]
      %v212 = vld [vmem:[%s196 + $0x38] sm:$0xff]
      %v213 = vld [vmem:[%s196 + $0x40] sm:$0xff]
      %v214 = vld [vmem:[%s196 + $0x48] sm:$0xff]
      %v215 = vld [vmem:[%s196 + $0x50] sm:$0xff]
      %v216 = vld [vmem:[%s196 + $0x58] sm:$0xff]
      %v217 = vld [vmem:[%s196 + $0x60] sm:$0xff]
      %v218 = vld [vmem:[%s196 + $0x68] sm:$0xff]
      %v219 = vld [vmem:[%s196 + $0x70] sm:$0xff]
      %v220 = vld [vmem:[%s196 + $0x78] sm:$0xff]
      %v221 = vld [vmem:[%s196 + $0x80] sm:$0xff]
      %v222 = vld [vmem:[%s196 + $0x88] sm:$0xff]
      %v223 = vld [vmem:[%s196 + $0x90] sm:$0xff]
      %v224 = vld [vmem:[%s196 + $0x98] sm:$0xff]
      %v225 = vld [vmem:[%s196 + $0xa0] sm:$0xff]
      %v226 = vld [vmem:[%s196 + $0xa8] sm:$0xff]
      %v227 = vld [vmem:[%s196 + $0xb0] sm:$0xff]
      %v228 = vld [vmem:[%s196 + $0xb8] sm:$0xff]
      %v229 = vld [vmem:[%s196 + $0xc0] sm:$0xff]
      %v230 = vld [vmem:[%s196 + $0xc8] sm:$0xff]
      %v231 = vld [vmem:[%s196 + $0xd0] sm:$0xff]
      %v232 = vld [vmem:[%s196 + $0xd8] sm:$0xff]
      %v233 = vld [vmem:[%s196 + $0xe0] sm:$0xff]
      %v234 = vld [vmem:[%s196 + $0xe8] sm:$0xff]
      %v235 = vld [vmem:[%s196 + $0xf0] sm:$0xff]
      %v236 = vld [vmem:[%s196 + $0xf8] sm:$0xff]
      %v237 = vld [vmem:[%s1] sm:$0xff]
      %v238 = vld [vmem:[%s1 + $0x8] sm:$0xff]
      %v239 = vld [vmem:[%s1 + $0x10] sm:$0xff]
      %v240 = vld [vmem:[%s1 + $0x18] sm:$0xff]
      %v241 = vld [vmem:[%s1 + $0x20] sm:$0xff]
      %v242 = vld [vmem:[%s1 + $0x28] sm:$0xff]
      %v243 = vld [vmem:[%s1 + $0x30] sm:$0xff]
      %v244 = vld [vmem:[%s1 + $0x38] sm:$0xff]
      %v245 = vld [vmem:[%s1 + $0x40] sm:$0xff]
      %v246 = vld [vmem:[%s1 + $0x48] sm:$0xff]
      %v247 = vld [vmem:[%s1 + $0x50] sm:$0xff]
      %v248 = vld [vmem:[%s1 + $0x58] sm:$0xff]
      %v249 = vld [vmem:[%s1 + $0x60] sm:$0xff]
      %v250 = vld [vmem:[%s1 + $0x68] sm:$0xff]
      %v251 = vld [vmem:[%s1 + $0x70] sm:$0xff]
      %v252 = vld [vmem:[%s1 + $0x78] sm:$0xff]
      %v253 = vld [vmem:[%s1 + $0x80] sm:$0xff]
      %v254 = vld [vmem:[%s1 + $0x88] sm:$0xff]
      %v255 = vld [vmem:[%s1 + $0x90] sm:$0xff]
      %v256 = vld [vmem:[%s1 + $0x98] sm:$0xff]
      %v257 = vld [vmem:[%s1 + $0xa0] sm:$0xff]
      %v258 = vld [vmem:[%s1 + $0xa8] sm:$0xff]
      %v259 = vld [vmem:[%s1 + $0xb0] sm:$0xff]
      %v260 = vld [vmem:[%s1 + $0xb8] sm:$0xff]
      %v261 = vld [vmem:[%s1 + $0xc0] sm:$0xff]
      %v262 = vld [vmem:[%s1 + $0xc8] sm:$0xff]
      %v263 = vld [vmem:[%s1 + $0xd0] sm:$0xff]
      %v264 = vld [vmem:[%s1 + $0xd8] sm:$0xff]
      %v265 = vld [vmem:[%s1 + $0xe0] sm:$0xff]
      %v266 = vld [vmem:[%s1 + $0xe8] sm:$0xff]
      %v267 = vld [vmem:[%s1 + $0xf0] sm:$0xff]
      %v268 = vld [vmem:[%s1 + $0xf8] sm:$0xff]
      %v269 = vld [vmem:[%s1 + $0x100] sm:$0xff]
      %v270 = vld [vmem:[%s1 + $0x108] sm:$0xff]
      %v271 = vld [vmem:[%s1 + $0x110] sm:$0xff]
      %v272 = vld [vmem:[%s1 + $0x118] sm:$0xff]
      %v273 = vld [vmem:[%s1 + $0x120] sm:$0xff]
      %v274 = vld [vmem:[%s1 + $0x128] sm:$0xff]
      %v275 = vld [vmem:[%s1 + $0x130] sm:$0xff]
      %v276 = vld [vmem:[%s1 + $0x138] sm:$0xff]
      %v277 = vld [vmem:[%s1 + $0x140] sm:$0xff]
      %v278 = vld [vmem:[%s1 + $0x148] sm:$0xff]
      %v279 = vld [vmem:[%s1 + $0x150] sm:$0xff]
      %v280 = vld [vmem:[%s1 + $0x158] sm:$0xff]
      %v281 = vld [vmem:[%s1 + $0x160] sm:$0xff]
      %v282 = vld [vmem:[%s1 + $0x168] sm:$0xff]
      %v283 = vld [vmem:[%s1 + $0x170] sm:$0xff]
      %v284 = vld [vmem:[%s1 + $0x178] sm:$0xff]
      %v285 = vld [vmem:[%s1 + $0x180] sm:$0xff]
      %v286 = vld [vmem:[%s1 + $0x188] sm:$0xff]
      %v287 = vld [vmem:[%s1 + $0x190] sm:$0xff]
      %v288 = vld [vmem:[%s1 + $0x198] sm:$0xff]
      %v289 = vld [vmem:[%s1 + $0x1a0] sm:$0xff]
      %v290 = vld [vmem:[%s1 + $0x1a8] sm:$0xff]
      %v291 = vld [vmem:[%s1 + $0x1b0] sm:$0xff]
      %v292 = vld [vmem:[%s1 + $0x1b8] sm:$0xff]
      %v293 = vld [vmem:[%s1 + $0x1c0] sm:$0xff]
      %v294 = vld [vmem:[%s1 + $0x1c8] sm:$0xff]
      %v295 = vld [vmem:[%s1 + $0x1d0] sm:$0xff]
      %v296 = vld [vmem:[%s1 + $0x1d8] sm:$0xff]
      %v297 = vld [vmem:[%s1 + $0x1e0] sm:$0xff]
      %v298 = vld [vmem:[%s1 + $0x1e8] sm:$0xff]
      %v299 = vld [vmem:[%s1 + $0x1f0] sm:$0xff]
      %v300 = vld [vmem:[%s1 + $0x1f8] sm:$0xff]
      %v301 = vld [vmem:[%s1 + $0x200] sm:$0xff]
      %v302 = vld [vmem:[%s1 + $0x208] sm:$0xff]
      %v303 = vld [vmem:[%s1 + $0x210] sm:$0xff]
      %v304 = vld [vmem:[%s1 + $0x218] sm:$0xff]
      %v305 = vld [vmem:[%s1 + $0x220] sm:$0xff]
      %v306 = vld [vmem:[%s1 + $0x228] sm:$0xff]
      %v307 = vld [vmem:[%s1 + $0x230] sm:$0xff]
      %v308 = vld [vmem:[%s1 + $0x238] sm:$0xff]
      %v309 = vld [vmem:[%s1 + $0x240] sm:$0xff]
      %v310 = vld [vmem:[%s1 + $0x248] sm:$0xff]
      %v311 = vld [vmem:[%s1 + $0x250] sm:$0xff]
      %v312 = vld [vmem:[%s1 + $0x258] sm:$0xff]
      %v313 = vld [vmem:[%s1 + $0x260] sm:$0xff]
      %v314 = vld [vmem:[%s1 + $0x268] sm:$0xff]
      %v315 = vld [vmem:[%s1 + $0x270] sm:$0xff]
      %v316 = vld [vmem:[%s1 + $0x278] sm:$0xff]
      %v317 = vld [vmem:[%s1 + $0x280] sm:$0xff]
      %v318 = vld [vmem:[%s1 + $0x288] sm:$0xff]
      %v319 = vld [vmem:[%s1 + $0x290] sm:$0xff]
      %v320 = vld [vmem:[%s1 + $0x298] sm:$0xff]
      %v321 = vld [vmem:[%s1 + $0x2a0] sm:$0xff]
      %v322 = vld [vmem:[%s1 + $0x2a8] sm:$0xff]
      %v323 = vld [vmem:[%s1 + $0x2b0] sm:$0xff]
      %v324 = vld [vmem:[%s1 + $0x2b8] sm:$0xff]
      %v325 = vld [vmem:[%s1 + $0x2c0] sm:$0xff]
      %v326 = vld [vmem:[%s1 + $0x2c8] sm:$0xff]
      %v327 = vld [vmem:[%s1 + $0x2d0] sm:$0xff]
      %v328 = vld [vmem:[%s1 + $0x2d8] sm:$0xff]
      %v329 = vld [vmem:[%s1 + $0x2e0] sm:$0xff]
      %v330 = vld [vmem:[%s1 + $0x2e8] sm:$0xff]
      %v331 = vld [vmem:[%s1 + $0x2f0] sm:$0xff]
      %v332 = vld [vmem:[%s1 + $0x2f8] sm:$0xff]
      %v333 = vld [vmem:[%s1 + $0x300] sm:$0xff]
      %v334 = vld [vmem:[%s1 + $0x308] sm:$0xff]
      %v335 = vld [vmem:[%s1 + $0x310] sm:$0xff]
      %v336 = vld [vmem:[%s1 + $0x318] sm:$0xff]
      %v337 = vld [vmem:[%s1 + $0x320] sm:$0xff]
      %v338 = vld [vmem:[%s1 + $0x328] sm:$0xff]
      %v339 = vld [vmem:[%s1 + $0x330] sm:$0xff]
      %v340 = vld [vmem:[%s1 + $0x338] sm:$0xff]
      %v341 = vld [vmem:[%s1 + $0x340] sm:$0xff]
      %v342 = vld [vmem:[%s1 + $0x348] sm:$0xff]
      %v343 = vld [vmem:[%s1 + $0x350] sm:$0xff]
      %v344 = vld [vmem:[%s1 + $0x358] sm:$0xff]
      %v345 = vld [vmem:[%s1 + $0x360] sm:$0xff]
      %v346 = vld [vmem:[%s1 + $0x368] sm:$0xff]
      %v347 = vld [vmem:[%s1 + $0x370] sm:$0xff]
      %v348 = vld [vmem:[%s1 + $0x378] sm:$0xff]
      %v349 = vld [vmem:[%s1 + $0x380] sm:$0xff]
      %v350 = vld [vmem:[%s1 + $0x388] sm:$0xff]
      %v351 = vld [vmem:[%s1 + $0x390] sm:$0xff]
      %v352 = vld [vmem:[%s1 + $0x398] sm:$0xff]
      %v353 = vld [vmem:[%s1 + $0x3a0] sm:$0xff]
      %v354 = vld [vmem:[%s1 + $0x3a8] sm:$0xff]
      %v355 = vld [vmem:[%s1 + $0x3b0] sm:$0xff]
      %v356 = vld [vmem:[%s1 + $0x3b8] sm:$0xff]
      %v357 = vld [vmem:[%s1 + $0x3c0] sm:$0xff]
      %v358 = vld [vmem:[%s1 + $0x3c8] sm:$0xff]
      %v359 = vld [vmem:[%s1 + $0x3d0] sm:$0xff]
      %v360 = vld [vmem:[%s1 + $0x3d8] sm:$0xff]
      %v361 = vld [vmem:[%s1 + $0x3e0] sm:$0xff]
      %v362 = vld [vmem:[%s1 + $0x3e8] sm:$0xff]
      %v363 = vld [vmem:[%s1 + $0x3f0] sm:$0xff]
      %v364 = vld [vmem:[%s1 + $0x3f8] sm:$0xff]
      %v365 = vld [vmem:[%s1 + $0x400] sm:$0xff]
      %v366 = vld [vmem:[%s1 + $0x408] sm:$0xff]
      %v367 = vld [vmem:[%s1 + $0x410] sm:$0xff]
      %v368 = vld [vmem:[%s1 + $0x418] sm:$0xff]
      %v369 = vld [vmem:[%s1 + $0x420] sm:$0xff]
      %v370 = vld [vmem:[%s1 + $0x428] sm:$0xff]
      %v371 = vld [vmem:[%s1 + $0x430] sm:$0xff]
      %v372 = vld [vmem:[%s1 + $0x438] sm:$0xff]
      %v373 = vld [vmem:[%s1 + $0x440] sm:$0xff]
      %v374 = vld [vmem:[%s1 + $0x448] sm:$0xff]
      %v375 = vld [vmem:[%s1 + $0x450] sm:$0xff]
      %v376 = vld [vmem:[%s1 + $0x458] sm:$0xff]
      %v377 = vld [vmem:[%s1 + $0x460] sm:$0xff]
      %v378 = vld [vmem:[%s1 + $0x468] sm:$0xff]
      %v379 = vld [vmem:[%s1 + $0x470] sm:$0xff]
      %v380 = vld [vmem:[%s1 + $0x478] sm:$0xff]
      %v381 = vld [vmem:[%s1 + $0x480] sm:$0xff]
      %v382 = vld [vmem:[%s1 + $0x488] sm:$0xff]
      %v383 = vld [vmem:[%s1 + $0x490] sm:$0xff]
      %v384 = vld [vmem:[%s1 + $0x498] sm:$0xff]
      %v385 = vld [vmem:[%s1 + $0x4a0] sm:$0xff]
      %v386 = vld [vmem:[%s1 + $0x4a8] sm:$0xff]
      %v387 = vld [vmem:[%s1 + $0x4b0] sm:$0xff]
      %v388 = vld [vmem:[%s1 + $0x4b8] sm:$0xff]
      %v389 = vld [vmem:[%s1 + $0x4c0] sm:$0xff]
      %v390 = vld [vmem:[%s1 + $0x4c8] sm:$0xff]
      %v391 = vld [vmem:[%s1 + $0x4d0] sm:$0xff]
      %v392 = vld [vmem:[%s1 + $0x4d8] sm:$0xff]
      %v393 = vld [vmem:[%s1 + $0x4e0] sm:$0xff]
      %v394 = vld [vmem:[%s1 + $0x4e8] sm:$0xff]
      %v395 = vld [vmem:[%s1 + $0x4f0] sm:$0xff]
      %v396 = vld [vmem:[%s1 + $0x4f8] sm:$0xff]
      %v397 = vld [vmem:[%s1 + $0x500] sm:$0xff]
      %v398 = vld [vmem:[%s1 + $0x508] sm:$0xff]
      %v399 = vld [vmem:[%s1 + $0x510] sm:$0xff]
      %v400 = vld [vmem:[%s1 + $0x518] sm:$0xff]
      %v401 = vld [vmem:[%s1 + $0x520] sm:$0xff]
      %v402 = vld [vmem:[%s1 + $0x528] sm:$0xff]
      %v403 = vld [vmem:[%s1 + $0x530] sm:$0xff]
      %v404 = vld [vmem:[%s1 + $0x538] sm:$0xff]
      %v405 = vld [vmem:[%s1 + $0x540] sm:$0xff]
      %v406 = vld [vmem:[%s1 + $0x548] sm:$0xff]
      %v407 = vld [vmem:[%s1 + $0x550] sm:$0xff]
      %v408 = vld [vmem:[%s1 + $0x558] sm:$0xff]
      %v409 = vld [vmem:[%s1 + $0x560] sm:$0xff]
      %v410 = vld [vmem:[%s1 + $0x568] sm:$0xff]
      %v411 = vld [vmem:[%s1 + $0x570] sm:$0xff]
      %v412 = vld [vmem:[%s1 + $0x578] sm:$0xff]
      %v413 = vld [vmem:[%s1 + $0x580] sm:$0xff]
      %v414 = vld [vmem:[%s1 + $0x588] sm:$0xff]
      %v415 = vld [vmem:[%s1 + $0x590] sm:$0xff]
      %v416 = vld [vmem:[%s1 + $0x598] sm:$0xff]
      %v417 = vld [vmem:[%s1 + $0x5a0] sm:$0xff]
      %v418 = vld [vmem:[%s1 + $0x5a8] sm:$0xff]
      %v419 = vld [vmem:[%s1 + $0x5b0] sm:$0xff]
      %v420 = vld [vmem:[%s1 + $0x5b8] sm:$0xff]
      %v421 = vld [vmem:[%s1 + $0x5c0] sm:$0xff]
      %v422 = vld [vmem:[%s1 + $0x5c8] sm:$0xff]
      %v423 = vld [vmem:[%s1 + $0x5d0] sm:$0xff]
      %v424 = vld [vmem:[%s1 + $0x5d8] sm:$0xff]
      %v425 = vld [vmem:[%s1 + $0x5e0] sm:$0xff]
      %v426 = vld [vmem:[%s1 + $0x5e8] sm:$0xff]
      %v427 = vld [vmem:[%s1 + $0x5f0] sm:$0xff]
      %v428 = vld [vmem:[%s1 + $0x5f8] sm:$0xff]
      %v429 = vld [vmem:[%s1 + $0x600] sm:$0xff]
      %v430 = vld [vmem:[%s1 + $0x608] sm:$0xff]
      %v431 = vld [vmem:[%s1 + $0x610] sm:$0xff]
      %v432 = vld [vmem:[%s1 + $0x618] sm:$0xff]
      %v433 = vld [vmem:[%s1 + $0x620] sm:$0xff]
      %v434 = vld [vmem:[%s1 + $0x628] sm:$0xff]
      %v435 = vld [vmem:[%s1 + $0x630] sm:$0xff]
      %v436 = vld [vmem:[%s1 + $0x638] sm:$0xff]
      %v437 = vld [vmem:[%s1 + $0x640] sm:$0xff]
      %v438 = vld [vmem:[%s1 + $0x648] sm:$0xff]
      %v439 = vld [vmem:[%s1 + $0x650] sm:$0xff]
      %v440 = vld [vmem:[%s1 + $0x658] sm:$0xff]
      %v441 = vld [vmem:[%s1 + $0x660] sm:$0xff]
      %v442 = vld [vmem:[%s1 + $0x668] sm:$0xff]
      %v443 = vld [vmem:[%s1 + $0x670] sm:$0xff]
      %v444 = vld [vmem:[%s1 + $0x678] sm:$0xff]
      %v445 = vld [vmem:[%s1 + $0x680] sm:$0xff]
      %v446 = vld [vmem:[%s1 + $0x688] sm:$0xff]
      %v447 = vld [vmem:[%s1 + $0x690] sm:$0xff]
      %v448 = vld [vmem:[%s1 + $0x698] sm:$0xff]
      %v449 = vld [vmem:[%s1 + $0x6a0] sm:$0xff]
      %v450 = vld [vmem:[%s1 + $0x6a8] sm:$0xff]
      %v451 = vld [vmem:[%s1 + $0x6b0] sm:$0xff]
      %v452 = vld [vmem:[%s1 + $0x6b8] sm:$0xff]
      %v453 = vld [vmem:[%s1 + $0x6c0] sm:$0xff]
      %v454 = vld [vmem:[%s1 + $0x6c8] sm:$0xff]
      %v455 = vld [vmem:[%s1 + $0x6d0] sm:$0xff]
      %v456 = vld [vmem:[%s1 + $0x6d8] sm:$0xff]
      %v457 = vld [vmem:[%s1 + $0x6e0] sm:$0xff]
      %v458 = vld [vmem:[%s1 + $0x6e8] sm:$0xff]
      %v459 = vld [vmem:[%s1 + $0x6f0] sm:$0xff]
      %v460 = vld [vmem:[%s1 + $0x6f8] sm:$0xff]
      %v461 = vld [vmem:[%s1 + $0x700] sm:$0xff]
      %v462 = vld [vmem:[%s1 + $0x708] sm:$0xff]
      %v463 = vld [vmem:[%s1 + $0x710] sm:$0xff]
      %v464 = vld [vmem:[%s1 + $0x718] sm:$0xff]
      %v465 = vld [vmem:[%s1 + $0x720] sm:$0xff]
      %v466 = vld [vmem:[%s1 + $0x728] sm:$0xff]
      %v467 = vld [vmem:[%s1 + $0x730] sm:$0xff]
      %v468 = vld [vmem:[%s1 + $0x738] sm:$0xff]
      %v469 = vld [vmem:[%s1 + $0x740] sm:$0xff]
      %v470 = vld [vmem:[%s1 + $0x748] sm:$0xff]
      %v471 = vld [vmem:[%s1 + $0x750] sm:$0xff]
      %v472 = vld [vmem:[%s1 + $0x758] sm:$0xff]
      %v473 = vld [vmem:[%s1 + $0x760] sm:$0xff]
      %v474 = vld [vmem:[%s1 + $0x768] sm:$0xff]
      %v475 = vld [vmem:[%s1 + $0x770] sm:$0xff]
      %v476 = vld [vmem:[%s1 + $0x778] sm:$0xff]
      %v477 = vld [vmem:[%s1 + $0x780] sm:$0xff]
      %v478 = vld [vmem:[%s1 + $0x788] sm:$0xff]
      %v479 = vld [vmem:[%s1 + $0x790] sm:$0xff]
      %v480 = vld [vmem:[%s1 + $0x798] sm:$0xff]
      %v481 = vld [vmem:[%s1 + $0x7a0] sm:$0xff]
      %v482 = vld [vmem:[%s1 + $0x7a8] sm:$0xff]
      %v483 = vld [vmem:[%s1 + $0x7b0] sm:$0xff]
      %v484 = vld [vmem:[%s1 + $0x7b8] sm:$0xff]
      %v485 = vld [vmem:[%s1 + $0x7c0] sm:$0xff]
      %v486 = vld [vmem:[%s1 + $0x7c8] sm:$0xff]
      %v487 = vld [vmem:[%s1 + $0x7d0] sm:$0xff]
      %v488 = vld [vmem:[%s1 + $0x7d8] sm:$0xff]
      %v489 = vld [vmem:[%s1 + $0x7e0] sm:$0xff]
      %v490 = vld [vmem:[%s1 + $0x7e8] sm:$0xff]
      %v491 = vld [vmem:[%s1 + $0x7f0] sm:$0xff]
      %v492 = vld [vmem:[%s1 + $0x7f8] sm:$0xff]
      %v493 = vld [vmem:[%s1 + $0x800] sm:$0xff]
      %v494 = vld [vmem:[%s1 + $0x808] sm:$0xff]
      %v495 = vld [vmem:[%s1 + $0x810] sm:$0xff]
      %v496 = vld [vmem:[%s1 + $0x818] sm:$0xff]
      %v497 = vld [vmem:[%s1 + $0x820] sm:$0xff]
      %v498 = vld [vmem:[%s1 + $0x828] sm:$0xff]
      %v499 = vld [vmem:[%s1 + $0x830] sm:$0xff]
      %v500 = vld [vmem:[%s1 + $0x838] sm:$0xff]
      %v501 = vld [vmem:[%s1 + $0x840] sm:$0xff]
      %v502 = vld [vmem:[%s1 + $0x848] sm:$0xff]
      %v503 = vld [vmem:[%s1 + $0x850] sm:$0xff]
      %v504 = vld [vmem:[%s1 + $0x858] sm:$0xff]
      %v505 = vld [vmem:[%s1 + $0x860] sm:$0xff]
      %v506 = vld [vmem:[%s1 + $0x868] sm:$0xff]
      %v507 = vld [vmem:[%s1 + $0x870] sm:$0xff]
      %v508 = vld [vmem:[%s1 + $0x878] sm:$0xff]
      %v509 = vld [vmem:[%s1 + $0x880] sm:$0xff]
      %v510 = vld [vmem:[%s1 + $0x888] sm:$0xff]
      %v511 = vld [vmem:[%s1 + $0x890] sm:$0xff]
      %v512 = vld [vmem:[%s1 + $0x898] sm:$0xff]
      %v513 = vld [vmem:[%s1 + $0x8a0] sm:$0xff]
      %v514 = vld [vmem:[%s1 + $0x8a8] sm:$0xff]
      %v515 = vld [vmem:[%s1 + $0x8b0] sm:$0xff]
      %v516 = vld [vmem:[%s1 + $0x8b8] sm:$0xff]
      %v517 = vld [vmem:[%s1 + $0x8c0] sm:$0xff]
      %v518 = vld [vmem:[%s1 + $0x8c8] sm:$0xff]
      %v519 = vld [vmem:[%s1 + $0x8d0] sm:$0xff]
      %v520 = vld [vmem:[%s1 + $0x8d8] sm:$0xff]
      %v521 = vld [vmem:[%s1 + $0x8e0] sm:$0xff]
      %v522 = vld [vmem:[%s1 + $0x8e8] sm:$0xff]
      %v523 = vld [vmem:[%s1 + $0x8f0] sm:$0xff]
      %v524 = vld [vmem:[%s1 + $0x8f8] sm:$0xff]
      %v525 = vld [vmem:[%s1 + $0x900] sm:$0xff]
      %v526 = vld [vmem:[%s1 + $0x908] sm:$0xff]
      %v527 = vld [vmem:[%s1 + $0x910] sm:$0xff]
      %v528 = vld [vmem:[%s1 + $0x918] sm:$0xff]
      %v529 = vld [vmem:[%s1 + $0x920] sm:$0xff]
      %v530 = vld [vmem:[%s1 + $0x928] sm:$0xff]
      %v531 = vld [vmem:[%s1 + $0x930] sm:$0xff]
      %v532 = vld [vmem:[%s1 + $0x938] sm:$0xff]
      %v533 = vld [vmem:[%s1 + $0x940] sm:$0xff]
      %v534 = vld [vmem:[%s1 + $0x948] sm:$0xff]
      %v535 = vld [vmem:[%s1 + $0x950] sm:$0xff]
      %v536 = vld [vmem:[%s1 + $0x958] sm:$0xff]
      %v537 = vld [vmem:[%s1 + $0x960] sm:$0xff]
      %v538 = vld [vmem:[%s1 + $0x968] sm:$0xff]
      %v539 = vld [vmem:[%s1 + $0x970] sm:$0xff]
      %v540 = vld [vmem:[%s1 + $0x978] sm:$0xff]
      %v541 = vld [vmem:[%s1 + $0x980] sm:$0xff]
      %v542 = vld [vmem:[%s1 + $0x988] sm:$0xff]
      %v543 = vld [vmem:[%s1 + $0x990] sm:$0xff]
      %v544 = vld [vmem:[%s1 + $0x998] sm:$0xff]
      %v545 = vld [vmem:[%s1 + $0x9a0] sm:$0xff]
      %v546 = vld [vmem:[%s1 + $0x9a8] sm:$0xff]
      %v547 = vld [vmem:[%s1 + $0x9b0] sm:$0xff]
      %v548 = vld [vmem:[%s1 + $0x9b8] sm:$0xff]
      %v549 = vld [vmem:[%s1 + $0x9c0] sm:$0xff]
      %v550 = vld [vmem:[%s1 + $0x9c8] sm:$0xff]
      %v551 = vld [vmem:[%s1 + $0x9d0] sm:$0xff]
      %v552 = vld [vmem:[%s1 + $0x9d8] sm:$0xff]
      %v553 = vld [vmem:[%s1 + $0x9e0] sm:$0xff]
      %v554 = vld [vmem:[%s1 + $0x9e8] sm:$0xff]
      %v555 = vld [vmem:[%s1 + $0x9f0] sm:$0xff]
      %v556 = vld [vmem:[%s1 + $0x9f8] sm:$0xff]
      %v557 = vld [vmem:[%s1 + $0xa00] sm:$0xff]
      %v558 = vld [vmem:[%s1 + $0xa08] sm:$0xff]
      %v559 = vld [vmem:[%s1 + $0xa10] sm:$0xff]
      %v560 = vld [vmem:[%s1 + $0xa18] sm:$0xff]
      %v561 = vld [vmem:[%s1 + $0xa20] sm:$0xff]
      %v562 = vld [vmem:[%s1 + $0xa28] sm:$0xff]
      %v563 = vld [vmem:[%s1 + $0xa30] sm:$0xff]
      %v564 = vld [vmem:[%s1 + $0xa38] sm:$0xff]
      %v565 = vld [vmem:[%s1 + $0xa40] sm:$0xff]
      %v566 = vld [vmem:[%s1 + $0xa48] sm:$0xff]
      %v567 = vld [vmem:[%s1 + $0xa50] sm:$0xff]
      %v568 = vld [vmem:[%s1 + $0xa58] sm:$0xff]
      %v569 = vld [vmem:[%s1 + $0xa60] sm:$0xff]
      %v570 = vld [vmem:[%s1 + $0xa68] sm:$0xff]
      %v571 = vld [vmem:[%s1 + $0xa70] sm:$0xff]
      %v572 = vld [vmem:[%s1 + $0xa78] sm:$0xff]
      %v573 = vld [vmem:[%s1 + $0xa80] sm:$0xff]
      %v574 = vld [vmem:[%s1 + $0xa88] sm:$0xff]
      %v575 = vld [vmem:[%s1 + $0xa90] sm:$0xff]
      %v576 = vld [vmem:[%s1 + $0xa98] sm:$0xff]
      %v577 = vld [vmem:[%s1 + $0xaa0] sm:$0xff]
      %v578 = vld [vmem:[%s1 + $0xaa8] sm:$0xff]
      %v579 = vld [vmem:[%s1 + $0xab0] sm:$0xff]
      %v580 = vld [vmem:[%s1 + $0xab8] sm:$0xff]
      %v581 = vld [vmem:[%s1 + $0xac0] sm:$0xff]
      %v582 = vld [vmem:[%s1 + $0xac8] sm:$0xff]
      %v583 = vld [vmem:[%s1 + $0xad0] sm:$0xff]
      %v584 = vld [vmem:[%s1 + $0xad8] sm:$0xff]
      %v585 = vld [vmem:[%s1 + $0xae0] sm:$0xff]
      %v586 = vld [vmem:[%s1 + $0xae8] sm:$0xff]
      %v587 = vld [vmem:[%s1 + $0xaf0] sm:$0xff]
      %v588 = vld [vmem:[%s1 + $0xaf8] sm:$0xff]
      %v589 = vld [vmem:[%s1 + $0xb00] sm:$0xff]
      %v590 = vld [vmem:[%s1 + $0xb08] sm:$0xff]
      %v591 = vld [vmem:[%s1 + $0xb10] sm:$0xff]
      %v592 = vld [vmem:[%s1 + $0xb18] sm:$0xff]
      %v593 = vld [vmem:[%s1 + $0xb20] sm:$0xff]
      %v594 = vld [vmem:[%s1 + $0xb28] sm:$0xff]
      %v595 = vld [vmem:[%s1 + $0xb30] sm:$0xff]
      %v596 = vld [vmem:[%s1 + $0xb38] sm:$0xff]
      %v597 = vld [vmem:[%s1 + $0xb40] sm:$0xff]
      %v598 = vld [vmem:[%s1 + $0xb48] sm:$0xff]
      %v599 = vld [vmem:[%s1 + $0xb50] sm:$0xff]
      %v600 = vld [vmem:[%s1 + $0xb58] sm:$0xff]
      %v601 = vld [vmem:[%s1 + $0xb60] sm:$0xff]
      %v602 = vld [vmem:[%s1 + $0xb68] sm:$0xff]
      %v603 = vld [vmem:[%s1 + $0xb70] sm:$0xff]
      %v604 = vld [vmem:[%s1 + $0xb78] sm:$0xff]
      %v605 = vld [vmem:[%s1 + $0xb80] sm:$0xff]
      %v606 = vld [vmem:[%s1 + $0xb88] sm:$0xff]
      %v607 = vld [vmem:[%s1 + $0xb90] sm:$0xff]
      %v608 = vld [vmem:[%s1 + $0xb98] sm:$0xff]
      %v609 = vld [vmem:[%s1 + $0xba0] sm:$0xff]
      %v610 = vld [vmem:[%s1 + $0xba8] sm:$0xff]
      %v611 = vld [vmem:[%s1 + $0xbb0] sm:$0xff]
      %v612 = vld [vmem:[%s1 + $0xbb8] sm:$0xff]
      %v613 = vld [vmem:[%s1 + $0xbc0] sm:$0xff]
      %v614 = vld [vmem:[%s1 + $0xbc8] sm:$0xff]
      %v615 = vld [vmem:[%s1 + $0xbd0] sm:$0xff]
      %v616 = vld [vmem:[%s1 + $0xbd8] sm:$0xff]
      %v617 = vld [vmem:[%s1 + $0xbe0] sm:$0xff]
      %v618 = vld [vmem:[%s1 + $0xbe8] sm:$0xff]
      %v619 = vld [vmem:[%s1 + $0xbf0] sm:$0xff]
      %v620 = vld [vmem:[%s1 + $0xbf8] sm:$0xff]
      %v621 = vld [vmem:[%s1 + $0xc00] sm:$0xff]
      %v622 = vld [vmem:[%s1 + $0xc08] sm:$0xff]
      %v623 = vld [vmem:[%s1 + $0xc10] sm:$0xff]
      %v624 = vld [vmem:[%s1 + $0xc18] sm:$0xff]
      %v625 = vld [vmem:[%s1 + $0xc20] sm:$0xff]
      %v626 = vld [vmem:[%s1 + $0xc28] sm:$0xff]
      %v627 = vld [vmem:[%s1 + $0xc30] sm:$0xff]
      %v628 = vld [vmem:[%s1 + $0xc38] sm:$0xff]
      %v629 = vld [vmem:[%s1 + $0xc40] sm:$0xff]
      %v630 = vld [vmem:[%s1 + $0xc48] sm:$0xff]
      %v631 = vld [vmem:[%s1 + $0xc50] sm:$0xff]
      %v632 = vld [vmem:[%s1 + $0xc58] sm:$0xff]
      %v633 = vld [vmem:[%s1 + $0xc60] sm:$0xff]
      %v634 = vld [vmem:[%s1 + $0xc68] sm:$0xff]
      %v635 = vld [vmem:[%s1 + $0xc70] sm:$0xff]
      %v636 = vld [vmem:[%s1 + $0xc78] sm:$0xff]
      %v637 = vld [vmem:[%s1 + $0xc80] sm:$0xff]
      %v638 = vld [vmem:[%s1 + $0xc88] sm:$0xff]
      %v639 = vld [vmem:[%s1 + $0xc90] sm:$0xff]
      %v640 = vld [vmem:[%s1 + $0xc98] sm:$0xff]
      %v641 = vld [vmem:[%s1 + $0xca0] sm:$0xff]
      %v642 = vld [vmem:[%s1 + $0xca8] sm:$0xff]
      %v643 = vld [vmem:[%s1 + $0xcb0] sm:$0xff]
      %v644 = vld [vmem:[%s1 + $0xcb8] sm:$0xff]
      %v645 = vld [vmem:[%s1 + $0xcc0] sm:$0xff]
      %v646 = vld [vmem:[%s1 + $0xcc8] sm:$0xff]
      %v647 = vld [vmem:[%s1 + $0xcd0] sm:$0xff]
      %v648 = vld [vmem:[%s1 + $0xcd8] sm:$0xff]
      %v649 = vld [vmem:[%s1 + $0xce0] sm:$0xff]
      %v650 = vld [vmem:[%s1 + $0xce8] sm:$0xff]
      %v651 = vld [vmem:[%s1 + $0xcf0] sm:$0xff]
      %v652 = vld [vmem:[%s1 + $0xcf8] sm:$0xff]
      %v653 = vld [vmem:[%s1 + $0xd00] sm:$0xff]
      %v654 = vld [vmem:[%s1 + $0xd08] sm:$0xff]
      %v655 = vld [vmem:[%s1 + $0xd10] sm:$0xff]
      %v656 = vld [vmem:[%s1 + $0xd18] sm:$0xff]
      %v657 = vld [vmem:[%s1 + $0xd20] sm:$0xff]
      %v658 = vld [vmem:[%s1 + $0xd28] sm:$0xff]
      %v659 = vld [vmem:[%s1 + $0xd30] sm:$0xff]
      %v660 = vld [vmem:[%s1 + $0xd38] sm:$0xff]
      %v661 = vld [vmem:[%s1 + $0xd40] sm:$0xff]
      %v662 = vld [vmem:[%s1 + $0xd48] sm:$0xff]
      %v663 = vld [vmem:[%s1 + $0xd50] sm:$0xff]
      %v664 = vld [vmem:[%s1 + $0xd58] sm:$0xff]
      %v665 = vld [vmem:[%s1 + $0xd60] sm:$0xff]
      %v666 = vld [vmem:[%s1 + $0xd68] sm:$0xff]
      %v667 = vld [vmem:[%s1 + $0xd70] sm:$0xff]
      %v668 = vld [vmem:[%s1 + $0xd78] sm:$0xff]
      %v669 = vld [vmem:[%s1 + $0xd80] sm:$0xff]
      %v670 = vld [vmem:[%s1 + $0xd88] sm:$0xff]
      %v671 = vld [vmem:[%s1 + $0xd90] sm:$0xff]
      %v672 = vld [vmem:[%s1 + $0xd98] sm:$0xff]
      %v673 = vld [vmem:[%s1 + $0xda0] sm:$0xff]
      %v674 = vld [vmem:[%s1 + $0xda8] sm:$0xff]
      %v675 = vld [vmem:[%s1 + $0xdb0] sm:$0xff]
      %v676 = vld [vmem:[%s1 + $0xdb8] sm:$0xff]
      %v677 = vld [vmem:[%s1 + $0xdc0] sm:$0xff]
      %v678 = vld [vmem:[%s1 + $0xdc8] sm:$0xff]
      %v679 = vld [vmem:[%s1 + $0xdd0] sm:$0xff]
      %v680 = vld [vmem:[%s1 + $0xdd8] sm:$0xff]
      %v681 = vld [vmem:[%s1 + $0xde0] sm:$0xff]
      %v682 = vld [vmem:[%s1 + $0xde8] sm:$0xff]
      %v683 = vld [vmem:[%s1 + $0xdf0] sm:$0xff]
      %v684 = vld [vmem:[%s1 + $0xdf8] sm:$0xff]
      %v685 = vld [vmem:[%s1 + $0xe00] sm:$0xff]
      %v686 = vld [vmem:[%s1 + $0xe08] sm:$0xff]
      %v687 = vld [vmem:[%s1 + $0xe10] sm:$0xff]
      %v688 = vld [vmem:[%s1 + $0xe18] sm:$0xff]
      %v689 = vld [vmem:[%s1 + $0xe20] sm:$0xff]
      %v690 = vld [vmem:[%s1 + $0xe28] sm:$0xff]
      %v691 = vld [vmem:[%s1 + $0xe30] sm:$0xff]
      %v692 = vld [vmem:[%s1 + $0xe38] sm:$0xff]
      %v693 = vld [vmem:[%s1 + $0xe40] sm:$0xff]
      %v694 = vld [vmem:[%s1 + $0xe48] sm:$0xff]
      %v695 = vld [vmem:[%s1 + $0xe50] sm:$0xff]
      %v696 = vld [vmem:[%s1 + $0xe58] sm:$0xff]
      %v697 = vld [vmem:[%s1 + $0xe60] sm:$0xff]
      %v698 = vld [vmem:[%s1 + $0xe68] sm:$0xff]
      %v699 = vld [vmem:[%s1 + $0xe70] sm:$0xff]
      %v700 = vld [vmem:[%s1 + $0xe78] sm:$0xff]
      %v701 = vld [vmem:[%s1 + $0xe80] sm:$0xff]
      %v702 = vld [vmem:[%s1 + $0xe88] sm:$0xff]
      %v703 = vld [vmem:[%s1 + $0xe90] sm:$0xff]
      %v704 = vld [vmem:[%s1 + $0xe98] sm:$0xff]
      %v705 = vld [vmem:[%s1 + $0xea0] sm:$0xff]
      %v706 = vld [vmem:[%s1 + $0xea8] sm:$0xff]
      %v707 = vld [vmem:[%s1 + $0xeb0] sm:$0xff]
      %v708 = vld [vmem:[%s1 + $0xeb8] sm:$0xff]
      %v709 = vld [vmem:[%s1 + $0xec0] sm:$0xff]
      %v710 = vld [vmem:[%s1 + $0xec8] sm:$0xff]
      %v711 = vld [vmem:[%s1 + $0xed0] sm:$0xff]
      %v712 = vld [vmem:[%s1 + $0xed8] sm:$0xff]
      %v713 = vld [vmem:[%s1 + $0xee0] sm:$0xff]
      %v714 = vld [vmem:[%s1 + $0xee8] sm:$0xff]
      %v715 = vld [vmem:[%s1 + $0xef0] sm:$0xff]
      %v716 = vld [vmem:[%s1 + $0xef8] sm:$0xff]
      %v717 = vld [vmem:[%s1 + $0xf00] sm:$0xff]
      %v718 = vld [vmem:[%s1 + $0xf08] sm:$0xff]
      %v719 = vld [vmem:[%s1 + $0xf10] sm:$0xff]
      %v720 = vld [vmem:[%s1 + $0xf18] sm:$0xff]
      %v721 = vld [vmem:[%s1 + $0xf20] sm:$0xff]
      %v722 = vld [vmem:[%s1 + $0xf28] sm:$0xff]
      %v723 = vld [vmem:[%s1 + $0xf30] sm:$0xff]
      %v724 = vld [vmem:[%s1 + $0xf38] sm:$0xff]
      %v725 = vld [vmem:[%s1 + $0xf40] sm:$0xff]
      %v726 = vld [vmem:[%s1 + $0xf48] sm:$0xff]
      %v727 = vld [vmem:[%s1 + $0xf50] sm:$0xff]
      %v728 = vld [vmem:[%s1 + $0xf58] sm:$0xff]
      %v729 = vld [vmem:[%s1 + $0xf60] sm:$0xff]
      %v730 = vld [vmem:[%s1 + $0xf68] sm:$0xff]
      %v731 = vld [vmem:[%s1 + $0xf70] sm:$0xff]
      %v732 = vld [vmem:[%s1 + $0xf78] sm:$0xff]
      %v733 = vld [vmem:[%s1 + $0xf80] sm:$0xff]
      %v734 = vld [vmem:[%s1 + $0xf88] sm:$0xff]
      %v735 = vld [vmem:[%s1 + $0xf90] sm:$0xff]
      %v736 = vld [vmem:[%s1 + $0xf98] sm:$0xff]
      %v737 = vld [vmem:[%s1 + $0xfa0] sm:$0xff]
      %v738 = vld [vmem:[%s1 + $0xfa8] sm:$0xff]
      %v739 = vld [vmem:[%s1 + $0xfb0] sm:$0xff]
      %v740 = vld [vmem:[%s1 + $0xfb8] sm:$0xff]
      %v741 = vld [vmem:[%s1 + $0xfc0] sm:$0xff]
      %v742 = vld [vmem:[%s1 + $0xfc8] sm:$0xff]
      %v743 = vld [vmem:[%s1 + $0xfd0] sm:$0xff]
      %v744 = vld [vmem:[%s1 + $0xfd8] sm:$0xff]
      %v745 = vld [vmem:[%s1 + $0xfe0] sm:$0xff]
      %v746 = vld [vmem:[%s1 + $0xfe8] sm:$0xff]
      %v747 = vld [vmem:[%s1 + $0xff0] sm:$0xff]
      %v748 = vld [vmem:[%s1 + $0xff8] sm:$0xff]
      %v781 = vunpack.c.l.b16 %v205
      %v782 = vunpack.c.h.b16 %v205
      %v783 = vunpack.c.l.b16 %v206
      %v784 = vunpack.c.h.b16 %v206
      %v785 = vunpack.c.l.b16 %v207
      %v786 = vunpack.c.h.b16 %v207
      %v787 = vunpack.c.l.b16 %v208
      %v788 = vunpack.c.h.b16 %v208
      %v789 = vunpack.c.l.b16 %v209
      %v790 = vunpack.c.h.b16 %v209
      %v791 = vunpack.c.l.b16 %v210
      %v792 = vunpack.c.h.b16 %v210
      %v793 = vunpack.c.l.b16 %v211
      %v794 = vunpack.c.h.b16 %v211
      %v795 = vunpack.c.l.b16 %v212
      %v796 = vunpack.c.h.b16 %v212
      %v797 = vunpack.c.l.b16 %v213
      %v798 = vunpack.c.h.b16 %v213
      %v799 = vunpack.c.l.b16 %v214
      %v800 = vunpack.c.h.b16 %v214
      %v801 = vunpack.c.l.b16 %v215
      %v802 = vunpack.c.h.b16 %v215
      %v803 = vunpack.c.l.b16 %v216
      %v804 = vunpack.c.h.b16 %v216
      %v805 = vunpack.c.l.b16 %v217
      %v806 = vunpack.c.h.b16 %v217
      %v807 = vunpack.c.l.b16 %v218
      %v808 = vunpack.c.h.b16 %v218
      %v809 = vunpack.c.l.b16 %v219
      %v810 = vunpack.c.h.b16 %v219
      %v811 = vunpack.c.l.b16 %v220
      %v812 = vunpack.c.h.b16 %v220
      %v813 = vunpack.c.l.b16 %v221
      %v814 = vunpack.c.h.b16 %v221
      %v815 = vunpack.c.l.b16 %v222
      %v816 = vunpack.c.h.b16 %v222
      %v817 = vunpack.c.l.b16 %v223
      %v818 = vunpack.c.h.b16 %v223
      %v819 = vunpack.c.l.b16 %v224
      %v820 = vunpack.c.h.b16 %v224
      %v821 = vunpack.c.l.b16 %v225
      %v822 = vunpack.c.h.b16 %v225
      %v823 = vunpack.c.l.b16 %v226
      %v824 = vunpack.c.h.b16 %v226
      %v825 = vunpack.c.l.b16 %v227
      %v826 = vunpack.c.h.b16 %v227
      %v827 = vunpack.c.l.b16 %v228
      %v828 = vunpack.c.h.b16 %v228
      %v829 = vunpack.c.l.b16 %v229
      %v830 = vunpack.c.h.b16 %v229
      %v831 = vunpack.c.l.b16 %v230
      %v832 = vunpack.c.h.b16 %v230
      %v833 = vunpack.c.l.b16 %v231
      %v834 = vunpack.c.h.b16 %v231
      %v835 = vunpack.c.l.b16 %v232
      %v836 = vunpack.c.h.b16 %v232
      %v837 = vunpack.c.l.b16 %v233
      %v838 = vunpack.c.h.b16 %v233
      %v839 = vunpack.c.l.b16 %v234
      %v840 = vunpack.c.h.b16 %v234
      %v841 = vunpack.c.l.b16 %v235
      %v842 = vunpack.c.h.b16 %v235
      %v843 = vunpack.c.l.b16 %v236
      %v844 = vunpack.c.h.b16 %v236
      %v845 = vpack.c.b16 %v797, %v781
      %v846 = vpack.c.b16 %v798, %v782
      %v847 = vpack.c.b16 %v799, %v783
      %v848 = vpack.c.b16 %v800, %v784
      %v849 = vpack.c.b16 %v801, %v785
      %v850 = vpack.c.b16 %v802, %v786
      %v851 = vpack.c.b16 %v803, %v787
      %v852 = vpack.c.b16 %v804, %v788
      %v853 = vpack.c.b16 %v805, %v789
      %v854 = vpack.c.b16 %v806, %v790
      %v855 = vpack.c.b16 %v807, %v791
      %v856 = vpack.c.b16 %v808, %v792
      %v857 = vpack.c.b16 %v809, %v793
      %v858 = vpack.c.b16 %v810, %v794
      %v859 = vpack.c.b16 %v811, %v795
      %v860 = vpack.c.b16 %v812, %v796
      %v861 = vpack.c.b16 %v829, %v813
      %v862 = vpack.c.b16 %v830, %v814
      %v863 = vpack.c.b16 %v831, %v815
      %v864 = vpack.c.b16 %v832, %v816
      %v865 = vpack.c.b16 %v833, %v817
      %v866 = vpack.c.b16 %v834, %v818
      %v867 = vpack.c.b16 %v835, %v819
      %v868 = vpack.c.b16 %v836, %v820
      %v869 = vpack.c.b16 %v837, %v821
      %v870 = vpack.c.b16 %v838, %v822
      %v871 = vpack.c.b16 %v839, %v823
      %v872 = vpack.c.b16 %v840, %v824
      %v873 = vpack.c.b16 %v841, %v825
      %v874 = vpack.c.b16 %v842, %v826
      %v875 = vpack.c.b16 %v843, %v827
      %v876 = vpack.c.b16 %v844, %v828
      %v1421 = vunpack.c.l.b16 %v237
      %v1422 = vunpack.c.h.b16 %v237
      %v1423 = vunpack.c.l.b16 %v238
      %v1424 = vunpack.c.h.b16 %v238
      %v1425 = vunpack.c.l.b16 %v239
      %v1426 = vunpack.c.h.b16 %v239
      %v1427 = vunpack.c.l.b16 %v240
      %v1428 = vunpack.c.h.b16 %v240
      %v1429 = vunpack.c.l.b16 %v241
      %v1430 = vunpack.c.h.b16 %v241
      %v1431 = vunpack.c.l.b16 %v242
      %v1432 = vunpack.c.h.b16 %v242
      %v1433 = vunpack.c.l.b16 %v243
      %v1434 = vunpack.c.h.b16 %v243
      %v1435 = vunpack.c.l.b16 %v244
      %v1436 = vunpack.c.h.b16 %v244
      %v1437 = vunpack.c.l.b16 %v245
      %v1438 = vunpack.c.h.b16 %v245
      %v1439 = vunpack.c.l.b16 %v246
      %v1440 = vunpack.c.h.b16 %v246
      %v1441 = vunpack.c.l.b16 %v247
      %v1442 = vunpack.c.h.b16 %v247
      %v1443 = vunpack.c.l.b16 %v248
      %v1444 = vunpack.c.h.b16 %v248
      %v1445 = vunpack.c.l.b16 %v249
      %v1446 = vunpack.c.h.b16 %v249
      %v1447 = vunpack.c.l.b16 %v250
      %v1448 = vunpack.c.h.b16 %v250
      %v1449 = vunpack.c.l.b16 %v251
      %v1450 = vunpack.c.h.b16 %v251
      %v1451 = vunpack.c.l.b16 %v252
      %v1452 = vunpack.c.h.b16 %v252
      %v1453 = vunpack.c.l.b16 %v253
      %v1454 = vunpack.c.h.b16 %v253
      %v1455 = vunpack.c.l.b16 %v254
      %v1456 = vunpack.c.h.b16 %v254
      %v1457 = vunpack.c.l.b16 %v255
      %v1458 = vunpack.c.h.b16 %v255
      %v1459 = vunpack.c.l.b16 %v256
      %v1460 = vunpack.c.h.b16 %v256
      %v1461 = vunpack.c.l.b16 %v257
      %v1462 = vunpack.c.h.b16 %v257
      %v1463 = vunpack.c.l.b16 %v258
      %v1464 = vunpack.c.h.b16 %v258
      %v1465 = vunpack.c.l.b16 %v259
      %v1466 = vunpack.c.h.b16 %v259
      %v1467 = vunpack.c.l.b16 %v260
      %v1468 = vunpack.c.h.b16 %v260
      %v1469 = vunpack.c.l.b16 %v261
      %v1470 = vunpack.c.h.b16 %v261
      %v1471 = vunpack.c.l.b16 %v262
      %v1472 = vunpack.c.h.b16 %v262
      %v1473 = vunpack.c.l.b16 %v263
      %v1474 = vunpack.c.h.b16 %v263
      %v1475 = vunpack.c.l.b16 %v264
      %v1476 = vunpack.c.h.b16 %v264
      %v1477 = vunpack.c.l.b16 %v265
      %v1478 = vunpack.c.h.b16 %v265
      %v1479 = vunpack.c.l.b16 %v266
      %v1480 = vunpack.c.h.b16 %v266
      %v1481 = vunpack.c.l.b16 %v267
      %v1482 = vunpack.c.h.b16 %v267
      %v1483 = vunpack.c.l.b16 %v268
      %v1484 = vunpack.c.h.b16 %v268
      %v1485 = vunpack.c.l.b16 %v269
      %v1486 = vunpack.c.h.b16 %v269
      %v1487 = vunpack.c.l.b16 %v270
      %v1488 = vunpack.c.h.b16 %v270
      %v1489 = vunpack.c.l.b16 %v271
      %v1490 = vunpack.c.h.b16 %v271
      %v1491 = vunpack.c.l.b16 %v272
      %v1492 = vunpack.c.h.b16 %v272
      %v1493 = vunpack.c.l.b16 %v273
      %v1494 = vunpack.c.h.b16 %v273
      %v1495 = vunpack.c.l.b16 %v274
      %v1496 = vunpack.c.h.b16 %v274
      %v1497 = vunpack.c.l.b16 %v275
      %v1498 = vunpack.c.h.b16 %v275
      %v1499 = vunpack.c.l.b16 %v276
      %v1500 = vunpack.c.h.b16 %v276
      %v1501 = vunpack.c.l.b16 %v277
      %v1502 = vunpack.c.h.b16 %v277
      %v1503 = vunpack.c.l.b16 %v278
      %v1504 = vunpack.c.h.b16 %v278
      %v1505 = vunpack.c.l.b16 %v279
      %v1506 = vunpack.c.h.b16 %v279
      %v1507 = vunpack.c.l.b16 %v280
      %v1508 = vunpack.c.h.b16 %v280
      %v1509 = vunpack.c.l.b16 %v281
      %v1510 = vunpack.c.h.b16 %v281
      %v1511 = vunpack.c.l.b16 %v282
      %v1512 = vunpack.c.h.b16 %v282
      %v1513 = vunpack.c.l.b16 %v283
      %v1514 = vunpack.c.h.b16 %v283
      %v1515 = vunpack.c.l.b16 %v284
      %v1516 = vunpack.c.h.b16 %v284
      %v1517 = vunpack.c.l.b16 %v285
      %v1518 = vunpack.c.h.b16 %v285
      %v1519 = vunpack.c.l.b16 %v286
      %v1520 = vunpack.c.h.b16 %v286
      %v1521 = vunpack.c.l.b16 %v287
      %v1522 = vunpack.c.h.b16 %v287
      %v1523 = vunpack.c.l.b16 %v288
      %v1524 = vunpack.c.h.b16 %v288
      %v1525 = vunpack.c.l.b16 %v289
      %v1526 = vunpack.c.h.b16 %v289
      %v1527 = vunpack.c.l.b16 %v290
      %v1528 = vunpack.c.h.b16 %v290
      %v1529 = vunpack.c.l.b16 %v291
      %v1530 = vunpack.c.h.b16 %v291
      %v1531 = vunpack.c.l.b16 %v292
      %v1532 = vunpack.c.h.b16 %v292
      %v1533 = vunpack.c.l.b16 %v293
      %v1534 = vunpack.c.h.b16 %v293
      %v1535 = vunpack.c.l.b16 %v294
      %v1536 = vunpack.c.h.b16 %v294
      %v1537 = vunpack.c.l.b16 %v295
      %v1538 = vunpack.c.h.b16 %v295
      %v1539 = vunpack.c.l.b16 %v296
      %v1540 = vunpack.c.h.b16 %v296
      %v1541 = vunpack.c.l.b16 %v297
      %v1542 = vunpack.c.h.b16 %v297
      %v1543 = vunpack.c.l.b16 %v298
      %v1544 = vunpack.c.h.b16 %v298
      %v1545 = vunpack.c.l.b16 %v299
      %v1546 = vunpack.c.h.b16 %v299
      %v1547 = vunpack.c.l.b16 %v300
      %v1548 = vunpack.c.h.b16 %v300
      %v1549 = vunpack.c.l.b16 %v301
      %v1550 = vunpack.c.h.b16 %v301
      %v1551 = vunpack.c.l.b16 %v302
      %v1552 = vunpack.c.h.b16 %v302
      %v1553 = vunpack.c.l.b16 %v303
      %v1554 = vunpack.c.h.b16 %v303
      %v1555 = vunpack.c.l.b16 %v304
      %v1556 = vunpack.c.h.b16 %v304
      %v1557 = vunpack.c.l.b16 %v305
      %v1558 = vunpack.c.h.b16 %v305
      %v1559 = vunpack.c.l.b16 %v306
      %v1560 = vunpack.c.h.b16 %v306
      %v1561 = vunpack.c.l.b16 %v307
      %v1562 = vunpack.c.h.b16 %v307
      %v1563 = vunpack.c.l.b16 %v308
      %v1564 = vunpack.c.h.b16 %v308
      %v1565 = vunpack.c.l.b16 %v309
      %v1566 = vunpack.c.h.b16 %v309
      %v1567 = vunpack.c.l.b16 %v310
      %v1568 = vunpack.c.h.b16 %v310
      %v1569 = vunpack.c.l.b16 %v311
      %v1570 = vunpack.c.h.b16 %v311
      %v1571 = vunpack.c.l.b16 %v312
      %v1572 = vunpack.c.h.b16 %v312
      %v1573 = vunpack.c.l.b16 %v313
      %v1574 = vunpack.c.h.b16 %v313
      %v1575 = vunpack.c.l.b16 %v314
      %v1576 = vunpack.c.h.b16 %v314
      %v1577 = vunpack.c.l.b16 %v315
      %v1578 = vunpack.c.h.b16 %v315
      %v1579 = vunpack.c.l.b16 %v316
      %v1580 = vunpack.c.h.b16 %v316
      %v1581 = vunpack.c.l.b16 %v317
      %v1582 = vunpack.c.h.b16 %v317
      %v1583 = vunpack.c.l.b16 %v318
      %v1584 = vunpack.c.h.b16 %v318
      %v1585 = vunpack.c.l.b16 %v319
      %v1586 = vunpack.c.h.b16 %v319
      %v1587 = vunpack.c.l.b16 %v320
      %v1588 = vunpack.c.h.b16 %v320
      %v1589 = vunpack.c.l.b16 %v321
      %v1590 = vunpack.c.h.b16 %v321
      %v1591 = vunpack.c.l.b16 %v322
      %v1592 = vunpack.c.h.b16 %v322
      %v1593 = vunpack.c.l.b16 %v323
      %v1594 = vunpack.c.h.b16 %v323
      %v1595 = vunpack.c.l.b16 %v324
      %v1596 = vunpack.c.h.b16 %v324
      %v1597 = vunpack.c.l.b16 %v325
      %v1598 = vunpack.c.h.b16 %v325
      %v1599 = vunpack.c.l.b16 %v326
      %v1600 = vunpack.c.h.b16 %v326
      %v1601 = vunpack.c.l.b16 %v327
      %v1602 = vunpack.c.h.b16 %v327
      %v1603 = vunpack.c.l.b16 %v328
      %v1604 = vunpack.c.h.b16 %v328
      %v1605 = vunpack.c.l.b16 %v329
      %v1606 = vunpack.c.h.b16 %v329
      %v1607 = vunpack.c.l.b16 %v330
      %v1608 = vunpack.c.h.b16 %v330
      %v1609 = vunpack.c.l.b16 %v331
      %v1610 = vunpack.c.h.b16 %v331
      %v1611 = vunpack.c.l.b16 %v332
      %v1612 = vunpack.c.h.b16 %v332
      %v1613 = vunpack.c.l.b16 %v333
      %v1614 = vunpack.c.h.b16 %v333
      %v1615 = vunpack.c.l.b16 %v334
      %v1616 = vunpack.c.h.b16 %v334
      %v1617 = vunpack.c.l.b16 %v335
      %v1618 = vunpack.c.h.b16 %v335
      %v1619 = vunpack.c.l.b16 %v336
      %v1620 = vunpack.c.h.b16 %v336
      %v1621 = vunpack.c.l.b16 %v337
      %v1622 = vunpack.c.h.b16 %v337
      %v1623 = vunpack.c.l.b16 %v338
      %v1624 = vunpack.c.h.b16 %v338
      %v1625 = vunpack.c.l.b16 %v339
      %v1626 = vunpack.c.h.b16 %v339
      %v1627 = vunpack.c.l.b16 %v340
      %v1628 = vunpack.c.h.b16 %v340
      %v1629 = vunpack.c.l.b16 %v341
      %v1630 = vunpack.c.h.b16 %v341
      %v1631 = vunpack.c.l.b16 %v342
      %v1632 = vunpack.c.h.b16 %v342
      %v1633 = vunpack.c.l.b16 %v343
      %v1634 = vunpack.c.h.b16 %v343
      %v1635 = vunpack.c.l.b16 %v344
      %v1636 = vunpack.c.h.b16 %v344
      %v1637 = vunpack.c.l.b16 %v345
      %v1638 = vunpack.c.h.b16 %v345
      %v1639 = vunpack.c.l.b16 %v346
      %v1640 = vunpack.c.h.b16 %v346
      %v1641 = vunpack.c.l.b16 %v347
      %v1642 = vunpack.c.h.b16 %v347
      %v1643 = vunpack.c.l.b16 %v348
      %v1644 = vunpack.c.h.b16 %v348
      %v1645 = vunpack.c.l.b16 %v349
      %v1646 = vunpack.c.h.b16 %v349
      %v1647 = vunpack.c.l.b16 %v350
      %v1648 = vunpack.c.h.b16 %v350
      %v1649 = vunpack.c.l.b16 %v351
      %v1650 = vunpack.c.h.b16 %v351
      %v1651 = vunpack.c.l.b16 %v352
      %v1652 = vunpack.c.h.b16 %v352
      %v1653 = vunpack.c.l.b16 %v353
      %v1654 = vunpack.c.h.b16 %v353
      %v1655 = vunpack.c.l.b16 %v354
      %v1656 = vunpack.c.h.b16 %v354
      %v1657 = vunpack.c.l.b16 %v355
      %v1658 = vunpack.c.h.b16 %v355
      %v1659 = vunpack.c.l.b16 %v356
      %v1660 = vunpack.c.h.b16 %v356
      %v1661 = vunpack.c.l.b16 %v357
      %v1662 = vunpack.c.h.b16 %v357
      %v1663 = vunpack.c.l.b16 %v358
      %v1664 = vunpack.c.h.b16 %v358
      %v1665 = vunpack.c.l.b16 %v359
      %v1666 = vunpack.c.h.b16 %v359
      %v1667 = vunpack.c.l.b16 %v360
      %v1668 = vunpack.c.h.b16 %v360
      %v1669 = vunpack.c.l.b16 %v361
      %v1670 = vunpack.c.h.b16 %v361
      %v1671 = vunpack.c.l.b16 %v362
      %v1672 = vunpack.c.h.b16 %v362
      %v1673 = vunpack.c.l.b16 %v363
      %v1674 = vunpack.c.h.b16 %v363
      %v1675 = vunpack.c.l.b16 %v364
      %v1676 = vunpack.c.h.b16 %v364
      %v1677 = vunpack.c.l.b16 %v365
      %v1678 = vunpack.c.h.b16 %v365
      %v1679 = vunpack.c.l.b16 %v366
      %v1680 = vunpack.c.h.b16 %v366
      %v1681 = vunpack.c.l.b16 %v367
      %v1682 = vunpack.c.h.b16 %v367
      %v1683 = vunpack.c.l.b16 %v368
      %v1684 = vunpack.c.h.b16 %v368
      %v1685 = vunpack.c.l.b16 %v369
      %v1686 = vunpack.c.h.b16 %v369
      %v1687 = vunpack.c.l.b16 %v370
      %v1688 = vunpack.c.h.b16 %v370
      %v1689 = vunpack.c.l.b16 %v371
      %v1690 = vunpack.c.h.b16 %v371
      %v1691 = vunpack.c.l.b16 %v372
      %v1692 = vunpack.c.h.b16 %v372
      %v1693 = vunpack.c.l.b16 %v373
      %v1694 = vunpack.c.h.b16 %v373
      %v1695 = vunpack.c.l.b16 %v374
      %v1696 = vunpack.c.h.b16 %v374
      %v1697 = vunpack.c.l.b16 %v375
      %v1698 = vunpack.c.h.b16 %v375
      %v1699 = vunpack.c.l.b16 %v376
      %v1700 = vunpack.c.h.b16 %v376
      %v1701 = vunpack.c.l.b16 %v377
      %v1702 = vunpack.c.h.b16 %v377
      %v1703 = vunpack.c.l.b16 %v378
      %v1704 = vunpack.c.h.b16 %v378
      %v1705 = vunpack.c.l.b16 %v379
      %v1706 = vunpack.c.h.b16 %v379
      %v1707 = vunpack.c.l.b16 %v380
      %v1708 = vunpack.c.h.b16 %v380
      %v1709 = vunpack.c.l.b16 %v381
      %v1710 = vunpack.c.h.b16 %v381
      %v1711 = vunpack.c.l.b16 %v382
      %v1712 = vunpack.c.h.b16 %v382
      %v1713 = vunpack.c.l.b16 %v383
      %v1714 = vunpack.c.h.b16 %v383
      %v1715 = vunpack.c.l.b16 %v384
      %v1716 = vunpack.c.h.b16 %v384
      %v1717 = vunpack.c.l.b16 %v385
      %v1718 = vunpack.c.h.b16 %v385
      %v1719 = vunpack.c.l.b16 %v386
      %v1720 = vunpack.c.h.b16 %v386
      %v1721 = vunpack.c.l.b16 %v387
      %v1722 = vunpack.c.h.b16 %v387
      %v1723 = vunpack.c.l.b16 %v388
      %v1724 = vunpack.c.h.b16 %v388
      %v1725 = vunpack.c.l.b16 %v389
      %v1726 = vunpack.c.h.b16 %v389
      %v1727 = vunpack.c.l.b16 %v390
      %v1728 = vunpack.c.h.b16 %v390
      %v1729 = vunpack.c.l.b16 %v391
      %v1730 = vunpack.c.h.b16 %v391
      %v1731 = vunpack.c.l.b16 %v392
      %v1732 = vunpack.c.h.b16 %v392
      %v1733 = vunpack.c.l.b16 %v393
      %v1734 = vunpack.c.h.b16 %v393
      %v1735 = vunpack.c.l.b16 %v394
      %v1736 = vunpack.c.h.b16 %v394
      %v1737 = vunpack.c.l.b16 %v395
      %v1738 = vunpack.c.h.b16 %v395
      %v1739 = vunpack.c.l.b16 %v396
      %v1740 = vunpack.c.h.b16 %v396
      %v1741 = vunpack.c.l.b16 %v397
      %v1742 = vunpack.c.h.b16 %v397
      %v1743 = vunpack.c.l.b16 %v398
      %v1744 = vunpack.c.h.b16 %v398
      %v1745 = vunpack.c.l.b16 %v399
      %v1746 = vunpack.c.h.b16 %v399
      %v1747 = vunpack.c.l.b16 %v400
      %v1748 = vunpack.c.h.b16 %v400
      %v1749 = vunpack.c.l.b16 %v401
      %v1750 = vunpack.c.h.b16 %v401
      %v1751 = vunpack.c.l.b16 %v402
      %v1752 = vunpack.c.h.b16 %v402
      %v1753 = vunpack.c.l.b16 %v403
      %v1754 = vunpack.c.h.b16 %v403
      %v1755 = vunpack.c.l.b16 %v404
      %v1756 = vunpack.c.h.b16 %v404
      %v1757 = vunpack.c.l.b16 %v405
      %v1758 = vunpack.c.h.b16 %v405
      %v1759 = vunpack.c.l.b16 %v406
      %v1760 = vunpack.c.h.b16 %v406
      %v1761 = vunpack.c.l.b16 %v407
      %v1762 = vunpack.c.h.b16 %v407
      %v1763 = vunpack.c.l.b16 %v408
      %v1764 = vunpack.c.h.b16 %v408
      %v1765 = vunpack.c.l.b16 %v409
      %v1766 = vunpack.c.h.b16 %v409
      %v1767 = vunpack.c.l.b16 %v410
      %v1768 = vunpack.c.h.b16 %v410
      %v1769 = vunpack.c.l.b16 %v411
      %v1770 = vunpack.c.h.b16 %v411
      %v1771 = vunpack.c.l.b16 %v412
      %v1772 = vunpack.c.h.b16 %v412
      %v1773 = vunpack.c.l.b16 %v413
      %v1774 = vunpack.c.h.b16 %v413
      %v1775 = vunpack.c.l.b16 %v414
      %v1776 = vunpack.c.h.b16 %v414
      %v1777 = vunpack.c.l.b16 %v415
      %v1778 = vunpack.c.h.b16 %v415
      %v1779 = vunpack.c.l.b16 %v416
      %v1780 = vunpack.c.h.b16 %v416
      %v1781 = vunpack.c.l.b16 %v417
      %v1782 = vunpack.c.h.b16 %v417
      %v1783 = vunpack.c.l.b16 %v418
      %v1784 = vunpack.c.h.b16 %v418
      %v1785 = vunpack.c.l.b16 %v419
      %v1786 = vunpack.c.h.b16 %v419
      %v1787 = vunpack.c.l.b16 %v420
      %v1788 = vunpack.c.h.b16 %v420
      %v1789 = vunpack.c.l.b16 %v421
      %v1790 = vunpack.c.h.b16 %v421
      %v1791 = vunpack.c.l.b16 %v422
      %v1792 = vunpack.c.h.b16 %v422
      %v1793 = vunpack.c.l.b16 %v423
      %v1794 = vunpack.c.h.b16 %v423
      %v1795 = vunpack.c.l.b16 %v424
      %v1796 = vunpack.c.h.b16 %v424
      %v1797 = vunpack.c.l.b16 %v425
      %v1798 = vunpack.c.h.b16 %v425
      %v1799 = vunpack.c.l.b16 %v426
      %v1800 = vunpack.c.h.b16 %v426
      %v1801 = vunpack.c.l.b16 %v427
      %v1802 = vunpack.c.h.b16 %v427
      %v1803 = vunpack.c.l.b16 %v428
      %v1804 = vunpack.c.h.b16 %v428
      %v1805 = vunpack.c.l.b16 %v429
      %v1806 = vunpack.c.h.b16 %v429
      %v1807 = vunpack.c.l.b16 %v430
      %v1808 = vunpack.c.h.b16 %v430
      %v1809 = vunpack.c.l.b16 %v431
      %v1810 = vunpack.c.h.b16 %v431
      %v1811 = vunpack.c.l.b16 %v432
      %v1812 = vunpack.c.h.b16 %v432
      %v1813 = vunpack.c.l.b16 %v433
      %v1814 = vunpack.c.h.b16 %v433
      %v1815 = vunpack.c.l.b16 %v434
      %v1816 = vunpack.c.h.b16 %v434
      %v1817 = vunpack.c.l.b16 %v435
      %v1818 = vunpack.c.h.b16 %v435
      %v1819 = vunpack.c.l.b16 %v436
      %v1820 = vunpack.c.h.b16 %v436
      %v1821 = vunpack.c.l.b16 %v437
      %v1822 = vunpack.c.h.b16 %v437
      %v1823 = vunpack.c.l.b16 %v438
      %v1824 = vunpack.c.h.b16 %v438
      %v1825 = vunpack.c.l.b16 %v439
      %v1826 = vunpack.c.h.b16 %v439
      %v1827 = vunpack.c.l.b16 %v440
      %v1828 = vunpack.c.h.b16 %v440
      %v1829 = vunpack.c.l.b16 %v441
      %v1830 = vunpack.c.h.b16 %v441
      %v1831 = vunpack.c.l.b16 %v442
      %v1832 = vunpack.c.h.b16 %v442
      %v1833 = vunpack.c.l.b16 %v443
      %v1834 = vunpack.c.h.b16 %v443
      %v1835 = vunpack.c.l.b16 %v444
      %v1836 = vunpack.c.h.b16 %v444
      %v1837 = vunpack.c.l.b16 %v445
      %v1838 = vunpack.c.h.b16 %v445
      %v1839 = vunpack.c.l.b16 %v446
      %v1840 = vunpack.c.h.b16 %v446
      %v1841 = vunpack.c.l.b16 %v447
      %v1842 = vunpack.c.h.b16 %v447
      %v1843 = vunpack.c.l.b16 %v448
      %v1844 = vunpack.c.h.b16 %v448
      %v1845 = vunpack.c.l.b16 %v449
      %v1846 = vunpack.c.h.b16 %v449
      %v1847 = vunpack.c.l.b16 %v450
      %v1848 = vunpack.c.h.b16 %v450
      %v1849 = vunpack.c.l.b16 %v451
      %v1850 = vunpack.c.h.b16 %v451
      %v1851 = vunpack.c.l.b16 %v452
      %v1852 = vunpack.c.h.b16 %v452
      %v1853 = vunpack.c.l.b16 %v453
      %v1854 = vunpack.c.h.b16 %v453
      %v1855 = vunpack.c.l.b16 %v454
      %v1856 = vunpack.c.h.b16 %v454
      %v1857 = vunpack.c.l.b16 %v455
      %v1858 = vunpack.c.h.b16 %v455
      %v1859 = vunpack.c.l.b16 %v456
      %v1860 = vunpack.c.h.b16 %v456
      %v1861 = vunpack.c.l.b16 %v457
      %v1862 = vunpack.c.h.b16 %v457
      %v1863 = vunpack.c.l.b16 %v458
      %v1864 = vunpack.c.h.b16 %v458
      %v1865 = vunpack.c.l.b16 %v459
      %v1866 = vunpack.c.h.b16 %v459
      %v1867 = vunpack.c.l.b16 %v460
      %v1868 = vunpack.c.h.b16 %v460
      %v1869 = vunpack.c.l.b16 %v461
      %v1870 = vunpack.c.h.b16 %v461
      %v1871 = vunpack.c.l.b16 %v462
      %v1872 = vunpack.c.h.b16 %v462
      %v1873 = vunpack.c.l.b16 %v463
      %v1874 = vunpack.c.h.b16 %v463
      %v1875 = vunpack.c.l.b16 %v464
      %v1876 = vunpack.c.h.b16 %v464
      %v1877 = vunpack.c.l.b16 %v465
      %v1878 = vunpack.c.h.b16 %v465
      %v1879 = vunpack.c.l.b16 %v466
      %v1880 = vunpack.c.h.b16 %v466
      %v1881 = vunpack.c.l.b16 %v467
      %v1882 = vunpack.c.h.b16 %v467
      %v1883 = vunpack.c.l.b16 %v468
      %v1884 = vunpack.c.h.b16 %v468
      %v1885 = vunpack.c.l.b16 %v469
      %v1886 = vunpack.c.h.b16 %v469
      %v1887 = vunpack.c.l.b16 %v470
      %v1888 = vunpack.c.h.b16 %v470
      %v1889 = vunpack.c.l.b16 %v471
      %v1890 = vunpack.c.h.b16 %v471
      %v1891 = vunpack.c.l.b16 %v472
      %v1892 = vunpack.c.h.b16 %v472
      %v1893 = vunpack.c.l.b16 %v473
      %v1894 = vunpack.c.h.b16 %v473
      %v1895 = vunpack.c.l.b16 %v474
      %v1896 = vunpack.c.h.b16 %v474
      %v1897 = vunpack.c.l.b16 %v475
      %v1898 = vunpack.c.h.b16 %v475
      %v1899 = vunpack.c.l.b16 %v476
      %v1900 = vunpack.c.h.b16 %v476
      %v1901 = vunpack.c.l.b16 %v477
      %v1902 = vunpack.c.h.b16 %v477
      %v1903 = vunpack.c.l.b16 %v478
      %v1904 = vunpack.c.h.b16 %v478
      %v1905 = vunpack.c.l.b16 %v479
      %v1906 = vunpack.c.h.b16 %v479
      %v1907 = vunpack.c.l.b16 %v480
      %v1908 = vunpack.c.h.b16 %v480
      %v1909 = vunpack.c.l.b16 %v481
      %v1910 = vunpack.c.h.b16 %v481
      %v1911 = vunpack.c.l.b16 %v482
      %v1912 = vunpack.c.h.b16 %v482
      %v1913 = vunpack.c.l.b16 %v483
      %v1914 = vunpack.c.h.b16 %v483
      %v1915 = vunpack.c.l.b16 %v484
      %v1916 = vunpack.c.h.b16 %v484
      %v1917 = vunpack.c.l.b16 %v485
      %v1918 = vunpack.c.h.b16 %v485
      %v1919 = vunpack.c.l.b16 %v486
      %v1920 = vunpack.c.h.b16 %v486
      %v1921 = vunpack.c.l.b16 %v487
      %v1922 = vunpack.c.h.b16 %v487
      %v1923 = vunpack.c.l.b16 %v488
      %v1924 = vunpack.c.h.b16 %v488
      %v1925 = vunpack.c.l.b16 %v489
      %v1926 = vunpack.c.h.b16 %v489
      %v1927 = vunpack.c.l.b16 %v490
      %v1928 = vunpack.c.h.b16 %v490
      %v1929 = vunpack.c.l.b16 %v491
      %v1930 = vunpack.c.h.b16 %v491
      %v1931 = vunpack.c.l.b16 %v492
      %v1932 = vunpack.c.h.b16 %v492
      %v1933 = vunpack.c.l.b16 %v493
      %v1934 = vunpack.c.h.b16 %v493
      %v1935 = vunpack.c.l.b16 %v494
      %v1936 = vunpack.c.h.b16 %v494
      %v1937 = vunpack.c.l.b16 %v495
      %v1938 = vunpack.c.h.b16 %v495
      %v1939 = vunpack.c.l.b16 %v496
      %v1940 = vunpack.c.h.b16 %v496
      %v1941 = vunpack.c.l.b16 %v497
      %v1942 = vunpack.c.h.b16 %v497
      %v1943 = vunpack.c.l.b16 %v498
      %v1944 = vunpack.c.h.b16 %v498
      %v1945 = vunpack.c.l.b16 %v499
      %v1946 = vunpack.c.h.b16 %v499
      %v1947 = vunpack.c.l.b16 %v500
      %v1948 = vunpack.c.h.b16 %v500
      %v1949 = vunpack.c.l.b16 %v501
      %v1950 = vunpack.c.h.b16 %v501
      %v1951 = vunpack.c.l.b16 %v502
      %v1952 = vunpack.c.h.b16 %v502
      %v1953 = vunpack.c.l.b16 %v503
      %v1954 = vunpack.c.h.b16 %v503
      %v1955 = vunpack.c.l.b16 %v504
      %v1956 = vunpack.c.h.b16 %v504
      %v1957 = vunpack.c.l.b16 %v505
      %v1958 = vunpack.c.h.b16 %v505
      %v1959 = vunpack.c.l.b16 %v506
      %v1960 = vunpack.c.h.b16 %v506
      %v1961 = vunpack.c.l.b16 %v507
      %v1962 = vunpack.c.h.b16 %v507
      %v1963 = vunpack.c.l.b16 %v508
      %v1964 = vunpack.c.h.b16 %v508
      %v1965 = vunpack.c.l.b16 %v509
      %v1966 = vunpack.c.h.b16 %v509
      %v1967 = vunpack.c.l.b16 %v510
      %v1968 = vunpack.c.h.b16 %v510
      %v1969 = vunpack.c.l.b16 %v511
      %v1970 = vunpack.c.h.b16 %v511
      %v1971 = vunpack.c.l.b16 %v512
      %v1972 = vunpack.c.h.b16 %v512
      %v1973 = vunpack.c.l.b16 %v513
      %v1974 = vunpack.c.h.b16 %v513
      %v1975 = vunpack.c.l.b16 %v514
      %v1976 = vunpack.c.h.b16 %v514
      %v1977 = vunpack.c.l.b16 %v515
      %v1978 = vunpack.c.h.b16 %v515
      %v1979 = vunpack.c.l.b16 %v516
      %v1980 = vunpack.c.h.b16 %v516
      %v1981 = vunpack.c.l.b16 %v517
      %v1982 = vunpack.c.h.b16 %v517
      %v1983 = vunpack.c.l.b16 %v518
      %v1984 = vunpack.c.h.b16 %v518
      %v1985 = vunpack.c.l.b16 %v519
      %v1986 = vunpack.c.h.b16 %v519
      %v1987 = vunpack.c.l.b16 %v520
      %v1988 = vunpack.c.h.b16 %v520
      %v1989 = vunpack.c.l.b16 %v521
      %v1990 = vunpack.c.h.b16 %v521
      %v1991 = vunpack.c.l.b16 %v522
      %v1992 = vunpack.c.h.b16 %v522
      %v1993 = vunpack.c.l.b16 %v523
      %v1994 = vunpack.c.h.b16 %v523
      %v1995 = vunpack.c.l.b16 %v524
      %v1996 = vunpack.c.h.b16 %v524
      %v1997 = vunpack.c.l.b16 %v525
      %v1998 = vunpack.c.h.b16 %v525
      %v1999 = vunpack.c.l.b16 %v526
      %v2000 = vunpack.c.h.b16 %v526
      %v2001 = vunpack.c.l.b16 %v527
      %v2002 = vunpack.c.h.b16 %v527
      %v2003 = vunpack.c.l.b16 %v528
      %v2004 = vunpack.c.h.b16 %v528
      %v2005 = vunpack.c.l.b16 %v529
      %v2006 = vunpack.c.h.b16 %v529
      %v2007 = vunpack.c.l.b16 %v530
      %v2008 = vunpack.c.h.b16 %v530
      %v2009 = vunpack.c.l.b16 %v531
      %v2010 = vunpack.c.h.b16 %v531
      %v2011 = vunpack.c.l.b16 %v532
      %v2012 = vunpack.c.h.b16 %v532
      %v2013 = vunpack.c.l.b16 %v533
      %v2014 = vunpack.c.h.b16 %v533
      %v2015 = vunpack.c.l.b16 %v534
      %v2016 = vunpack.c.h.b16 %v534
      %v2017 = vunpack.c.l.b16 %v535
      %v2018 = vunpack.c.h.b16 %v535
      %v2019 = vunpack.c.l.b16 %v536
      %v2020 = vunpack.c.h.b16 %v536
      %v2021 = vunpack.c.l.b16 %v537
      %v2022 = vunpack.c.h.b16 %v537
      %v2023 = vunpack.c.l.b16 %v538
      %v2024 = vunpack.c.h.b16 %v538
      %v2025 = vunpack.c.l.b16 %v539
      %v2026 = vunpack.c.h.b16 %v539
      %v2027 = vunpack.c.l.b16 %v540
      %v2028 = vunpack.c.h.b16 %v540
      %v2029 = vunpack.c.l.b16 %v541
      %v2030 = vunpack.c.h.b16 %v541
      %v2031 = vunpack.c.l.b16 %v542
      %v2032 = vunpack.c.h.b16 %v542
      %v2033 = vunpack.c.l.b16 %v543
      %v2034 = vunpack.c.h.b16 %v543
      %v2035 = vunpack.c.l.b16 %v544
      %v2036 = vunpack.c.h.b16 %v544
      %v2037 = vunpack.c.l.b16 %v545
      %v2038 = vunpack.c.h.b16 %v545
      %v2039 = vunpack.c.l.b16 %v546
      %v2040 = vunpack.c.h.b16 %v546
      %v2041 = vunpack.c.l.b16 %v547
      %v2042 = vunpack.c.h.b16 %v547
      %v2043 = vunpack.c.l.b16 %v548
      %v2044 = vunpack.c.h.b16 %v548
      %v2045 = vunpack.c.l.b16 %v549
      %v2046 = vunpack.c.h.b16 %v549
      %v2047 = vunpack.c.l.b16 %v550
      %v2048 = vunpack.c.h.b16 %v550
      %v2049 = vunpack.c.l.b16 %v551
      %v2050 = vunpack.c.h.b16 %v551
      %v2051 = vunpack.c.l.b16 %v552
      %v2052 = vunpack.c.h.b16 %v552
      %v2053 = vunpack.c.l.b16 %v553
      %v2054 = vunpack.c.h.b16 %v553
      %v2055 = vunpack.c.l.b16 %v554
      %v2056 = vunpack.c.h.b16 %v554
      %v2057 = vunpack.c.l.b16 %v555
      %v2058 = vunpack.c.h.b16 %v555
      %v2059 = vunpack.c.l.b16 %v556
      %v2060 = vunpack.c.h.b16 %v556
      %v2061 = vunpack.c.l.b16 %v557
      %v2062 = vunpack.c.h.b16 %v557
      %v2063 = vunpack.c.l.b16 %v558
      %v2064 = vunpack.c.h.b16 %v558
      %v2065 = vunpack.c.l.b16 %v559
      %v2066 = vunpack.c.h.b16 %v559
      %v2067 = vunpack.c.l.b16 %v560
      %v2068 = vunpack.c.h.b16 %v560
      %v2069 = vunpack.c.l.b16 %v561
      %v2070 = vunpack.c.h.b16 %v561
      %v2071 = vunpack.c.l.b16 %v562
      %v2072 = vunpack.c.h.b16 %v562
      %v2073 = vunpack.c.l.b16 %v563
      %v2074 = vunpack.c.h.b16 %v563
      %v2075 = vunpack.c.l.b16 %v564
      %v2076 = vunpack.c.h.b16 %v564
      %v2077 = vunpack.c.l.b16 %v565
      %v2078 = vunpack.c.h.b16 %v565
      %v2079 = vunpack.c.l.b16 %v566
      %v2080 = vunpack.c.h.b16 %v566
      %v2081 = vunpack.c.l.b16 %v567
      %v2082 = vunpack.c.h.b16 %v567
      %v2083 = vunpack.c.l.b16 %v568
      %v2084 = vunpack.c.h.b16 %v568
      %v2085 = vunpack.c.l.b16 %v569
      %v2086 = vunpack.c.h.b16 %v569
      %v2087 = vunpack.c.l.b16 %v570
      %v2088 = vunpack.c.h.b16 %v570
      %v2089 = vunpack.c.l.b16 %v571
      %v2090 = vunpack.c.h.b16 %v571
      %v2091 = vunpack.c.l.b16 %v572
      %v2092 = vunpack.c.h.b16 %v572
      %v2093 = vunpack.c.l.b16 %v573
      %v2094 = vunpack.c.h.b16 %v573
      %v2095 = vunpack.c.l.b16 %v574
      %v2096 = vunpack.c.h.b16 %v574
      %v2097 = vunpack.c.l.b16 %v575
      %v2098 = vunpack.c.h.b16 %v575
      %v2099 = vunpack.c.l.b16 %v576
      %v2100 = vunpack.c.h.b16 %v576
      %v2101 = vunpack.c.l.b16 %v577
      %v2102 = vunpack.c.h.b16 %v577
      %v2103 = vunpack.c.l.b16 %v578
      %v2104 = vunpack.c.h.b16 %v578
      %v2105 = vunpack.c.l.b16 %v579
      %v2106 = vunpack.c.h.b16 %v579
      %v2107 = vunpack.c.l.b16 %v580
      %v2108 = vunpack.c.h.b16 %v580
      %v2109 = vunpack.c.l.b16 %v581
      %v2110 = vunpack.c.h.b16 %v581
      %v2111 = vunpack.c.l.b16 %v582
      %v2112 = vunpack.c.h.b16 %v582
      %v2113 = vunpack.c.l.b16 %v583
      %v2114 = vunpack.c.h.b16 %v583
      %v2115 = vunpack.c.l.b16 %v584
      %v2116 = vunpack.c.h.b16 %v584
      %v2117 = vunpack.c.l.b16 %v585
      %v2118 = vunpack.c.h.b16 %v585
      %v2119 = vunpack.c.l.b16 %v586
      %v2120 = vunpack.c.h.b16 %v586
      %v2121 = vunpack.c.l.b16 %v587
      %v2122 = vunpack.c.h.b16 %v587
      %v2123 = vunpack.c.l.b16 %v588
      %v2124 = vunpack.c.h.b16 %v588
      %v2125 = vunpack.c.l.b16 %v589
      %v2126 = vunpack.c.h.b16 %v589
      %v2127 = vunpack.c.l.b16 %v590
      %v2128 = vunpack.c.h.b16 %v590
      %v2129 = vunpack.c.l.b16 %v591
      %v2130 = vunpack.c.h.b16 %v591
      %v2131 = vunpack.c.l.b16 %v592
      %v2132 = vunpack.c.h.b16 %v592
      %v2133 = vunpack.c.l.b16 %v593
      %v2134 = vunpack.c.h.b16 %v593
      %v2135 = vunpack.c.l.b16 %v594
      %v2136 = vunpack.c.h.b16 %v594
      %v2137 = vunpack.c.l.b16 %v595
      %v2138 = vunpack.c.h.b16 %v595
      %v2139 = vunpack.c.l.b16 %v596
      %v2140 = vunpack.c.h.b16 %v596
      %v2141 = vunpack.c.l.b16 %v597
      %v2142 = vunpack.c.h.b16 %v597
      %v2143 = vunpack.c.l.b16 %v598
      %v2144 = vunpack.c.h.b16 %v598
      %v2145 = vunpack.c.l.b16 %v599
      %v2146 = vunpack.c.h.b16 %v599
      %v2147 = vunpack.c.l.b16 %v600
      %v2148 = vunpack.c.h.b16 %v600
      %v2149 = vunpack.c.l.b16 %v601
      %v2150 = vunpack.c.h.b16 %v601
      %v2151 = vunpack.c.l.b16 %v602
      %v2152 = vunpack.c.h.b16 %v602
      %v2153 = vunpack.c.l.b16 %v603
      %v2154 = vunpack.c.h.b16 %v603
      %v2155 = vunpack.c.l.b16 %v604
      %v2156 = vunpack.c.h.b16 %v604
      %v2157 = vunpack.c.l.b16 %v605
      %v2158 = vunpack.c.h.b16 %v605
      %v2159 = vunpack.c.l.b16 %v606
      %v2160 = vunpack.c.h.b16 %v606
      %v2161 = vunpack.c.l.b16 %v607
      %v2162 = vunpack.c.h.b16 %v607
      %v2163 = vunpack.c.l.b16 %v608
      %v2164 = vunpack.c.h.b16 %v608
      %v2165 = vunpack.c.l.b16 %v609
      %v2166 = vunpack.c.h.b16 %v609
      %v2167 = vunpack.c.l.b16 %v610
      %v2168 = vunpack.c.h.b16 %v610
      %v2169 = vunpack.c.l.b16 %v611
      %v2170 = vunpack.c.h.b16 %v611
      %v2171 = vunpack.c.l.b16 %v612
      %v2172 = vunpack.c.h.b16 %v612
      %v2173 = vunpack.c.l.b16 %v613
      %v2174 = vunpack.c.h.b16 %v613
      %v2175 = vunpack.c.l.b16 %v614
      %v2176 = vunpack.c.h.b16 %v614
      %v2177 = vunpack.c.l.b16 %v615
      %v2178 = vunpack.c.h.b16 %v615
      %v2179 = vunpack.c.l.b16 %v616
      %v2180 = vunpack.c.h.b16 %v616
      %v2181 = vunpack.c.l.b16 %v617
      %v2182 = vunpack.c.h.b16 %v617
      %v2183 = vunpack.c.l.b16 %v618
      %v2184 = vunpack.c.h.b16 %v618
      %v2185 = vunpack.c.l.b16 %v619
      %v2186 = vunpack.c.h.b16 %v619
      %v2187 = vunpack.c.l.b16 %v620
      %v2188 = vunpack.c.h.b16 %v620
      %v2189 = vunpack.c.l.b16 %v621
      %v2190 = vunpack.c.h.b16 %v621
      %v2191 = vunpack.c.l.b16 %v622
      %v2192 = vunpack.c.h.b16 %v622
      %v2193 = vunpack.c.l.b16 %v623
      %v2194 = vunpack.c.h.b16 %v623
      %v2195 = vunpack.c.l.b16 %v624
      %v2196 = vunpack.c.h.b16 %v624
      %v2197 = vunpack.c.l.b16 %v625
      %v2198 = vunpack.c.h.b16 %v625
      %v2199 = vunpack.c.l.b16 %v626
      %v2200 = vunpack.c.h.b16 %v626
      %v2201 = vunpack.c.l.b16 %v627
      %v2202 = vunpack.c.h.b16 %v627
      %v2203 = vunpack.c.l.b16 %v628
      %v2204 = vunpack.c.h.b16 %v628
      %v2205 = vunpack.c.l.b16 %v629
      %v2206 = vunpack.c.h.b16 %v629
      %v2207 = vunpack.c.l.b16 %v630
      %v2208 = vunpack.c.h.b16 %v630
      %v2209 = vunpack.c.l.b16 %v631
      %v2210 = vunpack.c.h.b16 %v631
      %v2211 = vunpack.c.l.b16 %v632
      %v2212 = vunpack.c.h.b16 %v632
      %v2213 = vunpack.c.l.b16 %v633
      %v2214 = vunpack.c.h.b16 %v633
      %v2215 = vunpack.c.l.b16 %v634
      %v2216 = vunpack.c.h.b16 %v634
      %v2217 = vunpack.c.l.b16 %v635
      %v2218 = vunpack.c.h.b16 %v635
      %v2219 = vunpack.c.l.b16 %v636
      %v2220 = vunpack.c.h.b16 %v636
      %v2221 = vunpack.c.l.b16 %v637
      %v2222 = vunpack.c.h.b16 %v637
      %v2223 = vunpack.c.l.b16 %v638
      %v2224 = vunpack.c.h.b16 %v638
      %v2225 = vunpack.c.l.b16 %v639
      %v2226 = vunpack.c.h.b16 %v639
      %v2227 = vunpack.c.l.b16 %v640
      %v2228 = vunpack.c.h.b16 %v640
      %v2229 = vunpack.c.l.b16 %v641
      %v2230 = vunpack.c.h.b16 %v641
      %v2231 = vunpack.c.l.b16 %v642
      %v2232 = vunpack.c.h.b16 %v642
      %v2233 = vunpack.c.l.b16 %v643
      %v2234 = vunpack.c.h.b16 %v643
      %v2235 = vunpack.c.l.b16 %v644
      %v2236 = vunpack.c.h.b16 %v644
      %v2237 = vunpack.c.l.b16 %v645
      %v2238 = vunpack.c.h.b16 %v645
      %v2239 = vunpack.c.l.b16 %v646
      %v2240 = vunpack.c.h.b16 %v646
      %v2241 = vunpack.c.l.b16 %v647
      %v2242 = vunpack.c.h.b16 %v647
      %v2243 = vunpack.c.l.b16 %v648
      %v2244 = vunpack.c.h.b16 %v648
      %v2245 = vunpack.c.l.b16 %v649
      %v2246 = vunpack.c.h.b16 %v649
      %v2247 = vunpack.c.l.b16 %v650
      %v2248 = vunpack.c.h.b16 %v650
      %v2249 = vunpack.c.l.b16 %v651
      %v2250 = vunpack.c.h.b16 %v651
      %v2251 = vunpack.c.l.b16 %v652
      %v2252 = vunpack.c.h.b16 %v652
      %v2253 = vunpack.c.l.b16 %v653
      %v2254 = vunpack.c.h.b16 %v653
      %v2255 = vunpack.c.l.b16 %v654
      %v2256 = vunpack.c.h.b16 %v654
      %v2257 = vunpack.c.l.b16 %v655
      %v2258 = vunpack.c.h.b16 %v655
      %v2259 = vunpack.c.l.b16 %v656
      %v2260 = vunpack.c.h.b16 %v656
      %v2261 = vunpack.c.l.b16 %v657
      %v2262 = vunpack.c.h.b16 %v657
      %v2263 = vunpack.c.l.b16 %v658
      %v2264 = vunpack.c.h.b16 %v658
      %v2265 = vunpack.c.l.b16 %v659
      %v2266 = vunpack.c.h.b16 %v659
      %v2267 = vunpack.c.l.b16 %v660
      %v2268 = vunpack.c.h.b16 %v660
      %v2269 = vunpack.c.l.b16 %v661
      %v2270 = vunpack.c.h.b16 %v661
      %v2271 = vunpack.c.l.b16 %v662
      %v2272 = vunpack.c.h.b16 %v662
      %v2273 = vunpack.c.l.b16 %v663
      %v2274 = vunpack.c.h.b16 %v663
      %v2275 = vunpack.c.l.b16 %v664
      %v2276 = vunpack.c.h.b16 %v664
      %v2277 = vunpack.c.l.b16 %v665
      %v2278 = vunpack.c.h.b16 %v665
      %v2279 = vunpack.c.l.b16 %v666
      %v2280 = vunpack.c.h.b16 %v666
      %v2281 = vunpack.c.l.b16 %v667
      %v2282 = vunpack.c.h.b16 %v667
      %v2283 = vunpack.c.l.b16 %v668
      %v2284 = vunpack.c.h.b16 %v668
      %v2285 = vunpack.c.l.b16 %v669
      %v2286 = vunpack.c.h.b16 %v669
      %v2287 = vunpack.c.l.b16 %v670
      %v2288 = vunpack.c.h.b16 %v670
      %v2289 = vunpack.c.l.b16 %v671
      %v2290 = vunpack.c.h.b16 %v671
      %v2291 = vunpack.c.l.b16 %v672
      %v2292 = vunpack.c.h.b16 %v672
      %v2293 = vunpack.c.l.b16 %v673
      %v2294 = vunpack.c.h.b16 %v673
      %v2295 = vunpack.c.l.b16 %v674
      %v2296 = vunpack.c.h.b16 %v674
      %v2297 = vunpack.c.l.b16 %v675
      %v2298 = vunpack.c.h.b16 %v675
      %v2299 = vunpack.c.l.b16 %v676
      %v2300 = vunpack.c.h.b16 %v676
      %v2301 = vunpack.c.l.b16 %v677
      %v2302 = vunpack.c.h.b16 %v677
      %v2303 = vunpack.c.l.b16 %v678
      %v2304 = vunpack.c.h.b16 %v678
      %v2305 = vunpack.c.l.b16 %v679
      %v2306 = vunpack.c.h.b16 %v679
      %v2307 = vunpack.c.l.b16 %v680
      %v2308 = vunpack.c.h.b16 %v680
      %v2309 = vunpack.c.l.b16 %v681
      %v2310 = vunpack.c.h.b16 %v681
      %v2311 = vunpack.c.l.b16 %v682
      %v2312 = vunpack.c.h.b16 %v682
      %v2313 = vunpack.c.l.b16 %v683
      %v2314 = vunpack.c.h.b16 %v683
      %v2315 = vunpack.c.l.b16 %v684
      %v2316 = vunpack.c.h.b16 %v684
      %v2317 = vunpack.c.l.b16 %v685
      %v2318 = vunpack.c.h.b16 %v685
      %v2319 = vunpack.c.l.b16 %v686
      %v2320 = vunpack.c.h.b16 %v686
      %v2321 = vunpack.c.l.b16 %v687
      %v2322 = vunpack.c.h.b16 %v687
      %v2323 = vunpack.c.l.b16 %v688
      %v2324 = vunpack.c.h.b16 %v688
      %v2325 = vunpack.c.l.b16 %v689
      %v2326 = vunpack.c.h.b16 %v689
      %v2327 = vunpack.c.l.b16 %v690
      %v2328 = vunpack.c.h.b16 %v690
      %v2329 = vunpack.c.l.b16 %v691
      %v2330 = vunpack.c.h.b16 %v691
      %v2331 = vunpack.c.l.b16 %v692
      %v2332 = vunpack.c.h.b16 %v692
      %v2333 = vunpack.c.l.b16 %v693
      %v2334 = vunpack.c.h.b16 %v693
      %v2335 = vunpack.c.l.b16 %v694
      %v2336 = vunpack.c.h.b16 %v694
      %v2337 = vunpack.c.l.b16 %v695
      %v2338 = vunpack.c.h.b16 %v695
      %v2339 = vunpack.c.l.b16 %v696
      %v2340 = vunpack.c.h.b16 %v696
      %v2341 = vunpack.c.l.b16 %v697
      %v2342 = vunpack.c.h.b16 %v697
      %v2343 = vunpack.c.l.b16 %v698
      %v2344 = vunpack.c.h.b16 %v698
      %v2345 = vunpack.c.l.b16 %v699
      %v2346 = vunpack.c.h.b16 %v699
      %v2347 = vunpack.c.l.b16 %v700
      %v2348 = vunpack.c.h.b16 %v700
      %v2349 = vunpack.c.l.b16 %v701
      %v2350 = vunpack.c.h.b16 %v701
      %v2351 = vunpack.c.l.b16 %v702
      %v2352 = vunpack.c.h.b16 %v702
      %v2353 = vunpack.c.l.b16 %v703
      %v2354 = vunpack.c.h.b16 %v703
      %v2355 = vunpack.c.l.b16 %v704
      %v2356 = vunpack.c.h.b16 %v704
      %v2357 = vunpack.c.l.b16 %v705
      %v2358 = vunpack.c.h.b16 %v705
      %v2359 = vunpack.c.l.b16 %v706
      %v2360 = vunpack.c.h.b16 %v706
      %v2361 = vunpack.c.l.b16 %v707
      %v2362 = vunpack.c.h.b16 %v707
      %v2363 = vunpack.c.l.b16 %v708
      %v2364 = vunpack.c.h.b16 %v708
      %v2365 = vunpack.c.l.b16 %v709
      %v2366 = vunpack.c.h.b16 %v709
      %v2367 = vunpack.c.l.b16 %v710
      %v2368 = vunpack.c.h.b16 %v710
      %v2369 = vunpack.c.l.b16 %v711
      %v2370 = vunpack.c.h.b16 %v711
      %v2371 = vunpack.c.l.b16 %v712
      %v2372 = vunpack.c.h.b16 %v712
      %v2373 = vunpack.c.l.b16 %v713
      %v2374 = vunpack.c.h.b16 %v713
      %v2375 = vunpack.c.l.b16 %v714
      %v2376 = vunpack.c.h.b16 %v714
      %v2377 = vunpack.c.l.b16 %v715
      %v2378 = vunpack.c.h.b16 %v715
      %v2379 = vunpack.c.l.b16 %v716
      %v2380 = vunpack.c.h.b16 %v716
      %v2381 = vunpack.c.l.b16 %v717
      %v2382 = vunpack.c.h.b16 %v717
      %v2383 = vunpack.c.l.b16 %v718
      %v2384 = vunpack.c.h.b16 %v718
      %v2385 = vunpack.c.l.b16 %v719
      %v2386 = vunpack.c.h.b16 %v719
      %v2387 = vunpack.c.l.b16 %v720
      %v2388 = vunpack.c.h.b16 %v720
      %v2389 = vunpack.c.l.b16 %v721
      %v2390 = vunpack.c.h.b16 %v721
      %v2391 = vunpack.c.l.b16 %v722
      %v2392 = vunpack.c.h.b16 %v722
      %v2393 = vunpack.c.l.b16 %v723
      %v2394 = vunpack.c.h.b16 %v723
      %v2395 = vunpack.c.l.b16 %v724
      %v2396 = vunpack.c.h.b16 %v724
      %v2397 = vunpack.c.l.b16 %v725
      %v2398 = vunpack.c.h.b16 %v725
      %v2399 = vunpack.c.l.b16 %v726
      %v2400 = vunpack.c.h.b16 %v726
      %v2401 = vunpack.c.l.b16 %v727
      %v2402 = vunpack.c.h.b16 %v727
      %v2403 = vunpack.c.l.b16 %v728
      %v2404 = vunpack.c.h.b16 %v728
      %v2405 = vunpack.c.l.b16 %v729
      %v2406 = vunpack.c.h.b16 %v729
      %v2407 = vunpack.c.l.b16 %v730
      %v2408 = vunpack.c.h.b16 %v730
      %v2409 = vunpack.c.l.b16 %v731
      %v2410 = vunpack.c.h.b16 %v731
      %v2411 = vunpack.c.l.b16 %v732
      %v2412 = vunpack.c.h.b16 %v732
      %v2413 = vunpack.c.l.b16 %v733
      %v2414 = vunpack.c.h.b16 %v733
      %v2415 = vunpack.c.l.b16 %v734
      %v2416 = vunpack.c.h.b16 %v734
      %v2417 = vunpack.c.l.b16 %v735
      %v2418 = vunpack.c.h.b16 %v735
      %v2419 = vunpack.c.l.b16 %v736
      %v2420 = vunpack.c.h.b16 %v736
      %v2421 = vunpack.c.l.b16 %v737
      %v2422 = vunpack.c.h.b16 %v737
      %v2423 = vunpack.c.l.b16 %v738
      %v2424 = vunpack.c.h.b16 %v738
      %v2425 = vunpack.c.l.b16 %v739
      %v2426 = vunpack.c.h.b16 %v739
      %v2427 = vunpack.c.l.b16 %v740
      %v2428 = vunpack.c.h.b16 %v740
      %v2429 = vunpack.c.l.b16 %v741
      %v2430 = vunpack.c.h.b16 %v741
      %v2431 = vunpack.c.l.b16 %v742
      %v2432 = vunpack.c.h.b16 %v742
      %v2433 = vunpack.c.l.b16 %v743
      %v2434 = vunpack.c.h.b16 %v743
      %v2435 = vunpack.c.l.b16 %v744
      %v2436 = vunpack.c.h.b16 %v744
      %v2437 = vunpack.c.l.b16 %v745
      %v2438 = vunpack.c.h.b16 %v745
      %v2439 = vunpack.c.l.b16 %v746
      %v2440 = vunpack.c.h.b16 %v746
      %v2441 = vunpack.c.l.b16 %v747
      %v2442 = vunpack.c.h.b16 %v747
      %v2443 = vunpack.c.l.b16 %v748
      %v2444 = vunpack.c.h.b16 %v748
      %v2445 = vpack.c.b16 %v1425, %v1421
      %v2446 = vpack.c.b16 %v1426, %v1422
      %v2447 = vpack.c.b16 %v1427, %v1423
      %v2448 = vpack.c.b16 %v1428, %v1424
      %v2449 = vpack.c.b16 %v1433, %v1429
      %v2450 = vpack.c.b16 %v1434, %v1430
      %v2451 = vpack.c.b16 %v1435, %v1431
      %v2452 = vpack.c.b16 %v1436, %v1432
      %v2453 = vpack.c.b16 %v1441, %v1437
      %v2454 = vpack.c.b16 %v1442, %v1438
      %v2455 = vpack.c.b16 %v1443, %v1439
      %v2456 = vpack.c.b16 %v1444, %v1440
      %v2457 = vpack.c.b16 %v1449, %v1445
      %v2458 = vpack.c.b16 %v1450, %v1446
      %v2459 = vpack.c.b16 %v1451, %v1447
      %v2460 = vpack.c.b16 %v1452, %v1448
      %v2461 = vpack.c.b16 %v1457, %v1453
      %v2462 = vpack.c.b16 %v1458, %v1454
      %v2463 = vpack.c.b16 %v1459, %v1455
      %v2464 = vpack.c.b16 %v1460, %v1456
      %v2465 = vpack.c.b16 %v1465, %v1461
      %v2466 = vpack.c.b16 %v1466, %v1462
      %v2467 = vpack.c.b16 %v1467, %v1463
      %v2468 = vpack.c.b16 %v1468, %v1464
      %v2469 = vpack.c.b16 %v1473, %v1469
      %v2470 = vpack.c.b16 %v1474, %v1470
      %v2471 = vpack.c.b16 %v1475, %v1471
      %v2472 = vpack.c.b16 %v1476, %v1472
      %v2473 = vpack.c.b16 %v1481, %v1477
      %v2474 = vpack.c.b16 %v1482, %v1478
      %v2475 = vpack.c.b16 %v1483, %v1479
      %v2476 = vpack.c.b16 %v1484, %v1480
      %v2477 = vpack.c.b16 %v1489, %v1485
      %v2478 = vpack.c.b16 %v1490, %v1486
      %v2479 = vpack.c.b16 %v1491, %v1487
      %v2480 = vpack.c.b16 %v1492, %v1488
      %v2481 = vpack.c.b16 %v1497, %v1493
      %v2482 = vpack.c.b16 %v1498, %v1494
      %v2483 = vpack.c.b16 %v1499, %v1495
      %v2484 = vpack.c.b16 %v1500, %v1496
      %v2485 = vpack.c.b16 %v1505, %v1501
      %v2486 = vpack.c.b16 %v1506, %v1502
      %v2487 = vpack.c.b16 %v1507, %v1503
      %v2488 = vpack.c.b16 %v1508, %v1504
      %v2489 = vpack.c.b16 %v1513, %v1509
      %v2490 = vpack.c.b16 %v1514, %v1510
      %v2491 = vpack.c.b16 %v1515, %v1511
      %v2492 = vpack.c.b16 %v1516, %v1512
      %v2493 = vpack.c.b16 %v1521, %v1517
      %v2494 = vpack.c.b16 %v1522, %v1518
      %v2495 = vpack.c.b16 %v1523, %v1519
      %v2496 = vpack.c.b16 %v1524, %v1520
      %v2497 = vpack.c.b16 %v1529, %v1525
      %v2498 = vpack.c.b16 %v1530, %v1526
      %v2499 = vpack.c.b16 %v1531, %v1527
      %v2500 = vpack.c.b16 %v1532, %v1528
      %v2501 = vpack.c.b16 %v1537, %v1533
      %v2502 = vpack.c.b16 %v1538, %v1534
      %v2503 = vpack.c.b16 %v1539, %v1535
      %v2504 = vpack.c.b16 %v1540, %v1536
      %v2505 = vpack.c.b16 %v1545, %v1541
      %v2506 = vpack.c.b16 %v1546, %v1542
      %v2507 = vpack.c.b16 %v1547, %v1543
      %v2508 = vpack.c.b16 %v1548, %v1544
      %v2509 = vpack.c.b16 %v1553, %v1549
      %v2510 = vpack.c.b16 %v1554, %v1550
      %v2511 = vpack.c.b16 %v1555, %v1551
      %v2512 = vpack.c.b16 %v1556, %v1552
      %v2513 = vpack.c.b16 %v1561, %v1557
      %v2514 = vpack.c.b16 %v1562, %v1558
      %v2515 = vpack.c.b16 %v1563, %v1559
      %v2516 = vpack.c.b16 %v1564, %v1560
      %v2517 = vpack.c.b16 %v1569, %v1565
      %v2518 = vpack.c.b16 %v1570, %v1566
      %v2519 = vpack.c.b16 %v1571, %v1567
      %v2520 = vpack.c.b16 %v1572, %v1568
      %v2521 = vpack.c.b16 %v1577, %v1573
      %v2522 = vpack.c.b16 %v1578, %v1574
      %v2523 = vpack.c.b16 %v1579, %v1575
      %v2524 = vpack.c.b16 %v1580, %v1576
      %v2525 = vpack.c.b16 %v1585, %v1581
      %v2526 = vpack.c.b16 %v1586, %v1582
      %v2527 = vpack.c.b16 %v1587, %v1583
      %v2528 = vpack.c.b16 %v1588, %v1584
      %v2529 = vpack.c.b16 %v1593, %v1589
      %v2530 = vpack.c.b16 %v1594, %v1590
      %v2531 = vpack.c.b16 %v1595, %v1591
      %v2532 = vpack.c.b16 %v1596, %v1592
      %v2533 = vpack.c.b16 %v1601, %v1597
      %v2534 = vpack.c.b16 %v1602, %v1598
      %v2535 = vpack.c.b16 %v1603, %v1599
      %v2536 = vpack.c.b16 %v1604, %v1600
      %v2537 = vpack.c.b16 %v1609, %v1605
      %v2538 = vpack.c.b16 %v1610, %v1606
      %v2539 = vpack.c.b16 %v1611, %v1607
      %v2540 = vpack.c.b16 %v1612, %v1608
      %v2541 = vpack.c.b16 %v1617, %v1613
      %v2542 = vpack.c.b16 %v1618, %v1614
      %v2543 = vpack.c.b16 %v1619, %v1615
      %v2544 = vpack.c.b16 %v1620, %v1616
      %v2545 = vpack.c.b16 %v1625, %v1621
      %v2546 = vpack.c.b16 %v1626, %v1622
      %v2547 = vpack.c.b16 %v1627, %v1623
      %v2548 = vpack.c.b16 %v1628, %v1624
      %v2549 = vpack.c.b16 %v1633, %v1629
      %v2550 = vpack.c.b16 %v1634, %v1630
      %v2551 = vpack.c.b16 %v1635, %v1631
      %v2552 = vpack.c.b16 %v1636, %v1632
      %v2553 = vpack.c.b16 %v1641, %v1637
      %v2554 = vpack.c.b16 %v1642, %v1638
      %v2555 = vpack.c.b16 %v1643, %v1639
      %v2556 = vpack.c.b16 %v1644, %v1640
      %v2557 = vpack.c.b16 %v1649, %v1645
      %v2558 = vpack.c.b16 %v1650, %v1646
      %v2559 = vpack.c.b16 %v1651, %v1647
      %v2560 = vpack.c.b16 %v1652, %v1648
      %v2561 = vpack.c.b16 %v1657, %v1653
      %v2562 = vpack.c.b16 %v1658, %v1654
      %v2563 = vpack.c.b16 %v1659, %v1655
      %v2564 = vpack.c.b16 %v1660, %v1656
      %v2565 = vpack.c.b16 %v1665, %v1661
      %v2566 = vpack.c.b16 %v1666, %v1662
      %v2567 = vpack.c.b16 %v1667, %v1663
      %v2568 = vpack.c.b16 %v1668, %v1664
      %v2569 = vpack.c.b16 %v1673, %v1669
      %v2570 = vpack.c.b16 %v1674, %v1670
      %v2571 = vpack.c.b16 %v1675, %v1671
      %v2572 = vpack.c.b16 %v1676, %v1672
      %v2573 = vpack.c.b16 %v1681, %v1677
      %v2574 = vpack.c.b16 %v1682, %v1678
      %v2575 = vpack.c.b16 %v1683, %v1679
      %v2576 = vpack.c.b16 %v1684, %v1680
      %v2577 = vpack.c.b16 %v1689, %v1685
      %v2578 = vpack.c.b16 %v1690, %v1686
      %v2579 = vpack.c.b16 %v1691, %v1687
      %v2580 = vpack.c.b16 %v1692, %v1688
      %v2581 = vpack.c.b16 %v1697, %v1693
      %v2582 = vpack.c.b16 %v1698, %v1694
      %v2583 = vpack.c.b16 %v1699, %v1695
      %v2584 = vpack.c.b16 %v1700, %v1696
      %v2585 = vpack.c.b16 %v1705, %v1701
      %v2586 = vpack.c.b16 %v1706, %v1702
      %v2587 = vpack.c.b16 %v1707, %v1703
      %v2588 = vpack.c.b16 %v1708, %v1704
      %v2589 = vpack.c.b16 %v1713, %v1709
      %v2590 = vpack.c.b16 %v1714, %v1710
      %v2591 = vpack.c.b16 %v1715, %v1711
      %v2592 = vpack.c.b16 %v1716, %v1712
      %v2593 = vpack.c.b16 %v1721, %v1717
      %v2594 = vpack.c.b16 %v1722, %v1718
      %v2595 = vpack.c.b16 %v1723, %v1719
      %v2596 = vpack.c.b16 %v1724, %v1720
      %v2597 = vpack.c.b16 %v1729, %v1725
      %v2598 = vpack.c.b16 %v1730, %v1726
      %v2599 = vpack.c.b16 %v1731, %v1727
      %v2600 = vpack.c.b16 %v1732, %v1728
      %v2601 = vpack.c.b16 %v1737, %v1733
      %v2602 = vpack.c.b16 %v1738, %v1734
      %v2603 = vpack.c.b16 %v1739, %v1735
      %v2604 = vpack.c.b16 %v1740, %v1736
      %v2605 = vpack.c.b16 %v1745, %v1741
      %v2606 = vpack.c.b16 %v1746, %v1742
      %v2607 = vpack.c.b16 %v1747, %v1743
      %v2608 = vpack.c.b16 %v1748, %v1744
      %v2609 = vpack.c.b16 %v1753, %v1749
      %v2610 = vpack.c.b16 %v1754, %v1750
      %v2611 = vpack.c.b16 %v1755, %v1751
      %v2612 = vpack.c.b16 %v1756, %v1752
      %v2613 = vpack.c.b16 %v1761, %v1757
      %v2614 = vpack.c.b16 %v1762, %v1758
      %v2615 = vpack.c.b16 %v1763, %v1759
      %v2616 = vpack.c.b16 %v1764, %v1760
      %v2617 = vpack.c.b16 %v1769, %v1765
      %v2618 = vpack.c.b16 %v1770, %v1766
      %v2619 = vpack.c.b16 %v1771, %v1767
      %v2620 = vpack.c.b16 %v1772, %v1768
      %v2621 = vpack.c.b16 %v1777, %v1773
      %v2622 = vpack.c.b16 %v1778, %v1774
      %v2623 = vpack.c.b16 %v1779, %v1775
      %v2624 = vpack.c.b16 %v1780, %v1776
      %v2625 = vpack.c.b16 %v1785, %v1781
      %v2626 = vpack.c.b16 %v1786, %v1782
      %v2627 = vpack.c.b16 %v1787, %v1783
      %v2628 = vpack.c.b16 %v1788, %v1784
      %v2629 = vpack.c.b16 %v1793, %v1789
      %v2630 = vpack.c.b16 %v1794, %v1790
      %v2631 = vpack.c.b16 %v1795, %v1791
      %v2632 = vpack.c.b16 %v1796, %v1792
      %v2633 = vpack.c.b16 %v1801, %v1797
      %v2634 = vpack.c.b16 %v1802, %v1798
      %v2635 = vpack.c.b16 %v1803, %v1799
      %v2636 = vpack.c.b16 %v1804, %v1800
      %v2637 = vpack.c.b16 %v1809, %v1805
      %v2638 = vpack.c.b16 %v1810, %v1806
      %v2639 = vpack.c.b16 %v1811, %v1807
      %v2640 = vpack.c.b16 %v1812, %v1808
      %v2641 = vpack.c.b16 %v1817, %v1813
      %v2642 = vpack.c.b16 %v1818, %v1814
      %v2643 = vpack.c.b16 %v1819, %v1815
      %v2644 = vpack.c.b16 %v1820, %v1816
      %v2645 = vpack.c.b16 %v1825, %v1821
      %v2646 = vpack.c.b16 %v1826, %v1822
      %v2647 = vpack.c.b16 %v1827, %v1823
      %v2648 = vpack.c.b16 %v1828, %v1824
      %v2649 = vpack.c.b16 %v1833, %v1829
      %v2650 = vpack.c.b16 %v1834, %v1830
      %v2651 = vpack.c.b16 %v1835, %v1831
      %v2652 = vpack.c.b16 %v1836, %v1832
      %v2653 = vpack.c.b16 %v1841, %v1837
      %v2654 = vpack.c.b16 %v1842, %v1838
      %v2655 = vpack.c.b16 %v1843, %v1839
      %v2656 = vpack.c.b16 %v1844, %v1840
      %v2657 = vpack.c.b16 %v1849, %v1845
      %v2658 = vpack.c.b16 %v1850, %v1846
      %v2659 = vpack.c.b16 %v1851, %v1847
      %v2660 = vpack.c.b16 %v1852, %v1848
      %v2661 = vpack.c.b16 %v1857, %v1853
      %v2662 = vpack.c.b16 %v1858, %v1854
      %v2663 = vpack.c.b16 %v1859, %v1855
      %v2664 = vpack.c.b16 %v1860, %v1856
      %v2665 = vpack.c.b16 %v1865, %v1861
      %v2666 = vpack.c.b16 %v1866, %v1862
      %v2667 = vpack.c.b16 %v1867, %v1863
      %v2668 = vpack.c.b16 %v1868, %v1864
      %v2669 = vpack.c.b16 %v1873, %v1869
      %v2670 = vpack.c.b16 %v1874, %v1870
      %v2671 = vpack.c.b16 %v1875, %v1871
      %v2672 = vpack.c.b16 %v1876, %v1872
      %v2673 = vpack.c.b16 %v1881, %v1877
      %v2674 = vpack.c.b16 %v1882, %v1878
      %v2675 = vpack.c.b16 %v1883, %v1879
      %v2676 = vpack.c.b16 %v1884, %v1880
      %v2677 = vpack.c.b16 %v1889, %v1885
      %v2678 = vpack.c.b16 %v1890, %v1886
      %v2679 = vpack.c.b16 %v1891, %v1887
      %v2680 = vpack.c.b16 %v1892, %v1888
      %v2681 = vpack.c.b16 %v1897, %v1893
      %v2682 = vpack.c.b16 %v1898, %v1894
      %v2683 = vpack.c.b16 %v1899, %v1895
      %v2684 = vpack.c.b16 %v1900, %v1896
      %v2685 = vpack.c.b16 %v1905, %v1901
      %v2686 = vpack.c.b16 %v1906, %v1902
      %v2687 = vpack.c.b16 %v1907, %v1903
      %v2688 = vpack.c.b16 %v1908, %v1904
      %v2689 = vpack.c.b16 %v1913, %v1909
      %v2690 = vpack.c.b16 %v1914, %v1910
      %v2691 = vpack.c.b16 %v1915, %v1911
      %v2692 = vpack.c.b16 %v1916, %v1912
      %v2693 = vpack.c.b16 %v1921, %v1917
      %v2694 = vpack.c.b16 %v1922, %v1918
      %v2695 = vpack.c.b16 %v1923, %v1919
      %v2696 = vpack.c.b16 %v1924, %v1920
      %v2697 = vpack.c.b16 %v1929, %v1925
      %v2698 = vpack.c.b16 %v1930, %v1926
      %v2699 = vpack.c.b16 %v1931, %v1927
      %v2700 = vpack.c.b16 %v1932, %v1928
      %v2701 = vpack.c.b16 %v1937, %v1933
      %v2702 = vpack.c.b16 %v1938, %v1934
      %v2703 = vpack.c.b16 %v1939, %v1935
      %v2704 = vpack.c.b16 %v1940, %v1936
      %v2705 = vpack.c.b16 %v1945, %v1941
      %v2706 = vpack.c.b16 %v1946, %v1942
      %v2707 = vpack.c.b16 %v1947, %v1943
      %v2708 = vpack.c.b16 %v1948, %v1944
      %v2709 = vpack.c.b16 %v1953, %v1949
      %v2710 = vpack.c.b16 %v1954, %v1950
      %v2711 = vpack.c.b16 %v1955, %v1951
      %v2712 = vpack.c.b16 %v1956, %v1952
      %v2713 = vpack.c.b16 %v1961, %v1957
      %v2714 = vpack.c.b16 %v1962, %v1958
      %v2715 = vpack.c.b16 %v1963, %v1959
      %v2716 = vpack.c.b16 %v1964, %v1960
      %v2717 = vpack.c.b16 %v1969, %v1965
      %v2718 = vpack.c.b16 %v1970, %v1966
      %v2719 = vpack.c.b16 %v1971, %v1967
      %v2720 = vpack.c.b16 %v1972, %v1968
      %v2721 = vpack.c.b16 %v1977, %v1973
      %v2722 = vpack.c.b16 %v1978, %v1974
      %v2723 = vpack.c.b16 %v1979, %v1975
      %v2724 = vpack.c.b16 %v1980, %v1976
      %v2725 = vpack.c.b16 %v1985, %v1981
      %v2726 = vpack.c.b16 %v1986, %v1982
      %v2727 = vpack.c.b16 %v1987, %v1983
      %v2728 = vpack.c.b16 %v1988, %v1984
      %v2729 = vpack.c.b16 %v1993, %v1989
      %v2730 = vpack.c.b16 %v1994, %v1990
      %v2731 = vpack.c.b16 %v1995, %v1991
      %v2732 = vpack.c.b16 %v1996, %v1992
      %v2733 = vpack.c.b16 %v2001, %v1997
      %v2734 = vpack.c.b16 %v2002, %v1998
      %v2735 = vpack.c.b16 %v2003, %v1999
      %v2736 = vpack.c.b16 %v2004, %v2000
      %v2737 = vpack.c.b16 %v2009, %v2005
      %v2738 = vpack.c.b16 %v2010, %v2006
      %v2739 = vpack.c.b16 %v2011, %v2007
      %v2740 = vpack.c.b16 %v2012, %v2008
      %v2741 = vpack.c.b16 %v2017, %v2013
      %v2742 = vpack.c.b16 %v2018, %v2014
      %v2743 = vpack.c.b16 %v2019, %v2015
      %v2744 = vpack.c.b16 %v2020, %v2016
      %v2745 = vpack.c.b16 %v2025, %v2021
      %v2746 = vpack.c.b16 %v2026, %v2022
      %v2747 = vpack.c.b16 %v2027, %v2023
      %v2748 = vpack.c.b16 %v2028, %v2024
      %v2749 = vpack.c.b16 %v2033, %v2029
      %v2750 = vpack.c.b16 %v2034, %v2030
      %v2751 = vpack.c.b16 %v2035, %v2031
      %v2752 = vpack.c.b16 %v2036, %v2032
      %v2753 = vpack.c.b16 %v2041, %v2037
      %v2754 = vpack.c.b16 %v2042, %v2038
      %v2755 = vpack.c.b16 %v2043, %v2039
      %v2756 = vpack.c.b16 %v2044, %v2040
      %v2757 = vpack.c.b16 %v2049, %v2045
      %v2758 = vpack.c.b16 %v2050, %v2046
      %v2759 = vpack.c.b16 %v2051, %v2047
      %v2760 = vpack.c.b16 %v2052, %v2048
      %v2761 = vpack.c.b16 %v2057, %v2053
      %v2762 = vpack.c.b16 %v2058, %v2054
      %v2763 = vpack.c.b16 %v2059, %v2055
      %v2764 = vpack.c.b16 %v2060, %v2056
      %v2765 = vpack.c.b16 %v2065, %v2061
      %v2766 = vpack.c.b16 %v2066, %v2062
      %v2767 = vpack.c.b16 %v2067, %v2063
      %v2768 = vpack.c.b16 %v2068, %v2064
      %v2769 = vpack.c.b16 %v2073, %v2069
      %v2770 = vpack.c.b16 %v2074, %v2070
      %v2771 = vpack.c.b16 %v2075, %v2071
      %v2772 = vpack.c.b16 %v2076, %v2072
      %v2773 = vpack.c.b16 %v2081, %v2077
      %v2774 = vpack.c.b16 %v2082, %v2078
      %v2775 = vpack.c.b16 %v2083, %v2079
      %v2776 = vpack.c.b16 %v2084, %v2080
      %v2777 = vpack.c.b16 %v2089, %v2085
      %v2778 = vpack.c.b16 %v2090, %v2086
      %v2779 = vpack.c.b16 %v2091, %v2087
      %v2780 = vpack.c.b16 %v2092, %v2088
      %v2781 = vpack.c.b16 %v2097, %v2093
      %v2782 = vpack.c.b16 %v2098, %v2094
      %v2783 = vpack.c.b16 %v2099, %v2095
      %v2784 = vpack.c.b16 %v2100, %v2096
      %v2785 = vpack.c.b16 %v2105, %v2101
      %v2786 = vpack.c.b16 %v2106, %v2102
      %v2787 = vpack.c.b16 %v2107, %v2103
      %v2788 = vpack.c.b16 %v2108, %v2104
      %v2789 = vpack.c.b16 %v2113, %v2109
      %v2790 = vpack.c.b16 %v2114, %v2110
      %v2791 = vpack.c.b16 %v2115, %v2111
      %v2792 = vpack.c.b16 %v2116, %v2112
      %v2793 = vpack.c.b16 %v2121, %v2117
      %v2794 = vpack.c.b16 %v2122, %v2118
      %v2795 = vpack.c.b16 %v2123, %v2119
      %v2796 = vpack.c.b16 %v2124, %v2120
      %v2797 = vpack.c.b16 %v2129, %v2125
      %v2798 = vpack.c.b16 %v2130, %v2126
      %v2799 = vpack.c.b16 %v2131, %v2127
      %v2800 = vpack.c.b16 %v2132, %v2128
      %v2801 = vpack.c.b16 %v2137, %v2133
      %v2802 = vpack.c.b16 %v2138, %v2134
      %v2803 = vpack.c.b16 %v2139, %v2135
      %v2804 = vpack.c.b16 %v2140, %v2136
      %v2805 = vpack.c.b16 %v2145, %v2141
      %v2806 = vpack.c.b16 %v2146, %v2142
      %v2807 = vpack.c.b16 %v2147, %v2143
      %v2808 = vpack.c.b16 %v2148, %v2144
      %v2809 = vpack.c.b16 %v2153, %v2149
      %v2810 = vpack.c.b16 %v2154, %v2150
      %v2811 = vpack.c.b16 %v2155, %v2151
      %v2812 = vpack.c.b16 %v2156, %v2152
      %v2813 = vpack.c.b16 %v2161, %v2157
      %v2814 = vpack.c.b16 %v2162, %v2158
      %v2815 = vpack.c.b16 %v2163, %v2159
      %v2816 = vpack.c.b16 %v2164, %v2160
      %v2817 = vpack.c.b16 %v2169, %v2165
      %v2818 = vpack.c.b16 %v2170, %v2166
      %v2819 = vpack.c.b16 %v2171, %v2167
      %v2820 = vpack.c.b16 %v2172, %v2168
      %v2821 = vpack.c.b16 %v2177, %v2173
      %v2822 = vpack.c.b16 %v2178, %v2174
      %v2823 = vpack.c.b16 %v2179, %v2175
      %v2824 = vpack.c.b16 %v2180, %v2176
      %v2825 = vpack.c.b16 %v2185, %v2181
      %v2826 = vpack.c.b16 %v2186, %v2182
      %v2827 = vpack.c.b16 %v2187, %v2183
      %v2828 = vpack.c.b16 %v2188, %v2184
      %v2829 = vpack.c.b16 %v2193, %v2189
      %v2830 = vpack.c.b16 %v2194, %v2190
      %v2831 = vpack.c.b16 %v2195, %v2191
      %v2832 = vpack.c.b16 %v2196, %v2192
      %v2833 = vpack.c.b16 %v2201, %v2197
      %v2834 = vpack.c.b16 %v2202, %v2198
      %v2835 = vpack.c.b16 %v2203, %v2199
      %v2836 = vpack.c.b16 %v2204, %v2200
      %v2837 = vpack.c.b16 %v2209, %v2205
      %v2838 = vpack.c.b16 %v2210, %v2206
      %v2839 = vpack.c.b16 %v2211, %v2207
      %v2840 = vpack.c.b16 %v2212, %v2208
      %v2841 = vpack.c.b16 %v2217, %v2213
      %v2842 = vpack.c.b16 %v2218, %v2214
      %v2843 = vpack.c.b16 %v2219, %v2215
      %v2844 = vpack.c.b16 %v2220, %v2216
      %v2845 = vpack.c.b16 %v2225, %v2221
      %v2846 = vpack.c.b16 %v2226, %v2222
      %v2847 = vpack.c.b16 %v2227, %v2223
      %v2848 = vpack.c.b16 %v2228, %v2224
      %v2849 = vpack.c.b16 %v2233, %v2229
      %v2850 = vpack.c.b16 %v2234, %v2230
      %v2851 = vpack.c.b16 %v2235, %v2231
      %v2852 = vpack.c.b16 %v2236, %v2232
      %v2853 = vpack.c.b16 %v2241, %v2237
      %v2854 = vpack.c.b16 %v2242, %v2238
      %v2855 = vpack.c.b16 %v2243, %v2239
      %v2856 = vpack.c.b16 %v2244, %v2240
      %v2857 = vpack.c.b16 %v2249, %v2245
      %v2858 = vpack.c.b16 %v2250, %v2246
      %v2859 = vpack.c.b16 %v2251, %v2247
      %v2860 = vpack.c.b16 %v2252, %v2248
      %v2861 = vpack.c.b16 %v2257, %v2253
      %v2862 = vpack.c.b16 %v2258, %v2254
      %v2863 = vpack.c.b16 %v2259, %v2255
      %v2864 = vpack.c.b16 %v2260, %v2256
      %v2865 = vpack.c.b16 %v2265, %v2261
      %v2866 = vpack.c.b16 %v2266, %v2262
      %v2867 = vpack.c.b16 %v2267, %v2263
      %v2868 = vpack.c.b16 %v2268, %v2264
      %v2869 = vpack.c.b16 %v2273, %v2269
      %v2870 = vpack.c.b16 %v2274, %v2270
      %v2871 = vpack.c.b16 %v2275, %v2271
      %v2872 = vpack.c.b16 %v2276, %v2272
      %v2873 = vpack.c.b16 %v2281, %v2277
      %v2874 = vpack.c.b16 %v2282, %v2278
      %v2875 = vpack.c.b16 %v2283, %v2279
      %v2876 = vpack.c.b16 %v2284, %v2280
      %v2877 = vpack.c.b16 %v2289, %v2285
      %v2878 = vpack.c.b16 %v2290, %v2286
      %v2879 = vpack.c.b16 %v2291, %v2287
      %v2880 = vpack.c.b16 %v2292, %v2288
      %v2881 = vpack.c.b16 %v2297, %v2293
      %v2882 = vpack.c.b16 %v2298, %v2294
      %v2883 = vpack.c.b16 %v2299, %v2295
      %v2884 = vpack.c.b16 %v2300, %v2296
      %v2885 = vpack.c.b16 %v2305, %v2301
      %v2886 = vpack.c.b16 %v2306, %v2302
      %v2887 = vpack.c.b16 %v2307, %v2303
      %v2888 = vpack.c.b16 %v2308, %v2304
      %v2889 = vpack.c.b16 %v2313, %v2309
      %v2890 = vpack.c.b16 %v2314, %v2310
      %v2891 = vpack.c.b16 %v2315, %v2311
      %v2892 = vpack.c.b16 %v2316, %v2312
      %v2893 = vpack.c.b16 %v2321, %v2317
      %v2894 = vpack.c.b16 %v2322, %v2318
      %v2895 = vpack.c.b16 %v2323, %v2319
      %v2896 = vpack.c.b16 %v2324, %v2320
      %v2897 = vpack.c.b16 %v2329, %v2325
      %v2898 = vpack.c.b16 %v2330, %v2326
      %v2899 = vpack.c.b16 %v2331, %v2327
      %v2900 = vpack.c.b16 %v2332, %v2328
      %v2901 = vpack.c.b16 %v2337, %v2333
      %v2902 = vpack.c.b16 %v2338, %v2334
      %v2903 = vpack.c.b16 %v2339, %v2335
      %v2904 = vpack.c.b16 %v2340, %v2336
      %v2905 = vpack.c.b16 %v2345, %v2341
      %v2906 = vpack.c.b16 %v2346, %v2342
      %v2907 = vpack.c.b16 %v2347, %v2343
      %v2908 = vpack.c.b16 %v2348, %v2344
      %v2909 = vpack.c.b16 %v2353, %v2349
      %v2910 = vpack.c.b16 %v2354, %v2350
      %v2911 = vpack.c.b16 %v2355, %v2351
      %v2912 = vpack.c.b16 %v2356, %v2352
      %v2913 = vpack.c.b16 %v2361, %v2357
      %v2914 = vpack.c.b16 %v2362, %v2358
      %v2915 = vpack.c.b16 %v2363, %v2359
      %v2916 = vpack.c.b16 %v2364, %v2360
      %v2917 = vpack.c.b16 %v2369, %v2365
      %v2918 = vpack.c.b16 %v2370, %v2366
      %v2919 = vpack.c.b16 %v2371, %v2367
      %v2920 = vpack.c.b16 %v2372, %v2368
      %v2921 = vpack.c.b16 %v2377, %v2373
      %v2922 = vpack.c.b16 %v2378, %v2374
      %v2923 = vpack.c.b16 %v2379, %v2375
      %v2924 = vpack.c.b16 %v2380, %v2376
      %v2925 = vpack.c.b16 %v2385, %v2381
      %v2926 = vpack.c.b16 %v2386, %v2382
      %v2927 = vpack.c.b16 %v2387, %v2383
      %v2928 = vpack.c.b16 %v2388, %v2384
      %v2929 = vpack.c.b16 %v2393, %v2389
      %v2930 = vpack.c.b16 %v2394, %v2390
      %v2931 = vpack.c.b16 %v2395, %v2391
      %v2932 = vpack.c.b16 %v2396, %v2392
      %v2933 = vpack.c.b16 %v2401, %v2397
      %v2934 = vpack.c.b16 %v2402, %v2398
      %v2935 = vpack.c.b16 %v2403, %v2399
      %v2936 = vpack.c.b16 %v2404, %v2400
      %v2937 = vpack.c.b16 %v2409, %v2405
      %v2938 = vpack.c.b16 %v2410, %v2406
      %v2939 = vpack.c.b16 %v2411, %v2407
      %v2940 = vpack.c.b16 %v2412, %v2408
      %v2941 = vpack.c.b16 %v2417, %v2413
      %v2942 = vpack.c.b16 %v2418, %v2414
      %v2943 = vpack.c.b16 %v2419, %v2415
      %v2944 = vpack.c.b16 %v2420, %v2416
      %v2945 = vpack.c.b16 %v2425, %v2421
      %v2946 = vpack.c.b16 %v2426, %v2422
      %v2947 = vpack.c.b16 %v2427, %v2423
      %v2948 = vpack.c.b16 %v2428, %v2424
      %v2949 = vpack.c.b16 %v2433, %v2429
      %v2950 = vpack.c.b16 %v2434, %v2430
      %v2951 = vpack.c.b16 %v2435, %v2431
      %v2952 = vpack.c.b16 %v2436, %v2432
      %v2953 = vpack.c.b16 %v2441, %v2437
      %v2954 = vpack.c.b16 %v2442, %v2438
      %v2955 = vpack.c.b16 %v2443, %v2439
      %v2956 = vpack.c.b16 %v2444, %v2440
      %3469 = vmatprep.subr.bf16.mxu0 %v2446
      %3470 = vmatpush1.bf16.msra.mxu0 %v2445
      %3471 = vmatprep.subr.bf16.mxu0 %v2450
      %3472 = vmatpush1.bf16.msra.mxu0 %v2449
      %3473 = vmatprep.subr.bf16.mxu0 %v2454
      %3474 = vmatpush1.bf16.msra.mxu0 %v2453
      %3475 = vmatprep.subr.bf16.mxu0 %v2458
      %3476 = vmatpush1.bf16.msra.mxu0 %v2457
      %3477 = vmatprep.subr.bf16.mxu0 %v2462
      %3478 = vmatpush1.bf16.msra.mxu0 %v2461
      %3479 = vmatprep.subr.bf16.mxu0 %v2466
      %3480 = vmatpush1.bf16.msra.mxu0 %v2465
      %3481 = vmatprep.subr.bf16.mxu0 %v2470
      %3482 = vmatpush1.bf16.msra.mxu0 %v2469
      %3483 = vmatprep.subr.bf16.mxu0 %v2474
      %3484 = vmatpush1.bf16.msra.mxu0 %v2473
      %3485 = vmatprep.subr.bf16.mxu0 %v2478
      %3486 = vmatpush1.bf16.msra.mxu0 %v2477
      %3487 = vmatprep.subr.bf16.mxu0 %v2482
      %3488 = vmatpush1.bf16.msra.mxu0 %v2481
      %3489 = vmatprep.subr.bf16.mxu0 %v2486
      %3490 = vmatpush1.bf16.msra.mxu0 %v2485
      %3491 = vmatprep.subr.bf16.mxu0 %v2490
      %3492 = vmatpush1.bf16.msra.mxu0 %v2489
      %3493 = vmatprep.subr.bf16.mxu0 %v2494
      %3494 = vmatpush1.bf16.msra.mxu0 %v2493
      %3495 = vmatprep.subr.bf16.mxu0 %v2498
      %3496 = vmatpush1.bf16.msra.mxu0 %v2497
      %3497 = vmatprep.subr.bf16.mxu0 %v2502
      %3498 = vmatpush1.bf16.msra.mxu0 %v2501
      %3499 = vmatprep.subr.bf16.mxu0 %v2506
      %3500 = vmatpush1.bf16.msra.mxu0 %v2505
      %3501 = vmatprep.mubr.bf16.mxu0 %v846
      %3502 = vmatmul.mubr.bf16.gmra.mrb[0].mxu0 %v845
      %v3503 = vpop.f32.mrb[0].mxu0
      %v3504 = vadd.f32 0.0, %v3503
      %v3505 = vpop.f32.mrb[0].mxu0
      %v3506 = vadd.f32 0.0, %v3505
      %v3507 = vpop.f32.mrb[0].mxu0
      %v3508 = vadd.f32 0.0, %v3507
      %v3509 = vpop.f32.mrb[0].mxu0
      %v3510 = vadd.f32 0.0, %v3509
      %3511 = vmatprep.mubr.bf16.mxu0 %v862
      %3512 = vmatmul.mubr.bf16.gmra.mrb[0].mxu0 %v861
      %v3513 = vpop.f32.mrb[0].mxu0
      %v3514 = vadd.f32 0.0, %v3513
      %v3515 = vpop.f32.mrb[0].mxu0
      %v3516 = vadd.f32 0.0, %v3515
      %v3517 = vpop.f32.mrb[0].mxu0
      %v3518 = vadd.f32 0.0, %v3517
      %v3519 = vpop.f32.mrb[0].mxu0
      %v3520 = vadd.f32 0.0, %v3519
      %3521 = vdwg.mxu0
      %3522 = vmatprep.subr.bf16.mxu0 %v2510
      %3523 = vmatpush1.bf16.msra.mxu0 %v2509
      %3524 = vmatprep.subr.bf16.mxu0 %v2514
      %3525 = vmatpush1.bf16.msra.mxu0 %v2513
      %3526 = vmatprep.subr.bf16.mxu0 %v2518
      %3527 = vmatpush1.bf16.msra.mxu0 %v2517
      %3528 = vmatprep.subr.bf16.mxu0 %v2522
      %3529 = vmatpush1.bf16.msra.mxu0 %v2521
      %3530 = vmatprep.subr.bf16.mxu0 %v2526
      %3531 = vmatpush1.bf16.msra.mxu0 %v2525
      %3532 = vmatprep.subr.bf16.mxu0 %v2530
      %3533 = vmatpush1.bf16.msra.mxu0 %v2529
      %3534 = vmatprep.subr.bf16.mxu0 %v2534
      %3535 = vmatpush1.bf16.msra.mxu0 %v2533
      %3536 = vmatprep.subr.bf16.mxu0 %v2538
      %3537 = vmatpush1.bf16.msra.mxu0 %v2537
      %3538 = vmatprep.subr.bf16.mxu0 %v2542
      %3539 = vmatpush1.bf16.msra.mxu0 %v2541
      %3540 = vmatprep.subr.bf16.mxu0 %v2546
      %3541 = vmatpush1.bf16.msra.mxu0 %v2545
      %3542 = vmatprep.subr.bf16.mxu0 %v2550
      %3543 = vmatpush1.bf16.msra.mxu0 %v2549
      %3544 = vmatprep.subr.bf16.mxu0 %v2554
      %3545 = vmatpush1.bf16.msra.mxu0 %v2553
      %3546 = vmatprep.subr.bf16.mxu0 %v2558
      %3547 = vmatpush1.bf16.msra.mxu0 %v2557
      %3548 = vmatprep.subr.bf16.mxu0 %v2562
      %3549 = vmatpush1.bf16.msra.mxu0 %v2561
      %3550 = vmatprep.subr.bf16.mxu0 %v2566
      %3551 = vmatpush1.bf16.msra.mxu0 %v2565
      %3552 = vmatprep.subr.bf16.mxu0 %v2570
      %3553 = vmatpush1.bf16.msra.mxu0 %v2569
      %3554 = vmatprep.mubr.bf16.mxu0 %v848
      %3555 = vmatmul.mubr.bf16.gmra.mrb[0].mxu0 %v847
      %v3556 = vpop.f32.mrb[0].mxu0
      %v3557 = vadd.f32 %v3504, %v3556
      %v3558 = vpop.f32.mrb[0].mxu0
      %v3559 = vadd.f32 %v3506, %v3558
      %v3560 = vpop.f32.mrb[0].mxu0
      %v3561 = vadd.f32 %v3508, %v3560
      %v3562 = vpop.f32.mrb[0].mxu0
      %v3563 = vadd.f32 %v3510, %v3562
      %3564 = vmatprep.mubr.bf16.mxu0 %v864
      %3565 = vmatmul.mubr.bf16.gmra.mrb[0].mxu0 %v863
      %v3566 = vpop.f32.mrb[0].mxu0
      %v3567 = vadd.f32 %v3514, %v3566
      %v3568 = vpop.f32.mrb[0].mxu0
      %v3569 = vadd.f32 %v3516, %v3568
      %v3570 = vpop.f32.mrb[0].mxu0
      %v3571 = vadd.f32 %v3518, %v3570
      %v3572 = vpop.f32.mrb[0].mxu0
      %v3573 = vadd.f32 %v3520, %v3572
      %3574 = vdwg.mxu0
      %3575 = vmatprep.subr.bf16.mxu0 %v2574
      %3576 = vmatpush1.bf16.msra.mxu0 %v2573
      %3577 = vmatprep.subr.bf16.mxu0 %v2578
      %3578 = vmatpush1.bf16.msra.mxu0 %v2577
      %3579 = vmatprep.subr.bf16.mxu0 %v2582
      %3580 = vmatpush1.bf16.msra.mxu0 %v2581
      %3581 = vmatprep.subr.bf16.mxu0 %v2586
      %3582 = vmatpush1.bf16.msra.mxu0 %v2585
      %3583 = vmatprep.subr.bf16.mxu0 %v2590
      %3584 = vmatpush1.bf16.msra.mxu0 %v2589
      %3585 = vmatprep.subr.bf16.mxu0 %v2594
      %3586 = vmatpush1.bf16.msra.mxu0 %v2593
      %3587 = vmatprep.subr.bf16.mxu0 %v2598
      %3588 = vmatpush1.bf16.msra.mxu0 %v2597
      %3589 = vmatprep.subr.bf16.mxu0 %v2602
      %3590 = vmatpush1.bf16.msra.mxu0 %v2601
      %3591 = vmatprep.subr.bf16.mxu0 %v2606
      %3592 = vmatpush1.bf16.msra.mxu0 %v2605
      %3593 = vmatprep.subr.bf16.mxu0 %v2610
      %3594 = vmatpush1.bf16.msra.mxu0 %v2609
      %3595 = vmatprep.subr.bf16.mxu0 %v2614
      %3596 = vmatpush1.bf16.msra.mxu0 %v2613
      %3597 = vmatprep.subr.bf16.mxu0 %v2618
      %3598 = vmatpush1.bf16.msra.mxu0 %v2617
      %3599 = vmatprep.subr.bf16.mxu0 %v2622
      %3600 = vmatpush1.bf16.msra.mxu0 %v2621
      %3601 = vmatprep.subr.bf16.mxu0 %v2626
      %3602 = vmatpush1.bf16.msra.mxu0 %v2625
      %3603 = vmatprep.subr.bf16.mxu0 %v2630
      %3604 = vmatpush1.bf16.msra.mxu0 %v2629
      %3605 = vmatprep.subr.bf16.mxu0 %v2634
      %3606 = vmatpush1.bf16.msra.mxu0 %v2633
      %3607 = vmatprep.mubr.bf16.mxu0 %v850
      %3608 = vmatmul.mubr.bf16.gmra.mrb[0].mxu0 %v849
      %v3609 = vpop.f32.mrb[0].mxu0
      %v3610 = vadd.f32 %v3557, %v3609
      %v3611 = vpop.f32.mrb[0].mxu0
      %v3612 = vadd.f32 %v3559, %v3611
      %v3613 = vpop.f32.mrb[0].mxu0
      %v3614 = vadd.f32 %v3561, %v3613
      %v3615 = vpop.f32.mrb[0].mxu0
      %v3616 = vadd.f32 %v3563, %v3615
      %3617 = vmatprep.mubr.bf16.mxu0 %v866
      %3618 = vmatmul.mubr.bf16.gmra.mrb[0].mxu0 %v865
      %v3619 = vpop.f32.mrb[0].mxu0
      %v3620 = vadd.f32 %v3567, %v3619
      %v3621 = vpop.f32.mrb[0].mxu0
      %v3622 = vadd.f32 %v3569, %v3621
      %v3623 = vpop.f32.mrb[0].mxu0
      %v3624 = vadd.f32 %v3571, %v3623
      %v3625 = vpop.f32.mrb[0].mxu0
      %v3626 = vadd.f32 %v3573, %v3625
      %3627 = vdwg.mxu0
      %3628 = vmatprep.subr.bf16.mxu0 %v2638
      %3629 = vmatpush1.bf16.msra.mxu0 %v2637
      %3630 = vmatprep.subr.bf16.mxu0 %v2642
      %3631 = vmatpush1.bf16.msra.mxu0 %v2641
      %3632 = vmatprep.subr.bf16.mxu0 %v2646
      %3633 = vmatpush1.bf16.msra.mxu0 %v2645
      %3634 = vmatprep.subr.bf16.mxu0 %v2650
      %3635 = vmatpush1.bf16.msra.mxu0 %v2649
      %3636 = vmatprep.subr.bf16.mxu0 %v2654
      %3637 = vmatpush1.bf16.msra.mxu0 %v2653
      %3638 = vmatprep.subr.bf16.mxu0 %v2658
      %3639 = vmatpush1.bf16.msra.mxu0 %v2657
      %3640 = vmatprep.subr.bf16.mxu0 %v2662
      %3641 = vmatpush1.bf16.msra.mxu0 %v2661
      %3642 = vmatprep.subr.bf16.mxu0 %v2666
      %3643 = vmatpush1.bf16.msra.mxu0 %v2665
      %3644 = vmatprep.subr.bf16.mxu0 %v2670
      %3645 = vmatpush1.bf16.msra.mxu0 %v2669
      %3646 = vmatprep.subr.bf16.mxu0 %v2674
      %3647 = vmatpush1.bf16.msra.mxu0 %v2673
      %3648 = vmatprep.subr.bf16.mxu0 %v2678
      %3649 = vmatpush1.bf16.msra.mxu0 %v2677
      %3650 = vmatprep.subr.bf16.mxu0 %v2682
      %3651 = vmatpush1.bf16.msra.mxu0 %v2681
      %3652 = vmatprep.subr.bf16.mxu0 %v2686
      %3653 = vmatpush1.bf16.msra.mxu0 %v2685
      %3654 = vmatprep.subr.bf16.mxu0 %v2690
      %3655 = vmatpush1.bf16.msra.mxu0 %v2689
      %3656 = vmatprep.subr.bf16.mxu0 %v2694
      %3657 = vmatpush1.bf16.msra.mxu0 %v2693
      %3658 = vmatprep.subr.bf16.mxu0 %v2698
      %3659 = vmatpush1.bf16.msra.mxu0 %v2697
      %3660 = vmatprep.mubr.bf16.mxu0 %v852
      %3661 = vmatmul.mubr.bf16.gmra.mrb[0].mxu0 %v851
      %v3662 = vpop.f32.mrb[0].mxu0
      %v3663 = vadd.f32 %v3610, %v3662
      %v3664 = vpop.f32.mrb[0].mxu0
      %v3665 = vadd.f32 %v3612, %v3664
      %v3666 = vpop.f32.mrb[0].mxu0
      %v3667 = vadd.f32 %v3614, %v3666
      %v3668 = vpop.f32.mrb[0].mxu0
      %v3669 = vadd.f32 %v3616, %v3668
      %3670 = vmatprep.mubr.bf16.mxu0 %v868
      %3671 = vmatmul.mubr.bf16.gmra.mrb[0].mxu0 %v867
      %v3672 = vpop.f32.mrb[0].mxu0
      %v3673 = vadd.f32 %v3620, %v3672
      %v3674 = vpop.f32.mrb[0].mxu0
      %v3675 = vadd.f32 %v3622, %v3674
      %v3676 = vpop.f32.mrb[0].mxu0
      %v3677 = vadd.f32 %v3624, %v3676
      %v3678 = vpop.f32.mrb[0].mxu0
      %v3679 = vadd.f32 %v3626, %v3678
      %3680 = vdwg.mxu0
      %3681 = vmatprep.subr.bf16.mxu0 %v2702
      %3682 = vmatpush1.bf16.msra.mxu0 %v2701
      %3683 = vmatprep.subr.bf16.mxu0 %v2706
      %3684 = vmatpush1.bf16.msra.mxu0 %v2705
      %3685 = vmatprep.subr.bf16.mxu0 %v2710
      %3686 = vmatpush1.bf16.msra.mxu0 %v2709
      %3687 = vmatprep.subr.bf16.mxu0 %v2714
      %3688 = vmatpush1.bf16.msra.mxu0 %v2713
      %3689 = vmatprep.subr.bf16.mxu0 %v2718
      %3690 = vmatpush1.bf16.msra.mxu0 %v2717
      %3691 = vmatprep.subr.bf16.mxu0 %v2722
      %3692 = vmatpush1.bf16.msra.mxu0 %v2721
      %3693 = vmatprep.subr.bf16.mxu0 %v2726
      %3694 = vmatpush1.bf16.msra.mxu0 %v2725
      %3695 = vmatprep.subr.bf16.mxu0 %v2730
      %3696 = vmatpush1.bf16.msra.mxu0 %v2729
      %3697 = vmatprep.subr.bf16.mxu0 %v2734
      %3698 = vmatpush1.bf16.msra.mxu0 %v2733
      %3699 = vmatprep.subr.bf16.mxu0 %v2738
      %3700 = vmatpush1.bf16.msra.mxu0 %v2737
      %3701 = vmatprep.subr.bf16.mxu0 %v2742
      %3702 = vmatpush1.bf16.msra.mxu0 %v2741
      %3703 = vmatprep.subr.bf16.mxu0 %v2746
      %3704 = vmatpush1.bf16.msra.mxu0 %v2745
      %3705 = vmatprep.subr.bf16.mxu0 %v2750
      %3706 = vmatpush1.bf16.msra.mxu0 %v2749
      %3707 = vmatprep.subr.bf16.mxu0 %v2754
      %3708 = vmatpush1.bf16.msra.mxu0 %v2753
      %3709 = vmatprep.subr.bf16.mxu0 %v2758
      %3710 = vmatpush1.bf16.msra.mxu0 %v2757
      %3711 = vmatprep.subr.bf16.mxu0 %v2762
      %3712 = vmatpush1.bf16.msra.mxu0 %v2761
      %3713 = vmatprep.mubr.bf16.mxu0 %v854
      %3714 = vmatmul.mubr.bf16.gmra.mrb[0].mxu0 %v853
      %v3715 = vpop.f32.mrb[0].mxu0
      %v3716 = vadd.f32 %v3663, %v3715
      %v3717 = vpop.f32.mrb[0].mxu0
      %v3718 = vadd.f32 %v3665, %v3717
      %v3719 = vpop.f32.mrb[0].mxu0
      %v3720 = vadd.f32 %v3667, %v3719
      %v3721 = vpop.f32.mrb[0].mxu0
      %v3722 = vadd.f32 %v3669, %v3721
      %3723 = vmatprep.mubr.bf16.mxu0 %v870
      %3724 = vmatmul.mubr.bf16.gmra.mrb[0].mxu0 %v869
      %v3725 = vpop.f32.mrb[0].mxu0
      %v3726 = vadd.f32 %v3673, %v3725
      %v3727 = vpop.f32.mrb[0].mxu0
      %v3728 = vadd.f32 %v3675, %v3727
      %v3729 = vpop.f32.mrb[0].mxu0
      %v3730 = vadd.f32 %v3677, %v3729
      %v3731 = vpop.f32.mrb[0].mxu0
      %v3732 = vadd.f32 %v3679, %v3731
      %3733 = vdwg.mxu0
      %3734 = vmatprep.subr.bf16.mxu0 %v2766
      %3735 = vmatpush1.bf16.msra.mxu0 %v2765
      %3736 = vmatprep.subr.bf16.mxu0 %v2770
      %3737 = vmatpush1.bf16.msra.mxu0 %v2769
      %3738 = vmatprep.subr.bf16.mxu0 %v2774
      %3739 = vmatpush1.bf16.msra.mxu0 %v2773
      %3740 = vmatprep.subr.bf16.mxu0 %v2778
      %3741 = vmatpush1.bf16.msra.mxu0 %v2777
      %3742 = vmatprep.subr.bf16.mxu0 %v2782
      %3743 = vmatpush1.bf16.msra.mxu0 %v2781
      %3744 = vmatprep.subr.bf16.mxu0 %v2786
      %3745 = vmatpush1.bf16.msra.mxu0 %v2785
      %3746 = vmatprep.subr.bf16.mxu0 %v2790
      %3747 = vmatpush1.bf16.msra.mxu0 %v2789
      %3748 = vmatprep.subr.bf16.mxu0 %v2794
      %3749 = vmatpush1.bf16.msra.mxu0 %v2793
      %3750 = vmatprep.subr.bf16.mxu0 %v2798
      %3751 = vmatpush1.bf16.msra.mxu0 %v2797
      %3752 = vmatprep.subr.bf16.mxu0 %v2802
      %3753 = vmatpush1.bf16.msra.mxu0 %v2801
      %3754 = vmatprep.subr.bf16.mxu0 %v2806
      %3755 = vmatpush1.bf16.msra.mxu0 %v2805
      %3756 = vmatprep.subr.bf16.mxu0 %v2810
      %3757 = vmatpush1.bf16.msra.mxu0 %v2809
      %3758 = vmatprep.subr.bf16.mxu0 %v2814
      %3759 = vmatpush1.bf16.msra.mxu0 %v2813
      %3760 = vmatprep.subr.bf16.mxu0 %v2818
      %3761 = vmatpush1.bf16.msra.mxu0 %v2817
      %3762 = vmatprep.subr.bf16.mxu0 %v2822
      %3763 = vmatpush1.bf16.msra.mxu0 %v2821
      %3764 = vmatprep.subr.bf16.mxu0 %v2826
      %3765 = vmatpush1.bf16.msra.mxu0 %v2825
      %3766 = vmatprep.mubr.bf16.mxu0 %v856
      %3767 = vmatmul.mubr.bf16.gmra.mrb[0].mxu0 %v855
      %v3768 = vpop.f32.mrb[0].mxu0
      %v3769 = vadd.f32 %v3716, %v3768
      %v3770 = vpop.f32.mrb[0].mxu0
      %v3771 = vadd.f32 %v3718, %v3770
      %v3772 = vpop.f32.mrb[0].mxu0
      %v3773 = vadd.f32 %v3720, %v3772
      %v3774 = vpop.f32.mrb[0].mxu0
      %v3775 = vadd.f32 %v3722, %v3774
      %3776 = vmatprep.mubr.bf16.mxu0 %v872
      %3777 = vmatmul.mubr.bf16.gmra.mrb[0].mxu0 %v871
      %v3778 = vpop.f32.mrb[0].mxu0
      %v3779 = vadd.f32 %v3726, %v3778
      %v3780 = vpop.f32.mrb[0].mxu0
      %v3781 = vadd.f32 %v3728, %v3780
      %v3782 = vpop.f32.mrb[0].mxu0
      %v3783 = vadd.f32 %v3730, %v3782
      %v3784 = vpop.f32.mrb[0].mxu0
      %v3785 = vadd.f32 %v3732, %v3784
      %3786 = vdwg.mxu0
      %3787 = vmatprep.subr.bf16.mxu0 %v2830
      %3788 = vmatpush1.bf16.msra.mxu0 %v2829
      %3789 = vmatprep.subr.bf16.mxu0 %v2834
      %3790 = vmatpush1.bf16.msra.mxu0 %v2833
      %3791 = vmatprep.subr.bf16.mxu0 %v2838
      %3792 = vmatpush1.bf16.msra.mxu0 %v2837
      %3793 = vmatprep.subr.bf16.mxu0 %v2842
      %3794 = vmatpush1.bf16.msra.mxu0 %v2841
      %3795 = vmatprep.subr.bf16.mxu0 %v2846
      %3796 = vmatpush1.bf16.msra.mxu0 %v2845
      %3797 = vmatprep.subr.bf16.mxu0 %v2850
      %3798 = vmatpush1.bf16.msra.mxu0 %v2849
      %3799 = vmatprep.subr.bf16.mxu0 %v2854
      %3800 = vmatpush1.bf16.msra.mxu0 %v2853
      %3801 = vmatprep.subr.bf16.mxu0 %v2858
      %3802 = vmatpush1.bf16.msra.mxu0 %v2857
      %3803 = vmatprep.subr.bf16.mxu0 %v2862
      %3804 = vmatpush1.bf16.msra.mxu0 %v2861
      %3805 = vmatprep.subr.bf16.mxu0 %v2866
      %3806 = vmatpush1.bf16.msra.mxu0 %v2865
      %3807 = vmatprep.subr.bf16.mxu0 %v2870
      %3808 = vmatpush1.bf16.msra.mxu0 %v2869
      %3809 = vmatprep.subr.bf16.mxu0 %v2874
      %3810 = vmatpush1.bf16.msra.mxu0 %v2873
      %3811 = vmatprep.subr.bf16.mxu0 %v2878
      %3812 = vmatpush1.bf16.msra.mxu0 %v2877
      %3813 = vmatprep.subr.bf16.mxu0 %v2882
      %3814 = vmatpush1.bf16.msra.mxu0 %v2881
      %3815 = vmatprep.subr.bf16.mxu0 %v2886
      %3816 = vmatpush1.bf16.msra.mxu0 %v2885
      %3817 = vmatprep.subr.bf16.mxu0 %v2890
      %3818 = vmatpush1.bf16.msra.mxu0 %v2889
      %3819 = vmatprep.mubr.bf16.mxu0 %v858
      %3820 = vmatmul.mubr.bf16.gmra.mrb[0].mxu0 %v857
      %v3821 = vpop.f32.mrb[0].mxu0
      %v3822 = vadd.f32 %v3769, %v3821
      %v3823 = vpop.f32.mrb[0].mxu0
      %v3824 = vadd.f32 %v3771, %v3823
      %v3825 = vpop.f32.mrb[0].mxu0
      %v3826 = vadd.f32 %v3773, %v3825
      %v3827 = vpop.f32.mrb[0].mxu0
      %v3828 = vadd.f32 %v3775, %v3827
      %3829 = vmatprep.mubr.bf16.mxu0 %v874
      %3830 = vmatmul.mubr.bf16.gmra.mrb[0].mxu0 %v873
      %v3831 = vpop.f32.mrb[0].mxu0
      %v3832 = vadd.f32 %v3779, %v3831
      %v3833 = vpop.f32.mrb[0].mxu0
      %v3834 = vadd.f32 %v3781, %v3833
      %v3835 = vpop.f32.mrb[0].mxu0
      %v3836 = vadd.f32 %v3783, %v3835
      %v3837 = vpop.f32.mrb[0].mxu0
      %v3838 = vadd.f32 %v3785, %v3837
      %3839 = vdwg.mxu0
      %3840 = vmatprep.subr.bf16.mxu0 %v2894
      %3841 = vmatpush1.bf16.msra.mxu0 %v2893
      %3842 = vmatprep.subr.bf16.mxu0 %v2898
      %3843 = vmatpush1.bf16.msra.mxu0 %v2897
      %3844 = vmatprep.subr.bf16.mxu0 %v2902
      %3845 = vmatpush1.bf16.msra.mxu0 %v2901
      %3846 = vmatprep.subr.bf16.mxu0 %v2906
      %3847 = vmatpush1.bf16.msra.mxu0 %v2905
      %3848 = vmatprep.subr.bf16.mxu0 %v2910
      %3849 = vmatpush1.bf16.msra.mxu0 %v2909
      %3850 = vmatprep.subr.bf16.mxu0 %v2914
      %3851 = vmatpush1.bf16.msra.mxu0 %v2913
      %3852 = vmatprep.subr.bf16.mxu0 %v2918
      %3853 = vmatpush1.bf16.msra.mxu0 %v2917
      %3854 = vmatprep.subr.bf16.mxu0 %v2922
      %3855 = vmatpush1.bf16.msra.mxu0 %v2921
      %3856 = vmatprep.subr.bf16.mxu0 %v2926
      %3857 = vmatpush1.bf16.msra.mxu0 %v2925
      %3858 = vmatprep.subr.bf16.mxu0 %v2930
      %3859 = vmatpush1.bf16.msra.mxu0 %v2929
      %3860 = vmatprep.subr.bf16.mxu0 %v2934
      %3861 = vmatpush1.bf16.msra.mxu0 %v2933
      %3862 = vmatprep.subr.bf16.mxu0 %v2938
      %3863 = vmatpush1.bf16.msra.mxu0 %v2937
      %3864 = vmatprep.subr.bf16.mxu0 %v2942
      %3865 = vmatpush1.bf16.msra.mxu0 %v2941
      %3866 = vmatprep.subr.bf16.mxu0 %v2946
      %3867 = vmatpush1.bf16.msra.mxu0 %v2945
      %3868 = vmatprep.subr.bf16.mxu0 %v2950
      %3869 = vmatpush1.bf16.msra.mxu0 %v2949
      %3870 = vmatprep.subr.bf16.mxu0 %v2954
      %3871 = vmatpush1.bf16.msra.mxu0 %v2953
      %3872 = vmatprep.mubr.bf16.mxu0 %v860
      %3873 = vmatmul.mubr.bf16.gmra.mrb[0].mxu0 %v859
      %v3874 = vpop.f32.mrb[0].mxu0
      %v3875 = vadd.f32 %v3822, %v3874
      %v3876 = vpop.f32.mrb[0].mxu0
      %v3877 = vadd.f32 %v3824, %v3876
      %v3878 = vpop.f32.mrb[0].mxu0
      %v3879 = vadd.f32 %v3826, %v3878
      %v3880 = vpop.f32.mrb[0].mxu0
      %v3881 = vadd.f32 %v3828, %v3880
      %3882 = vmatprep.mubr.bf16.mxu0 %v876
      %3883 = vmatmul.mubr.bf16.gmra.mrb[0].mxu0 %v875
      %v3884 = vpop.f32.mrb[0].mxu0
      %v3885 = vadd.f32 %v3832, %v3884
      %v3886 = vpop.f32.mrb[0].mxu0
      %v3887 = vadd.f32 %v3834, %v3886
      %v3888 = vpop.f32.mrb[0].mxu0
      %v3889 = vadd.f32 %v3836, %v3888
      %v3890 = vpop.f32.mrb[0].mxu0
      %v3891 = vadd.f32 %v3838, %v3890
      %3892 = vdwg.mxu0
      %3893 = vmatprep.subr.bf16.mxu0 %v2448
      %3894 = vmatpush1.bf16.msra.mxu0 %v2447
      %3895 = vmatprep.subr.bf16.mxu0 %v2452
      %3896 = vmatpush1.bf16.msra.mxu0 %v2451
      %3897 = vmatprep.subr.bf16.mxu0 %v2456
      %3898 = vmatpush1.bf16.msra.mxu0 %v2455
      %3899 = vmatprep.subr.bf16.mxu0 %v2460
      %3900 = vmatpush1.bf16.msra.mxu0 %v2459
      %3901 = vmatprep.subr.bf16.mxu0 %v2464
      %3902 = vmatpush1.bf16.msra.mxu0 %v2463
      %3903 = vmatprep.subr.bf16.mxu0 %v2468
      %3904 = vmatpush1.bf16.msra.mxu0 %v2467
      %3905 = vmatprep.subr.bf16.mxu0 %v2472
      %3906 = vmatpush1.bf16.msra.mxu0 %v2471
      %3907 = vmatprep.subr.bf16.mxu0 %v2476
      %3908 = vmatpush1.bf16.msra.mxu0 %v2475
      %3909 = vmatprep.subr.bf16.mxu0 %v2480
      %3910 = vmatpush1.bf16.msra.mxu0 %v2479
      %3911 = vmatprep.subr.bf16.mxu0 %v2484
      %3912 = vmatpush1.bf16.msra.mxu0 %v2483
      %3913 = vmatprep.subr.bf16.mxu0 %v2488
      %3914 = vmatpush1.bf16.msra.mxu0 %v2487
      %3915 = vmatprep.subr.bf16.mxu0 %v2492
      %3916 = vmatpush1.bf16.msra.mxu0 %v2491
      %3917 = vmatprep.subr.bf16.mxu0 %v2496
      %3918 = vmatpush1.bf16.msra.mxu0 %v2495
      %3919 = vmatprep.subr.bf16.mxu0 %v2500
      %3920 = vmatpush1.bf16.msra.mxu0 %v2499
      %3921 = vmatprep.subr.bf16.mxu0 %v2504
      %3922 = vmatpush1.bf16.msra.mxu0 %v2503
      %3923 = vmatprep.subr.bf16.mxu0 %v2508
      %3924 = vmatpush1.bf16.msra.mxu0 %v2507
      %3925 = vmatprep.mubr.bf16.mxu0 %v846
      %3926 = vmatmul.mubr.bf16.gmra.mrb[0].mxu0 %v845
      %v3927 = vpop.f32.mrb[0].mxu0
      %v3928 = vadd.f32 0.0, %v3927
      %v3929 = vpop.f32.mrb[0].mxu0
      %v3930 = vadd.f32 0.0, %v3929
      %v3931 = vpop.f32.mrb[0].mxu0
      %v3932 = vadd.f32 0.0, %v3931
      %v3933 = vpop.f32.mrb[0].mxu0
      %v3934 = vadd.f32 0.0, %v3933
      %3935 = vmatprep.mubr.bf16.mxu0 %v862
      %3936 = vmatmul.mubr.bf16.gmra.mrb[0].mxu0 %v861
      %v3937 = vpop.f32.mrb[0].mxu0
      %v3938 = vadd.f32 0.0, %v3937
      %v3939 = vpop.f32.mrb[0].mxu0
      %v3940 = vadd.f32 0.0, %v3939
      %v3941 = vpop.f32.mrb[0].mxu0
      %v3942 = vadd.f32 0.0, %v3941
      %v3943 = vpop.f32.mrb[0].mxu0
      %v3944 = vadd.f32 0.0, %v3943
      %3945 = vdwg.mxu0
      %3946 = vmatprep.subr.bf16.mxu0 %v2512
      %3947 = vmatpush1.bf16.msra.mxu0 %v2511
      %3948 = vmatprep.subr.bf16.mxu0 %v2516
      %3949 = vmatpush1.bf16.msra.mxu0 %v2515
      %3950 = vmatprep.subr.bf16.mxu0 %v2520
      %3951 = vmatpush1.bf16.msra.mxu0 %v2519
      %3952 = vmatprep.subr.bf16.mxu0 %v2524
      %3953 = vmatpush1.bf16.msra.mxu0 %v2523
      %3954 = vmatprep.subr.bf16.mxu0 %v2528
      %3955 = vmatpush1.bf16.msra.mxu0 %v2527
      %3956 = vmatprep.subr.bf16.mxu0 %v2532
      %3957 = vmatpush1.bf16.msra.mxu0 %v2531
      %3958 = vmatprep.subr.bf16.mxu0 %v2536
      %3959 = vmatpush1.bf16.msra.mxu0 %v2535
      %3960 = vmatprep.subr.bf16.mxu0 %v2540
      %3961 = vmatpush1.bf16.msra.mxu0 %v2539
      %3962 = vmatprep.subr.bf16.mxu0 %v2544
      %3963 = vmatpush1.bf16.msra.mxu0 %v2543
      %3964 = vmatprep.subr.bf16.mxu0 %v2548
      %3965 = vmatpush1.bf16.msra.mxu0 %v2547
      %3966 = vmatprep.subr.bf16.mxu0 %v2552
      %3967 = vmatpush1.bf16.msra.mxu0 %v2551
      %3968 = vmatprep.subr.bf16.mxu0 %v2556
      %3969 = vmatpush1.bf16.msra.mxu0 %v2555
      %3970 = vmatprep.subr.bf16.mxu0 %v2560
      %3971 = vmatpush1.bf16.msra.mxu0 %v2559
      %3972 = vmatprep.subr.bf16.mxu0 %v2564
      %3973 = vmatpush1.bf16.msra.mxu0 %v2563
      %3974 = vmatprep.subr.bf16.mxu0 %v2568
      %3975 = vmatpush1.bf16.msra.mxu0 %v2567
      %3976 = vmatprep.subr.bf16.mxu0 %v2572
      %3977 = vmatpush1.bf16.msra.mxu0 %v2571
      %3978 = vmatprep.mubr.bf16.mxu0 %v848
      %3979 = vmatmul.mubr.bf16.gmra.mrb[0].mxu0 %v847
      %v3980 = vpop.f32.mrb[0].mxu0
      %v3981 = vadd.f32 %v3928, %v3980
      %v3982 = vpop.f32.mrb[0].mxu0
      %v3983 = vadd.f32 %v3930, %v3982
      %v3984 = vpop.f32.mrb[0].mxu0
      %v3985 = vadd.f32 %v3932, %v3984
      %v3986 = vpop.f32.mrb[0].mxu0
      %v3987 = vadd.f32 %v3934, %v3986
      %3988 = vmatprep.mubr.bf16.mxu0 %v864
      %3989 = vmatmul.mubr.bf16.gmra.mrb[0].mxu0 %v863
      %v3990 = vpop.f32.mrb[0].mxu0
      %v3991 = vadd.f32 %v3938, %v3990
      %v3992 = vpop.f32.mrb[0].mxu0
      %v3993 = vadd.f32 %v3940, %v3992
      %v3994 = vpop.f32.mrb[0].mxu0
      %v3995 = vadd.f32 %v3942, %v3994
      %v3996 = vpop.f32.mrb[0].mxu0
      %v3997 = vadd.f32 %v3944, %v3996
      %3998 = vdwg.mxu0
      %3999 = vmatprep.subr.bf16.mxu0 %v2576
      %4000 = vmatpush1.bf16.msra.mxu0 %v2575
      %4001 = vmatprep.subr.bf16.mxu0 %v2580
      %4002 = vmatpush1.bf16.msra.mxu0 %v2579
      %4003 = vmatprep.subr.bf16.mxu0 %v2584
      %4004 = vmatpush1.bf16.msra.mxu0 %v2583
      %4005 = vmatprep.subr.bf16.mxu0 %v2588
      %4006 = vmatpush1.bf16.msra.mxu0 %v2587
      %4007 = vmatprep.subr.bf16.mxu0 %v2592
      %4008 = vmatpush1.bf16.msra.mxu0 %v2591
      %4009 = vmatprep.subr.bf16.mxu0 %v2596
      %4010 = vmatpush1.bf16.msra.mxu0 %v2595
      %4011 = vmatprep.subr.bf16.mxu0 %v2600
      %4012 = vmatpush1.bf16.msra.mxu0 %v2599
      %4013 = vmatprep.subr.bf16.mxu0 %v2604
      %4014 = vmatpush1.bf16.msra.mxu0 %v2603
      %4015 = vmatprep.subr.bf16.mxu0 %v2608
      %4016 = vmatpush1.bf16.msra.mxu0 %v2607
      %4017 = vmatprep.subr.bf16.mxu0 %v2612
      %4018 = vmatpush1.bf16.msra.mxu0 %v2611
      %4019 = vmatprep.subr.bf16.mxu0 %v2616
      %4020 = vmatpush1.bf16.msra.mxu0 %v2615
      %4021 = vmatprep.subr.bf16.mxu0 %v2620
      %4022 = vmatpush1.bf16.msra.mxu0 %v2619
      %4023 = vmatprep.subr.bf16.mxu0 %v2624
      %4024 = vmatpush1.bf16.msra.mxu0 %v2623
      %4025 = vmatprep.subr.bf16.mxu0 %v2628
      %4026 = vmatpush1.bf16.msra.mxu0 %v2627
      %4027 = vmatprep.subr.bf16.mxu0 %v2632
      %4028 = vmatpush1.bf16.msra.mxu0 %v2631
      %4029 = vmatprep.subr.bf16.mxu0 %v2636
      %4030 = vmatpush1.bf16.msra.mxu0 %v2635
      %4031 = vmatprep.mubr.bf16.mxu0 %v850
      %4032 = vmatmul.mubr.bf16.gmra.mrb[0].mxu0 %v849
      %v4033 = vpop.f32.mrb[0].mxu0
      %v4034 = vadd.f32 %v3981, %v4033
      %v4035 = vpop.f32.mrb[0].mxu0
      %v4036 = vadd.f32 %v3983, %v4035
      %v4037 = vpop.f32.mrb[0].mxu0
      %v4038 = vadd.f32 %v3985, %v4037
      %v4039 = vpop.f32.mrb[0].mxu0
      %v4040 = vadd.f32 %v3987, %v4039
      %4041 = vmatprep.mubr.bf16.mxu0 %v866
      %4042 = vmatmul.mubr.bf16.gmra.mrb[0].mxu0 %v865
      %v4043 = vpop.f32.mrb[0].mxu0
      %v4044 = vadd.f32 %v3991, %v4043
      %v4045 = vpop.f32.mrb[0].mxu0
      %v4046 = vadd.f32 %v3993, %v4045
      %v4047 = vpop.f32.mrb[0].mxu0
      %v4048 = vadd.f32 %v3995, %v4047
      %v4049 = vpop.f32.mrb[0].mxu0
      %v4050 = vadd.f32 %v3997, %v4049
      %4051 = vdwg.mxu0
      %4052 = vmatprep.subr.bf16.mxu0 %v2640
      %4053 = vmatpush1.bf16.msra.mxu0 %v2639
      %4054 = vmatprep.subr.bf16.mxu0 %v2644
      %4055 = vmatpush1.bf16.msra.mxu0 %v2643
      %4056 = vmatprep.subr.bf16.mxu0 %v2648
      %4057 = vmatpush1.bf16.msra.mxu0 %v2647
      %4058 = vmatprep.subr.bf16.mxu0 %v2652
      %4059 = vmatpush1.bf16.msra.mxu0 %v2651
      %4060 = vmatprep.subr.bf16.mxu0 %v2656
      %4061 = vmatpush1.bf16.msra.mxu0 %v2655
      %4062 = vmatprep.subr.bf16.mxu0 %v2660
      %4063 = vmatpush1.bf16.msra.mxu0 %v2659
      %4064 = vmatprep.subr.bf16.mxu0 %v2664
      %4065 = vmatpush1.bf16.msra.mxu0 %v2663
      %4066 = vmatprep.subr.bf16.mxu0 %v2668
      %4067 = vmatpush1.bf16.msra.mxu0 %v2667
      %4068 = vmatprep.subr.bf16.mxu0 %v2672
      %4069 = vmatpush1.bf16.msra.mxu0 %v2671
      %4070 = vmatprep.subr.bf16.mxu0 %v2676
      %4071 = vmatpush1.bf16.msra.mxu0 %v2675
      %4072 = vmatprep.subr.bf16.mxu0 %v2680
      %4073 = vmatpush1.bf16.msra.mxu0 %v2679
      %4074 = vmatprep.subr.bf16.mxu0 %v2684
      %4075 = vmatpush1.bf16.msra.mxu0 %v2683
      %4076 = vmatprep.subr.bf16.mxu0 %v2688
      %4077 = vmatpush1.bf16.msra.mxu0 %v2687
      %4078 = vmatprep.subr.bf16.mxu0 %v2692
      %4079 = vmatpush1.bf16.msra.mxu0 %v2691
      %4080 = vmatprep.subr.bf16.mxu0 %v2696
      %4081 = vmatpush1.bf16.msra.mxu0 %v2695
      %4082 = vmatprep.subr.bf16.mxu0 %v2700
      %4083 = vmatpush1.bf16.msra.mxu0 %v2699
      %4084 = vmatprep.mubr.bf16.mxu0 %v852
      %4085 = vmatmul.mubr.bf16.gmra.mrb[0].mxu0 %v851
      %v4086 = vpop.f32.mrb[0].mxu0
      %v4087 = vadd.f32 %v4034, %v4086
      %v4088 = vpop.f32.mrb[0].mxu0
      %v4089 = vadd.f32 %v4036, %v4088
      %v4090 = vpop.f32.mrb[0].mxu0
      %v4091 = vadd.f32 %v4038, %v4090
      %v4092 = vpop.f32.mrb[0].mxu0
      %v4093 = vadd.f32 %v4040, %v4092
      %4094 = vmatprep.mubr.bf16.mxu0 %v868
      %4095 = vmatmul.mubr.bf16.gmra.mrb[0].mxu0 %v867
      %v4096 = vpop.f32.mrb[0].mxu0
      %v4097 = vadd.f32 %v4044, %v4096
      %v4098 = vpop.f32.mrb[0].mxu0
      %v4099 = vadd.f32 %v4046, %v4098
      %v4100 = vpop.f32.mrb[0].mxu0
      %v4101 = vadd.f32 %v4048, %v4100
      %v4102 = vpop.f32.mrb[0].mxu0
      %v4103 = vadd.f32 %v4050, %v4102
      %4104 = vdwg.mxu0
      %4105 = vmatprep.subr.bf16.mxu0 %v2704
      %4106 = vmatpush1.bf16.msra.mxu0 %v2703
      %4107 = vmatprep.subr.bf16.mxu0 %v2708
      %4108 = vmatpush1.bf16.msra.mxu0 %v2707
      %4109 = vmatprep.subr.bf16.mxu0 %v2712
      %4110 = vmatpush1.bf16.msra.mxu0 %v2711
      %4111 = vmatprep.subr.bf16.mxu0 %v2716
      %4112 = vmatpush1.bf16.msra.mxu0 %v2715
      %4113 = vmatprep.subr.bf16.mxu0 %v2720
      %4114 = vmatpush1.bf16.msra.mxu0 %v2719
      %4115 = vmatprep.subr.bf16.mxu0 %v2724
      %4116 = vmatpush1.bf16.msra.mxu0 %v2723
      %4117 = vmatprep.subr.bf16.mxu0 %v2728
      %4118 = vmatpush1.bf16.msra.mxu0 %v2727
      %4119 = vmatprep.subr.bf16.mxu0 %v2732
      %4120 = vmatpush1.bf16.msra.mxu0 %v2731
      %4121 = vmatprep.subr.bf16.mxu0 %v2736
      %4122 = vmatpush1.bf16.msra.mxu0 %v2735
      %4123 = vmatprep.subr.bf16.mxu0 %v2740
      %4124 = vmatpush1.bf16.msra.mxu0 %v2739
      %4125 = vmatprep.subr.bf16.mxu0 %v2744
      %4126 = vmatpush1.bf16.msra.mxu0 %v2743
      %4127 = vmatprep.subr.bf16.mxu0 %v2748
      %4128 = vmatpush1.bf16.msra.mxu0 %v2747
      %4129 = vmatprep.subr.bf16.mxu0 %v2752
      %4130 = vmatpush1.bf16.msra.mxu0 %v2751
      %4131 = vmatprep.subr.bf16.mxu0 %v2756
      %4132 = vmatpush1.bf16.msra.mxu0 %v2755
      %4133 = vmatprep.subr.bf16.mxu0 %v2760
      %4134 = vmatpush1.bf16.msra.mxu0 %v2759
      %4135 = vmatprep.subr.bf16.mxu0 %v2764
      %4136 = vmatpush1.bf16.msra.mxu0 %v2763
      %4137 = vmatprep.mubr.bf16.mxu0 %v854
      %4138 = vmatmul.mubr.bf16.gmra.mrb[0].mxu0 %v853
      %v4139 = vpop.f32.mrb[0].mxu0
      %v4140 = vadd.f32 %v4087, %v4139
      %v4141 = vpop.f32.mrb[0].mxu0
      %v4142 = vadd.f32 %v4089, %v4141
      %v4143 = vpop.f32.mrb[0].mxu0
      %v4144 = vadd.f32 %v4091, %v4143
      %v4145 = vpop.f32.mrb[0].mxu0
      %v4146 = vadd.f32 %v4093, %v4145
      %4147 = vmatprep.mubr.bf16.mxu0 %v870
      %4148 = vmatmul.mubr.bf16.gmra.mrb[0].mxu0 %v869
      %v4149 = vpop.f32.mrb[0].mxu0
      %v4150 = vadd.f32 %v4097, %v4149
      %v4151 = vpop.f32.mrb[0].mxu0
      %v4152 = vadd.f32 %v4099, %v4151
      %v4153 = vpop.f32.mrb[0].mxu0
      %v4154 = vadd.f32 %v4101, %v4153
      %v4155 = vpop.f32.mrb[0].mxu0
      %v4156 = vadd.f32 %v4103, %v4155
      %4157 = vdwg.mxu0
      %4158 = vmatprep.subr.bf16.mxu0 %v2768
      %4159 = vmatpush1.bf16.msra.mxu0 %v2767
      %4160 = vmatprep.subr.bf16.mxu0 %v2772
      %4161 = vmatpush1.bf16.msra.mxu0 %v2771
      %4162 = vmatprep.subr.bf16.mxu0 %v2776
      %4163 = vmatpush1.bf16.msra.mxu0 %v2775
      %4164 = vmatprep.subr.bf16.mxu0 %v2780
      %4165 = vmatpush1.bf16.msra.mxu0 %v2779
      %4166 = vmatprep.subr.bf16.mxu0 %v2784
      %4167 = vmatpush1.bf16.msra.mxu0 %v2783
      %4168 = vmatprep.subr.bf16.mxu0 %v2788
      %4169 = vmatpush1.bf16.msra.mxu0 %v2787
      %4170 = vmatprep.subr.bf16.mxu0 %v2792
      %4171 = vmatpush1.bf16.msra.mxu0 %v2791
      %4172 = vmatprep.subr.bf16.mxu0 %v2796
      %4173 = vmatpush1.bf16.msra.mxu0 %v2795
      %4174 = vmatprep.subr.bf16.mxu0 %v2800
      %4175 = vmatpush1.bf16.msra.mxu0 %v2799
      %4176 = vmatprep.subr.bf16.mxu0 %v2804
      %4177 = vmatpush1.bf16.msra.mxu0 %v2803
      %4178 = vmatprep.subr.bf16.mxu0 %v2808
      %4179 = vmatpush1.bf16.msra.mxu0 %v2807
      %4180 = vmatprep.subr.bf16.mxu0 %v2812
      %4181 = vmatpush1.bf16.msra.mxu0 %v2811
      %4182 = vmatprep.subr.bf16.mxu0 %v2816
      %4183 = vmatpush1.bf16.msra.mxu0 %v2815
      %4184 = vmatprep.subr.bf16.mxu0 %v2820
      %4185 = vmatpush1.bf16.msra.mxu0 %v2819
      %4186 = vmatprep.subr.bf16.mxu0 %v2824
      %4187 = vmatpush1.bf16.msra.mxu0 %v2823
      %4188 = vmatprep.subr.bf16.mxu0 %v2828
      %4189 = vmatpush1.bf16.msra.mxu0 %v2827
      %4190 = vmatprep.mubr.bf16.mxu0 %v856
      %4191 = vmatmul.mubr.bf16.gmra.mrb[0].mxu0 %v855
      %v4192 = vpop.f32.mrb[0].mxu0
      %v4193 = vadd.f32 %v4140, %v4192
      %v4194 = vpop.f32.mrb[0].mxu0
      %v4195 = vadd.f32 %v4142, %v4194
      %v4196 = vpop.f32.mrb[0].mxu0
      %v4197 = vadd.f32 %v4144, %v4196
      %v4198 = vpop.f32.mrb[0].mxu0
      %v4199 = vadd.f32 %v4146, %v4198
      %4200 = vmatprep.mubr.bf16.mxu0 %v872
      %4201 = vmatmul.mubr.bf16.gmra.mrb[0].mxu0 %v871
      %v4202 = vpop.f32.mrb[0].mxu0
      %v4203 = vadd.f32 %v4150, %v4202
      %v4204 = vpop.f32.mrb[0].mxu0
      %v4205 = vadd.f32 %v4152, %v4204
      %v4206 = vpop.f32.mrb[0].mxu0
      %v4207 = vadd.f32 %v4154, %v4206
      %v4208 = vpop.f32.mrb[0].mxu0
      %v4209 = vadd.f32 %v4156, %v4208
      %4210 = vdwg.mxu0
      %4211 = vmatprep.subr.bf16.mxu0 %v2832
      %4212 = vmatpush1.bf16.msra.mxu0 %v2831
      %4213 = vmatprep.subr.bf16.mxu0 %v2836
      %4214 = vmatpush1.bf16.msra.mxu0 %v2835
      %4215 = vmatprep.subr.bf16.mxu0 %v2840
      %4216 = vmatpush1.bf16.msra.mxu0 %v2839
      %4217 = vmatprep.subr.bf16.mxu0 %v2844
      %4218 = vmatpush1.bf16.msra.mxu0 %v2843
      %4219 = vmatprep.subr.bf16.mxu0 %v2848
      %4220 = vmatpush1.bf16.msra.mxu0 %v2847
      %4221 = vmatprep.subr.bf16.mxu0 %v2852
      %4222 = vmatpush1.bf16.msra.mxu0 %v2851
      %4223 = vmatprep.subr.bf16.mxu0 %v2856
      %4224 = vmatpush1.bf16.msra.mxu0 %v2855
      %4225 = vmatprep.subr.bf16.mxu0 %v2860
      %4226 = vmatpush1.bf16.msra.mxu0 %v2859
      %4227 = vmatprep.subr.bf16.mxu0 %v2864
      %4228 = vmatpush1.bf16.msra.mxu0 %v2863
      %4229 = vmatprep.subr.bf16.mxu0 %v2868
      %4230 = vmatpush1.bf16.msra.mxu0 %v2867
      %4231 = vmatprep.subr.bf16.mxu0 %v2872
      %4232 = vmatpush1.bf16.msra.mxu0 %v2871
      %4233 = vmatprep.subr.bf16.mxu0 %v2876
      %4234 = vmatpush1.bf16.msra.mxu0 %v2875
      %4235 = vmatprep.subr.bf16.mxu0 %v2880
      %4236 = vmatpush1.bf16.msra.mxu0 %v2879
      %4237 = vmatprep.subr.bf16.mxu0 %v2884
      %4238 = vmatpush1.bf16.msra.mxu0 %v2883
      %4239 = vmatprep.subr.bf16.mxu0 %v2888
      %4240 = vmatpush1.bf16.msra.mxu0 %v2887
      %4241 = vmatprep.subr.bf16.mxu0 %v2892
      %4242 = vmatpush1.bf16.msra.mxu0 %v2891
      %4243 = vmatprep.mubr.bf16.mxu0 %v858
      %4244 = vmatmul.mubr.bf16.gmra.mrb[0].mxu0 %v857
      %v4245 = vpop.f32.mrb[0].mxu0
      %v4246 = vadd.f32 %v4193, %v4245
      %v4247 = vpop.f32.mrb[0].mxu0
      %v4248 = vadd.f32 %v4195, %v4247
      %v4249 = vpop.f32.mrb[0].mxu0
      %v4250 = vadd.f32 %v4197, %v4249
      %v4251 = vpop.f32.mrb[0].mxu0
      %v4252 = vadd.f32 %v4199, %v4251
      %4253 = vmatprep.mubr.bf16.mxu0 %v874
      %4254 = vmatmul.mubr.bf16.gmra.mrb[0].mxu0 %v873
      %v4255 = vpop.f32.mrb[0].mxu0
      %v4256 = vadd.f32 %v4203, %v4255
      %v4257 = vpop.f32.mrb[0].mxu0
      %v4258 = vadd.f32 %v4205, %v4257
      %v4259 = vpop.f32.mrb[0].mxu0
      %v4260 = vadd.f32 %v4207, %v4259
      %v4261 = vpop.f32.mrb[0].mxu0
      %v4262 = vadd.f32 %v4209, %v4261
      %4263 = vdwg.mxu0
      %4264 = vmatprep.subr.bf16.mxu0 %v2896
      %4265 = vmatpush1.bf16.msra.mxu0 %v2895
      %4266 = vmatprep.subr.bf16.mxu0 %v2900
      %4267 = vmatpush1.bf16.msra.mxu0 %v2899
      %4268 = vmatprep.subr.bf16.mxu0 %v2904
      %4269 = vmatpush1.bf16.msra.mxu0 %v2903
      %4270 = vmatprep.subr.bf16.mxu0 %v2908
      %4271 = vmatpush1.bf16.msra.mxu0 %v2907
      %4272 = vmatprep.subr.bf16.mxu0 %v2912
      %4273 = vmatpush1.bf16.msra.mxu0 %v2911
      %4274 = vmatprep.subr.bf16.mxu0 %v2916
      %4275 = vmatpush1.bf16.msra.mxu0 %v2915
      %4276 = vmatprep.subr.bf16.mxu0 %v2920
      %4277 = vmatpush1.bf16.msra.mxu0 %v2919
      %4278 = vmatprep.subr.bf16.mxu0 %v2924
      %4279 = vmatpush1.bf16.msra.mxu0 %v2923
      %4280 = vmatprep.subr.bf16.mxu0 %v2928
      %4281 = vmatpush1.bf16.msra.mxu0 %v2927
      %4282 = vmatprep.subr.bf16.mxu0 %v2932
      %4283 = vmatpush1.bf16.msra.mxu0 %v2931
      %4284 = vmatprep.subr.bf16.mxu0 %v2936
      %4285 = vmatpush1.bf16.msra.mxu0 %v2935
      %4286 = vmatprep.subr.bf16.mxu0 %v2940
      %4287 = vmatpush1.bf16.msra.mxu0 %v2939
      %4288 = vmatprep.subr.bf16.mxu0 %v2944
      %4289 = vmatpush1.bf16.msra.mxu0 %v2943
      %4290 = vmatprep.subr.bf16.mxu0 %v2948
      %4291 = vmatpush1.bf16.msra.mxu0 %v2947
      %4292 = vmatprep.subr.bf16.mxu0 %v2952
      %4293 = vmatpush1.bf16.msra.mxu0 %v2951
      %4294 = vmatprep.subr.bf16.mxu0 %v2956
      %4295 = vmatpush1.bf16.msra.mxu0 %v2955
      %4296 = vmatprep.mubr.bf16.mxu0 %v860
      %4297 = vmatmul.mubr.bf16.gmra.mrb[0].mxu0 %v859
      %v4298 = vpop.f32.mrb[0].mxu0
      %v4299 = vadd.f32 %v4246, %v4298
      %v4300 = vpop.f32.mrb[0].mxu0
      %v4301 = vadd.f32 %v4248, %v4300
      %v4302 = vpop.f32.mrb[0].mxu0
      %v4303 = vadd.f32 %v4250, %v4302
      %v4304 = vpop.f32.mrb[0].mxu0
      %v4305 = vadd.f32 %v4252, %v4304
      %4306 = vmatprep.mubr.bf16.mxu0 %v876
      %4307 = vmatmul.mubr.bf16.gmra.mrb[0].mxu0 %v875
      %v4308 = vpop.f32.mrb[0].mxu0
      %v4309 = vadd.f32 %v4256, %v4308
      %v4310 = vpop.f32.mrb[0].mxu0
      %v4311 = vadd.f32 %v4258, %v4310
      %v4312 = vpop.f32.mrb[0].mxu0
      %v4313 = vadd.f32 %v4260, %v4312
      %v4314 = vpop.f32.mrb[0].mxu0
      %v4315 = vadd.f32 %v4262, %v4314
      %4316 = vdwg.mxu0
      %vm4317 = vcmp.gt.f32.partialorder %v3875, 0.0
      %vm4318 = vcmp.gt.f32.partialorder %v3877, 0.0
      %vm4319 = vcmp.gt.f32.partialorder %v4299, 0.0
      %vm4320 = vcmp.gt.f32.partialorder %v4301, 0.0
      %vm4321 = vcmp.gt.f32.partialorder %v3879, 0.0
      %vm4322 = vcmp.gt.f32.partialorder %v3881, 0.0
      %vm4323 = vcmp.gt.f32.partialorder %v4303, 0.0
      %vm4324 = vcmp.gt.f32.partialorder %v4305, 0.0
      %vm4325 = vcmp.gt.f32.partialorder %v3885, 0.0
      %vm4326 = vcmp.gt.f32.partialorder %v3887, 0.0
      %vm4327 = vcmp.gt.f32.partialorder %v4309, 0.0
      %vm4328 = vcmp.gt.f32.partialorder %v4311, 0.0
      %vm4329 = vcmp.gt.f32.partialorder %v3889, 0.0
      %vm4330 = vcmp.gt.f32.partialorder %v3891, 0.0
      %vm4331 = vcmp.gt.f32.partialorder %v4313, 0.0
      %vm4332 = vcmp.gt.f32.partialorder %v4315, 0.0
      %v4333 = vmul.f32 %v3875, 0.01
      %v4334 = vmul.f32 %v3877, 0.01
      %v4335 = vmul.f32 %v4299, 0.01
      %v4336 = vmul.f32 %v4301, 0.01
      %v4337 = vmul.f32 %v3879, 0.01
      %v4338 = vmul.f32 %v3881, 0.01
      %v4339 = vmul.f32 %v4303, 0.01
      %v4340 = vmul.f32 %v4305, 0.01
      %v4341 = vmul.f32 %v3885, 0.01
      %v4342 = vmul.f32 %v3887, 0.01
      %v4343 = vmul.f32 %v4309, 0.01
      %v4344 = vmul.f32 %v4311, 0.01
      %v4345 = vmul.f32 %v3889, 0.01
      %v4346 = vmul.f32 %v3891, 0.01
      %v4347 = vmul.f32 %v4313, 0.01
      %v4348 = vmul.f32 %v4315, 0.01
      %v4349 = vsel %vm4317, %v3875, %v4333
      %v4350 = vsel %vm4318, %v3877, %v4334
      %v4351 = vsel %vm4319, %v4299, %v4335
      %v4352 = vsel %vm4320, %v4301, %v4336
      %v4353 = vsel %vm4321, %v3879, %v4337
      %v4354 = vsel %vm4322, %v3881, %v4338
      %v4355 = vsel %vm4323, %v4303, %v4339
      %v4356 = vsel %vm4324, %v4305, %v4340
      %v4357 = vsel %vm4325, %v3885, %v4341
      %v4358 = vsel %vm4326, %v3887, %v4342
      %v4359 = vsel %vm4327, %v4309, %v4343
      %v4360 = vsel %vm4328, %v4311, %v4344
      %v4361 = vsel %vm4329, %v3889, %v4345
      %v4362 = vsel %vm4330, %v3891, %v4346
      %v4363 = vsel %vm4331, %v4313, %v4347
      %v4364 = vsel %vm4332, %v4315, %v4348
      %v4365 = vpack.c.bf16 %v4353, %v4349
      %v4366 = vpack.c.bf16 %v4354, %v4350
      %v4367 = vpack.c.bf16 %v4355, %v4351
      %v4368 = vpack.c.bf16 %v4356, %v4352
      %v4369 = vpack.c.bf16 %v4361, %v4357
      %v4370 = vpack.c.bf16 %v4362, %v4358
      %v4371 = vpack.c.bf16 %v4363, %v4359
      %v4372 = vpack.c.bf16 %v4364, %v4360
      %v4373 = vld [vmem:[%s2] sm:$0xf]
      %v4374 = vld [vmem:[%s2 + $0x4] sm:$0xf]
      %v4375 = vld [vmem:[%s2 + $0x8] sm:$0xf]
      %v4376 = vld [vmem:[%s2 + $0xc] sm:$0xf]
      %v4377 = vld [vmem:[%s2 + $0x10] sm:$0xf]
      %v4378 = vld [vmem:[%s2 + $0x14] sm:$0xf]
      %v4379 = vld [vmem:[%s2 + $0x18] sm:$0xf]
      %v4380 = vld [vmem:[%s2 + $0x1c] sm:$0xf]
      %v4381 = vld [vmem:[%s2 + $0x20] sm:$0xf]
      %v4382 = vld [vmem:[%s2 + $0x24] sm:$0xf]
      %v4383 = vld [vmem:[%s2 + $0x28] sm:$0xf]
      %v4384 = vld [vmem:[%s2 + $0x2c] sm:$0xf]
      %v4385 = vld [vmem:[%s2 + $0x30] sm:$0xf]
      %v4386 = vld [vmem:[%s2 + $0x34] sm:$0xf]
      %v4387 = vld [vmem:[%s2 + $0x38] sm:$0xf]
      %v4388 = vld [vmem:[%s2 + $0x3c] sm:$0xf]
      %v4389 = vld [vmem:[%s2 + $0x40] sm:$0xf]
      %v4390 = vld [vmem:[%s2 + $0x44] sm:$0xf]
      %v4391 = vld [vmem:[%s2 + $0x48] sm:$0xf]
      %v4392 = vld [vmem:[%s2 + $0x4c] sm:$0xf]
      %v4393 = vld [vmem:[%s2 + $0x50] sm:$0xf]
      %v4394 = vld [vmem:[%s2 + $0x54] sm:$0xf]
      %v4395 = vld [vmem:[%s2 + $0x58] sm:$0xf]
      %v4396 = vld [vmem:[%s2 + $0x5c] sm:$0xf]
      %v4397 = vld [vmem:[%s2 + $0x60] sm:$0xf]
      %v4398 = vld [vmem:[%s2 + $0x64] sm:$0xf]
      %v4399 = vld [vmem:[%s2 + $0x68] sm:$0xf]
      %v4400 = vld [vmem:[%s2 + $0x6c] sm:$0xf]
      %v4401 = vld [vmem:[%s2 + $0x70] sm:$0xf]
      %v4402 = vld [vmem:[%s2 + $0x74] sm:$0xf]
      %v4403 = vld [vmem:[%s2 + $0x78] sm:$0xf]
      %v4404 = vld [vmem:[%s2 + $0x7c] sm:$0xf]
      %v4405 = vld [vmem:[%s2 + $0x80] sm:$0xf]
      %v4406 = vld [vmem:[%s2 + $0x84] sm:$0xf]
      %v4407 = vld [vmem:[%s2 + $0x88] sm:$0xf]
      %v4408 = vld [vmem:[%s2 + $0x8c] sm:$0xf]
      %v4409 = vld [vmem:[%s2 + $0x90] sm:$0xf]
      %v4410 = vld [vmem:[%s2 + $0x94] sm:$0xf]
      %v4411 = vld [vmem:[%s2 + $0x98] sm:$0xf]
      %v4412 = vld [vmem:[%s2 + $0x9c] sm:$0xf]
      %v4413 = vld [vmem:[%s2 + $0xa0] sm:$0xf]
      %v4414 = vld [vmem:[%s2 + $0xa4] sm:$0xf]
      %v4415 = vld [vmem:[%s2 + $0xa8] sm:$0xf]
      %v4416 = vld [vmem:[%s2 + $0xac] sm:$0xf]
      %v4417 = vld [vmem:[%s2 + $0xb0] sm:$0xf]
      %v4418 = vld [vmem:[%s2 + $0xb4] sm:$0xf]
      %v4419 = vld [vmem:[%s2 + $0xb8] sm:$0xf]
      %v4420 = vld [vmem:[%s2 + $0xbc] sm:$0xf]
      %v4421 = vld [vmem:[%s2 + $0xc0] sm:$0xf]
      %v4422 = vld [vmem:[%s2 + $0xc4] sm:$0xf]
      %v4423 = vld [vmem:[%s2 + $0xc8] sm:$0xf]
      %v4424 = vld [vmem:[%s2 + $0xcc] sm:$0xf]
      %v4425 = vld [vmem:[%s2 + $0xd0] sm:$0xf]
      %v4426 = vld [vmem:[%s2 + $0xd4] sm:$0xf]
      %v4427 = vld [vmem:[%s2 + $0xd8] sm:$0xf]
      %v4428 = vld [vmem:[%s2 + $0xdc] sm:$0xf]
      %v4429 = vld [vmem:[%s2 + $0xe0] sm:$0xf]
      %v4430 = vld [vmem:[%s2 + $0xe4] sm:$0xf]
      %v4431 = vld [vmem:[%s2 + $0xe8] sm:$0xf]
      %v4432 = vld [vmem:[%s2 + $0xec] sm:$0xf]
      %v4433 = vld [vmem:[%s2 + $0xf0] sm:$0xf]
      %v4434 = vld [vmem:[%s2 + $0xf4] sm:$0xf]
      %v4435 = vld [vmem:[%s2 + $0xf8] sm:$0xf]
      %v4436 = vld [vmem:[%s2 + $0xfc] sm:$0xf]
      %v4501 = vunpack.c.l.b16 %v4373
      %v4502 = vunpack.c.l.b16 %v4374
      %v4503 = vunpack.c.l.b16 %v4375
      %v4504 = vunpack.c.l.b16 %v4376
      %v4505 = vunpack.c.l.b16 %v4377
      %v4506 = vunpack.c.l.b16 %v4378
      %v4507 = vunpack.c.l.b16 %v4379
      %v4508 = vunpack.c.l.b16 %v4380
      %v4509 = vunpack.c.l.b16 %v4381
      %v4510 = vunpack.c.l.b16 %v4382
      %v4511 = vunpack.c.l.b16 %v4383
      %v4512 = vunpack.c.l.b16 %v4384
      %v4513 = vunpack.c.l.b16 %v4385
      %v4514 = vunpack.c.l.b16 %v4386
      %v4515 = vunpack.c.l.b16 %v4387
      %v4516 = vunpack.c.l.b16 %v4388
      %v4517 = vunpack.c.l.b16 %v4389
      %v4518 = vunpack.c.l.b16 %v4390
      %v4519 = vunpack.c.l.b16 %v4391
      %v4520 = vunpack.c.l.b16 %v4392
      %v4521 = vunpack.c.l.b16 %v4393
      %v4522 = vunpack.c.l.b16 %v4394
      %v4523 = vunpack.c.l.b16 %v4395
      %v4524 = vunpack.c.l.b16 %v4396
      %v4525 = vunpack.c.l.b16 %v4397
      %v4526 = vunpack.c.l.b16 %v4398
      %v4527 = vunpack.c.l.b16 %v4399
      %v4528 = vunpack.c.l.b16 %v4400
      %v4529 = vunpack.c.l.b16 %v4401
      %v4530 = vunpack.c.l.b16 %v4402
      %v4531 = vunpack.c.l.b16 %v4403
      %v4532 = vunpack.c.l.b16 %v4404
      %v4533 = vunpack.c.l.b16 %v4405
      %v4534 = vunpack.c.l.b16 %v4406
      %v4535 = vunpack.c.l.b16 %v4407
      %v4536 = vunpack.c.l.b16 %v4408
      %v4537 = vunpack.c.l.b16 %v4409
      %v4538 = vunpack.c.l.b16 %v4410
      %v4539 = vunpack.c.l.b16 %v4411
      %v4540 = vunpack.c.l.b16 %v4412
      %v4541 = vunpack.c.l.b16 %v4413
      %v4542 = vunpack.c.l.b16 %v4414
      %v4543 = vunpack.c.l.b16 %v4415
      %v4544 = vunpack.c.l.b16 %v4416
      %v4545 = vunpack.c.l.b16 %v4417
      %v4546 = vunpack.c.l.b16 %v4418
      %v4547 = vunpack.c.l.b16 %v4419
      %v4548 = vunpack.c.l.b16 %v4420
      %v4549 = vunpack.c.l.b16 %v4421
      %v4550 = vunpack.c.l.b16 %v4422
      %v4551 = vunpack.c.l.b16 %v4423
      %v4552 = vunpack.c.l.b16 %v4424
      %v4553 = vunpack.c.l.b16 %v4425
      %v4554 = vunpack.c.l.b16 %v4426
      %v4555 = vunpack.c.l.b16 %v4427
      %v4556 = vunpack.c.l.b16 %v4428
      %v4557 = vunpack.c.l.b16 %v4429
      %v4558 = vunpack.c.l.b16 %v4430
      %v4559 = vunpack.c.l.b16 %v4431
      %v4560 = vunpack.c.l.b16 %v4432
      %v4561 = vunpack.c.l.b16 %v4433
      %v4562 = vunpack.c.l.b16 %v4434
      %v4563 = vunpack.c.l.b16 %v4435
      %v4564 = vunpack.c.l.b16 %v4436
      %v4565 = vpack.c.b16 %v4502, %v4501
      %v4566 = vpack.c.b16 %v4504, %v4503
      %v4567 = vpack.c.b16 %v4506, %v4505
      %v4568 = vpack.c.b16 %v4508, %v4507
      %v4569 = vpack.c.b16 %v4510, %v4509
      %v4570 = vpack.c.b16 %v4512, %v4511
      %v4571 = vpack.c.b16 %v4514, %v4513
      %v4572 = vpack.c.b16 %v4516, %v4515
      %v4573 = vpack.c.b16 %v4518, %v4517
      %v4574 = vpack.c.b16 %v4520, %v4519
      %v4575 = vpack.c.b16 %v4522, %v4521
      %v4576 = vpack.c.b16 %v4524, %v4523
      %v4577 = vpack.c.b16 %v4526, %v4525
      %v4578 = vpack.c.b16 %v4528, %v4527
      %v4579 = vpack.c.b16 %v4530, %v4529
      %v4580 = vpack.c.b16 %v4532, %v4531
      %v4581 = vpack.c.b16 %v4534, %v4533
      %v4582 = vpack.c.b16 %v4536, %v4535
      %v4583 = vpack.c.b16 %v4538, %v4537
      %v4584 = vpack.c.b16 %v4540, %v4539
      %v4585 = vpack.c.b16 %v4542, %v4541
      %v4586 = vpack.c.b16 %v4544, %v4543
      %v4587 = vpack.c.b16 %v4546, %v4545
      %v4588 = vpack.c.b16 %v4548, %v4547
      %v4589 = vpack.c.b16 %v4550, %v4549
      %v4590 = vpack.c.b16 %v4552, %v4551
      %v4591 = vpack.c.b16 %v4554, %v4553
      %v4592 = vpack.c.b16 %v4556, %v4555
      %v4593 = vpack.c.b16 %v4558, %v4557
      %v4594 = vpack.c.b16 %v4560, %v4559
      %v4595 = vpack.c.b16 %v4562, %v4561
      %v4596 = vpack.c.b16 %v4564, %v4563
      %4629 = vmatprep.subr.bf16.mxu0 0
      %4630 = vmatpush1.bf16.msra.mxu0 %v4565
      %4631 = vmatprep.subr.bf16.mxu0 0
      %4632 = vmatpush1.bf16.msra.mxu0 %v4566
      %4633 = vmatprep.subr.bf16.mxu0 0
      %4634 = vmatpush1.bf16.msra.mxu0 %v4567
      %4635 = vmatprep.subr.bf16.mxu0 0
      %4636 = vmatpush1.bf16.msra.mxu0 %v4568
      %4637 = vmatprep.subr.bf16.mxu0 0
      %4638 = vmatpush1.bf16.msra.mxu0 %v4569
      %4639 = vmatprep.subr.bf16.mxu0 0
      %4640 = vmatpush1.bf16.msra.mxu0 %v4570
      %4641 = vmatprep.subr.bf16.mxu0 0
      %4642 = vmatpush1.bf16.msra.mxu0 %v4571
      %4643 = vmatprep.subr.bf16.mxu0 0
      %4644 = vmatpush1.bf16.msra.mxu0 %v4572
      %4645 = vmatprep.subr.bf16.mxu0 0
      %4646 = vmatpush1.bf16.msra.mxu0 %v4573
      %4647 = vmatprep.subr.bf16.mxu0 0
      %4648 = vmatpush1.bf16.msra.mxu0 %v4574
      %4649 = vmatprep.subr.bf16.mxu0 0
      %4650 = vmatpush1.bf16.msra.mxu0 %v4575
      %4651 = vmatprep.subr.bf16.mxu0 0
      %4652 = vmatpush1.bf16.msra.mxu0 %v4576
      %4653 = vmatprep.subr.bf16.mxu0 0
      %4654 = vmatpush1.bf16.msra.mxu0 %v4577
      %4655 = vmatprep.subr.bf16.mxu0 0
      %4656 = vmatpush1.bf16.msra.mxu0 %v4578
      %4657 = vmatprep.subr.bf16.mxu0 0
      %4658 = vmatpush1.bf16.msra.mxu0 %v4579
      %4659 = vmatprep.subr.bf16.mxu0 0
      %4660 = vmatpush1.bf16.msra.mxu0 %v4580
      %4661 = vmatprep.mubr.bf16.mxu0 %v4366
      %4662 = vmatmul.mubr.bf16.gmra.mrb[0].mxu0 %v4365
      %v4663 = vpop.f32.mrb[0].mxu0
      %v4664 = vadd.f32 0.0, %v4663
      %v4665 = vpop.f32.mrb[0].mxu0
      %v4666 = vpop.f32.mrb[0].mxu0
      %v4667 = vadd.f32 0.0, %v4666
      %v4668 = vpop.f32.mrb[0].mxu0
      %4669 = vmatprep.mubr.bf16.mxu0 %v4370
      %4670 = vmatmul.mubr.bf16.gmra.mrb[0].mxu0 %v4369
      %v4671 = vpop.f32.mrb[0].mxu0
      %v4672 = vadd.f32 0.0, %v4671
      %v4673 = vpop.f32.mrb[0].mxu0
      %v4674 = vpop.f32.mrb[0].mxu0
      %v4675 = vadd.f32 0.0, %v4674
      %v4676 = vpop.f32.mrb[0].mxu0
      %4677 = vdwg.mxu0
      %4678 = vmatprep.subr.bf16.mxu0 0
      %4679 = vmatpush1.bf16.msra.mxu0 %v4581
      %4680 = vmatprep.subr.bf16.mxu0 0
      %4681 = vmatpush1.bf16.msra.mxu0 %v4582
      %4682 = vmatprep.subr.bf16.mxu0 0
      %4683 = vmatpush1.bf16.msra.mxu0 %v4583
      %4684 = vmatprep.subr.bf16.mxu0 0
      %4685 = vmatpush1.bf16.msra.mxu0 %v4584
      %4686 = vmatprep.subr.bf16.mxu0 0
      %4687 = vmatpush1.bf16.msra.mxu0 %v4585
      %4688 = vmatprep.subr.bf16.mxu0 0
      %4689 = vmatpush1.bf16.msra.mxu0 %v4586
      %4690 = vmatprep.subr.bf16.mxu0 0
      %4691 = vmatpush1.bf16.msra.mxu0 %v4587
      %4692 = vmatprep.subr.bf16.mxu0 0
      %4693 = vmatpush1.bf16.msra.mxu0 %v4588
      %4694 = vmatprep.subr.bf16.mxu0 0
      %4695 = vmatpush1.bf16.msra.mxu0 %v4589
      %4696 = vmatprep.subr.bf16.mxu0 0
      %4697 = vmatpush1.bf16.msra.mxu0 %v4590
      %4698 = vmatprep.subr.bf16.mxu0 0
      %4699 = vmatpush1.bf16.msra.mxu0 %v4591
      %4700 = vmatprep.subr.bf16.mxu0 0
      %4701 = vmatpush1.bf16.msra.mxu0 %v4592
      %4702 = vmatprep.subr.bf16.mxu0 0
      %4703 = vmatpush1.bf16.msra.mxu0 %v4593
      %4704 = vmatprep.subr.bf16.mxu0 0
      %4705 = vmatpush1.bf16.msra.mxu0 %v4594
      %4706 = vmatprep.subr.bf16.mxu0 0
      %4707 = vmatpush1.bf16.msra.mxu0 %v4595
      %4708 = vmatprep.subr.bf16.mxu0 0
      %4709 = vmatpush1.bf16.msra.mxu0 %v4596
      %4710 = vmatprep.mubr.bf16.mxu0 %v4368
      %4711 = vmatmul.mubr.bf16.gmra.mrb[0].mxu0 %v4367
      %v4712 = vpop.f32.mrb[0].mxu0
      %v4713 = vadd.f32 %v4664, %v4712
      %v4714 = vpop.f32.mrb[0].mxu0
      %v4715 = vpop.f32.mrb[0].mxu0
      %v4716 = vadd.f32 %v4667, %v4715
      %v4717 = vpop.f32.mrb[0].mxu0
      %4718 = vmatprep.mubr.bf16.mxu0 %v4372
      %4719 = vmatmul.mubr.bf16.gmra.mrb[0].mxu0 %v4371
      %v4720 = vpop.f32.mrb[0].mxu0
      %v4721 = vadd.f32 %v4672, %v4720
      %v4722 = vpop.f32.mrb[0].mxu0
      %v4723 = vpop.f32.mrb[0].mxu0
      %v4724 = vadd.f32 %v4675, %v4723
      %v4725 = vpop.f32.mrb[0].mxu0
      %4726 = vdwg.mxu0
      %vm4727 = vcmp.gt.f32.partialorder %v4713, 0.0
      %vm4728 = vcmp.gt.f32.partialorder %v4716, 0.0
      %vm4729 = vcmp.gt.f32.partialorder %v4721, 0.0
      %vm4730 = vcmp.gt.f32.partialorder %v4724, 0.0
      %v4731 = vmul.f32 %v4713, 0.01
      %v4732 = vmul.f32 %v4716, 0.01
      %v4733 = vmul.f32 %v4721, 0.01
      %v4734 = vmul.f32 %v4724, 0.01
      %v4735 = vsel %vm4727, %v4713, %v4731
      %v4736 = vsel %vm4728, %v4716, %v4732
      %v4737 = vsel %vm4729, %v4721, %v4733
      %v4738 = vsel %vm4730, %v4724, %v4734
      %v4739 = vld [vmem:[%s3] sm:$0x1]
      %v4740 = vunpack.c.l.bf16 %v4739
      %v4741 = vlaneseq
      %v4742 = vshrl.u32 %v4741, 7
      %v4743 = vsub.s32 0, %v4742
      %v4744 = vrot.slane %v4740, %v4743
      %v4745 = vmul.f32 %v4735, %v4744
      %v4746 = vmul.f32 %v4736, %v4744
      %v4747 = vmul.f32 %v4737, %v4744
      %v4748 = vmul.f32 %v4738, %v4744
      %vm4749 = vcmask 523264
      %v4750 = vsel %vm4749, %v4745, 0.0
      %4751 = vadd.xlane.f32.xlu0 %v4750
      %v4752 = vpop.xlane.xlu0 %4751
      %v4753 = vsel %vm4749, %v4746, 0.0
      %4754 = vadd.xlane.f32.xlu0 %v4753
      %v4755 = vpop.xlane.xlu0 %4754
      %v4756 = vsel %vm4749, %v4747, 0.0
      %4757 = vadd.xlane.f32.xlu0 %v4756
      %v4758 = vpop.xlane.xlu0 %4757
      %v4759 = vsel %vm4749, %v4748, 0.0
      %4760 = vadd.xlane.f32.xlu0 %v4759
      %v4761 = vpop.xlane.xlu0 %4760
      %vm4762 = vcmp.gt.f32.partialorder %v4752, 0.0
      %vm4763 = vcmp.gt.f32.partialorder %v4755, 0.0
      %vm4764 = vcmp.gt.f32.partialorder %v4758, 0.0
      %vm4765 = vcmp.gt.f32.partialorder %v4761, 0.0
      %v4766 = vmul.f32 %v4752, 0.01
      %v4767 = vmul.f32 %v4755, 0.01
      %v4768 = vmul.f32 %v4758, 0.01
      %v4769 = vmul.f32 %v4761, 0.01
      %v4770 = vsel %vm4762, %v4752, %v4766
      %v4771 = vsel %vm4763, %v4755, %v4767
      %v4772 = vsel %vm4764, %v4758, %v4768
      %v4773 = vsel %vm4765, %v4761, %v4769
      %vm4774 = vcmask 7168
      %4775 = vst.msk [vmem:[%s202] sm:$0xff] %vm4774, %v4770
      %4776 = vst.msk [vmem:[%s202 + $0x8] sm:$0xff] %vm4774, %v4771
      %4777 = vst.msk [vmem:[%s202 + $0x10] sm:$0xff] %vm4774, %v4772
      %4778 = vst.msk [vmem:[%s202 + $0x18] sm:$0xff] %vm4774, %v4773
      %s4779 = smul.u32 4, %s15
      %p4780 = scmp.lt.s32.totalorder %s4779, 7
      %s4781 = scalar_select %p4780, %s4779, 7
      %s4782 = smul.addr %s4781, 8
      %s4783 = scalar_lea.vmem %s4, %s4782
      // Predicated region
      $region37: #{mlp_forward.1} parent=35 // pred_check
        %p4784 = pneg %p122
      $region38: #{mlp_forward.1} parent=35 // pred_check_branch
        %4786 = sbr.rel (%p4784) target = $region40
      $region39: #{mlp_forward.1} parent=35 // pred_region
        %s4787 = smul.u32 4, %s15
      $region40: #{mlp_forward.1} parent=35 // pred_fallthru
        _
    $region36: #{mlp_forward.1} parent=5 // pred_fallthru
      _
    %p4788 = scmp.le.s32.totalorder 2, %s10
    // Predicated region
    $region41: #{mlp_forward.1} parent=5 // pred_check
      %p4789 = pneg %p4788
    $region42: #{mlp_forward.1} parent=5 // pred_check_branch
      %4791 = sbr.rel (%p4789) target = $region44
    $region43: #{mlp_forward.1} parent=5 // pred_region
      %s4792 = ssub.s32 %s10, 2
      // Predicated region
      $region45: #{mlp_forward.1} parent=43 // pred_check
        %p4793 = pneg %p128
      $region46: #{mlp_forward.1} parent=43 // pred_check_branch
        %4795 = sbr.rel (%p4793) target = $region48
      $region47: #{mlp_forward.1} parent=43 // pred_region
        %s4796 = smul.u32 4, %s16
        %p4797 = scmp.lt.s32.totalorder %s4796, 7
        %s4798 = scalar_select %p4797, %s4796, 7
        %s4799 = smul.addr %s4798, 8
        %s4800 = scalar_lea.vmem %s4, %s4799
      $region48: #{mlp_forward.1} parent=43 // pred_fallthru
        _
    $region44: #{mlp_forward.1} parent=5 // pred_fallthru
      _
  $region6: #{mlp_forward.1} parent=0 // loop_footer
    %s14 = sadd.s32 1, %s10
  $region7: #{mlp_forward.1} parent=0 // loop_footer_branch
    %9 = sbr.rel target = $region3
  $region8: #{mlp_forward.1} parent=0 // loop_exit
    _

</llo_original>
